<compile_context>
chip_gen: v7x
topology: tpu7x:2x2x1
jax: 0.10.0
libtpu: 0.0.40
codegen_flags: <defaults>
</compile_context>

<pallas_src>
import functools

import jax
import jax.numpy as jnp
from jax import lax
from jax.experimental import pallas as pl
from jax.experimental.pallas import tpu as pltpu

NEG_SLOPE = 0.2
BN_EPS = 1e-5
TM_MAX = 1024         # max row tile over M = N*Ho*Wo (conv1 only; blocks are single-tile)
LANE = 128            # output channels padded to a multiple of the lane width
VMEM_LIMIT = 32 * 1024 * 1024


def _round_up(v, m):
    return (v + m - 1) // m * m


# ----------------------------- Pallas kernels ----------------------------- #

def conv_bias_lrelu_kernel(a_ref, w_ref, b_ref, o_ref):
    """[tm, K] x [K, Cp] GEMM (bf16 in, f32 acc) + bias + LeakyReLU(0.2)."""
    y = jnp.dot(a_ref[...], w_ref[...], preferred_element_type=jnp.float32)
    y = y + b_ref[...]
    o_ref[...] = jnp.where(y >= 0, y, NEG_SLOPE * y).astype(o_ref.dtype)


def fused_block_kernel(a_ref, w_ref, g_ref, b_ref, o_ref, *, m_valid):
    """Conv GEMM + training-mode BatchNorm2d + LeakyReLU(0.2), fully fused.

    The whole layer ([Mp, K] x [K, Cp]) is a single tile: the f32 conv result
    never leaves VMEM.  Statistics use the valid row count `m_valid`; padded A
    rows (zero) and padded weight columns (zero) contribute nothing harmful.
    Variance is the mean-centered two-pass form for better f32 accuracy.
    """
    y = jnp.dot(a_ref[...], w_ref[...], preferred_element_type=jnp.float32)
    inv_m = 1.0 / float(m_valid)
    mean = jnp.sum(y, axis=0, keepdims=True) * inv_m          # padded rows are 0
    yc = y - mean
    if y.shape[0] != m_valid:
        rows = lax.broadcasted_iota(jnp.int32, y.shape, 0)
        yc_stat = jnp.where(rows < m_valid, yc, 0.0)
    else:
        yc_stat = yc
    var = jnp.sum(yc_stat * yc_stat, axis=0, keepdims=True) * inv_m
    scale = g_ref[...] * lax.rsqrt(var + BN_EPS)
    z = yc * scale + b_ref[...]
    o_ref[...] = jnp.where(z >= 0, z, NEG_SLOPE * z).astype(o_ref.dtype)


# ------------------------------ JAX glue ---------------------------------- #

def _patches_nhwc(x, k, stride, pad):
    """NHWC -> im2col patches (N*Ho*Wo, k*k*C); column order (kh, kw, cin)."""
    N, H, W, C = x.shape
    Ho = (H + 2 * pad - k) // stride + 1
    Wo = (W + 2 * pad - k) // stride + 1
    xp = jnp.pad(x, ((0, 0), (pad, pad), (pad, pad), (0, 0)))
    cols = [xp[:, i:i + stride * Ho:stride, j:j + stride * Wo:stride, :]
            for i in range(k) for j in range(k)]
    a = jnp.concatenate(cols, axis=-1).reshape(N * Ho * Wo, k * k * C)
    return a, Ho, Wo


def _weight_matrix(w, Cp):
    """(Cout, Cin, k, k) -> (k*k*Cin, Cp) bf16, matching (kh, kw, cin) columns."""
    Cout = w.shape[0]
    K = w.shape[1] * w.shape[2] * w.shape[3]
    wm = w.transpose(2, 3, 1, 0).reshape(K, Cout)
    return jnp.pad(wm, ((0, 0), (0, Cp - Cout))).astype(jnp.bfloat16)


def _pad_row(v, Cout, Cp):
    return jnp.pad(v.reshape(1, Cout), ((0, 0), (0, Cp - Cout))).astype(jnp.float32)


def _conv1_layer(x_nhwc, w, bias):
    """First layer: Conv2d(k=4,s=2,p=1) + bias + LeakyReLU, tiled over M."""
    N = x_nhwc.shape[0]
    Cout, _, k, _ = w.shape
    a, Ho, Wo = _patches_nhwc(x_nhwc, k, 2, 1)          # bf16 patches
    M, K = a.shape
    tm = min(TM_MAX, _round_up(M, 8))
    Mp = _round_up(M, tm)
    n_tiles = Mp // tm
    if Mp != M:
        a = jnp.pad(a, ((0, Mp - M), (0, 0)))

    Cp = _round_up(Cout, LANE)
    wmat = _weight_matrix(w, Cp)
    b = _pad_row(bias, Cout, Cp)

    out = pl.pallas_call(
        conv_bias_lrelu_kernel,
        out_shape=jax.ShapeDtypeStruct((Mp, Cp), jnp.bfloat16),
        grid=(n_tiles,),
        in_specs=[pl.BlockSpec((tm, K), lambda i: (i, 0)),
                  pl.BlockSpec((K, Cp), lambda i: (0, 0)),
                  pl.BlockSpec((1, Cp), lambda i: (0, 0))],
        out_specs=pl.BlockSpec((tm, Cp), lambda i: (i, 0)),
        compiler_params=pltpu.CompilerParams(
            dimension_semantics=("parallel",),        # 2 tiles -> both v7x TCs
            vmem_limit_bytes=VMEM_LIMIT),
    )(a, wmat, b)
    return out[:M, :Cout].reshape(N, Ho, Wo, Cout)


def _fused_bn_block(x_nhwc, w, gamma, beta):
    """{Conv(k=4,s=2,p=1, no bias) -> BatchNorm2d (batch stats) -> LeakyReLU}
    as a single whole-layer pallas_call (no grid; everything VMEM-resident)."""
    N = x_nhwc.shape[0]
    Cout, _, k, _ = w.shape
    a, Ho, Wo = _patches_nhwc(x_nhwc, k, 2, 1)          # bf16 patches
    M, K = a.shape
    Mp = _round_up(M, 8)
    if Mp != M:
        a = jnp.pad(a, ((0, Mp - M), (0, 0)))

    Cp = _round_up(Cout, LANE)
    wmat = _weight_matrix(w, Cp)
    g = _pad_row(gamma, Cout, Cp)                       # padded channels -> scale 0
    b = _pad_row(beta, Cout, Cp)

    out = pl.pallas_call(
        functools.partial(fused_block_kernel, m_valid=M),
        out_shape=jax.ShapeDtypeStruct((Mp, Cp), jnp.bfloat16),
        compiler_params=pltpu.CompilerParams(vmem_limit_bytes=VMEM_LIMIT),
    )(a, wmat, g, b)
    return out[:M, :Cout].reshape(N, Ho, Wo, Cout)


# ---------------------------- Discriminator ------------------------------- #

def discriminator_forward(x, params):
    # Single NCHW -> NHWC transpose + bf16 cast; channel-last bf16 end-to-end.
    h = x.transpose(0, 2, 3, 1).astype(jnp.bfloat16)

    # Conv(channels_img -> fd, 4, 2, 1) + bias + LeakyReLU(0.2)
    h = _conv1_layer(h, params["w1"], params["b1"])

    # Three fused {Conv(bias=False) -> BatchNorm2d -> LeakyReLU(0.2)} blocks
    for name in ("blk1", "blk2", "blk3"):
        p = params[name]
        h = _fused_bn_block(h, p["w"], p["gamma"], p["beta"])

    # Final Conv(fd*8 -> 1, 4, 2, 0) + Sigmoid: M = N, Cout = 1 -> plain JAX
    # (a pallas_call would cost far more than its FLOPs at this size).
    wf, bf = params["wf"], params["bf"]
    Cout, _, k, _ = wf.shape
    N = h.shape[0]
    a, Ho, Wo = _patches_nhwc(h, k, 2, 0)
    wmat = wf.transpose(2, 3, 1, 0).reshape(-1, Cout)
    logit = jnp.dot(a.astype(jnp.float32), wmat,
                    preferred_element_type=jnp.float32) + bf.reshape(1, Cout)
    out = jax.nn.sigmoid(logit)
    return out.reshape(N, Ho, Wo, Cout).transpose(0, 3, 1, 2)


def init_params(key, channels_img, features_d):
    fd = features_d
    ks = jax.random.split(key, 14)

    def conv_w(k, co, ci):
        return 0.05 * jax.random.normal(k, (co, ci, 4, 4), jnp.float32)

    def block(kw, kg, kb, ci, co):
        return {"w": conv_w(kw, co, ci),
                "gamma": 1.0 + 0.1 * jax.random.normal(kg, (co,), jnp.float32),
                "beta": 0.1 * jax.random.normal(kb, (co,), jnp.float32)}

    return {
        "w1": conv_w(ks[0], fd, channels_img),
        "b1": 0.05 * jax.random.normal(ks[1], (fd,), jnp.float32),
        "blk1": block(ks[2], ks[3], ks[4], fd, fd * 2),
        "blk2": block(ks[5], ks[6], ks[7], fd * 2, fd * 4),
        "blk3": block(ks[8], ks[9], ks[10], fd * 4, fd * 8),
        "wf": conv_w(ks[11], 1, fd * 8),
        "bf": 0.05 * jax.random.normal(ks[12], (1,), jnp.float32),
    }


if __name__ == "__main__":
    key = jax.random.PRNGKey(0)
    pkey, xkey = jax.random.split(key)

    channels_img, features_d = 3, 8
    # 64x64 input -> 32 -> 16 -> 8 -> 4 -> 1 (DCGAN discriminator geometry)
    x = jax.random.normal(xkey, (2, channels_img, 64, 64), dtype=jnp.float32)
    params = init_params(pkey, channels_img, features_d)

    fwd = jax.jit(lambda inp: discriminator_forward(inp, params))
    out = jax.block_until_ready(fwd(x))

    assert out.shape == (2, 1, 1, 1), out.shape
    assert bool(jnp.all(jnp.isfinite(out)))
    assert bool(jnp.all((out >= 0.0) & (out <= 1.0)))  # sigmoid output
    print("KERNEL_OK")
</pallas_src>

<mosaic_0001>
module attributes {stable_mosaic.version = 11 : i64} {
  func.func @conv_bias_lrelu_kernel(%arg0: i32, %arg1: memref<1024x48xbf16, #tpu.memory_space<vmem>>, %arg2: memref<48x128xbf16, #tpu.memory_space<vmem>>, %arg3: memref<1x128xf32, #tpu.memory_space<vmem>>, %arg4: memref<1024x128xbf16, #tpu.memory_space<vmem>>) attributes {dimension_semantics = [#tpu.dimension_semantics<parallel>], iteration_bounds = array<i64: 2>, scalar_prefetch = 0 : i64, scratch_operands = 0 : i64, tpu.core_type = #tpu.core_type<tc>, window_params = [{transform_indices = @transform_0, window_bounds = array<i64: 1024, 48>}, {pipeline_mode = #tpu.pipeline_mode<synchronous>, transform_indices = @transform_1, window_bounds = array<i64: 48, 128>}, {pipeline_mode = #tpu.pipeline_mode<synchronous>, transform_indices = @transform_2, window_bounds = array<i64: 1, 128>}, {transform_indices = @transform_3, window_bounds = array<i64: 1024, 128>}]} {
    %c0 = arith.constant 0 : index
    %c0_0 = arith.constant 0 : index
    %0 = vector.load %arg1[%c0, %c0_0] : memref<1024x48xbf16, #tpu.memory_space<vmem>>, vector<1024x48xbf16>
    %c0_1 = arith.constant 0 : index
    %c0_2 = arith.constant 0 : index
    %1 = vector.load %arg2[%c0_1, %c0_2] : memref<48x128xbf16, #tpu.memory_space<vmem>>, vector<48x128xbf16>
    %cst = arith.constant dense<0.000000e+00> : vector<1024x128xf32>
    %2 = tpu.matmul %0, %1, %cst {dimension_numbers = #tpu.dot_dimension_numbers<[1], [0], [0], [1], [0, 0, 1, 1], [], []>} : vector<1024x48xbf16>, vector<48x128xbf16>, vector<1024x128xf32> -> vector<1024x128xf32>
    %c0_3 = arith.constant 0 : index
    %c0_4 = arith.constant 0 : index
    %3 = vector.load %arg3[%c0_3, %c0_4] : memref<1x128xf32, #tpu.memory_space<vmem>>, vector<1x128xf32>
    %4 = vector.broadcast %3 : vector<1x128xf32> to vector<1024x128xf32>
    %5 = arith.addf %2, %4 : vector<1024x128xf32>
    %cst_5 = arith.constant 0.000000e+00 : f32
    %6 = vector.broadcast %cst_5 : f32 to vector<1024x128xf32>
    %7 = arith.cmpf oge, %5, %6 : vector<1024x128xf32>
    %cst_6 = arith.constant 2.000000e-01 : f32
    %8 = vector.broadcast %cst_6 : f32 to vector<1024x128xf32>
    %9 = arith.mulf %8, %5 : vector<1024x128xf32>
    %10 = arith.select %7, %5, %9 : vector<1024x128xi1>, vector<1024x128xf32>
    %11 = arith.truncf %10 : vector<1024x128xf32> to vector<1024x128xbf16>
    %c0_7 = arith.constant 0 : index
    %c0_8 = arith.constant 0 : index
    %12 = vector.load %arg4[%c0_7, %c0_8] : memref<1024x128xbf16, #tpu.memory_space<vmem>>, vector<1024x128xbf16>
    tpu.vector_store %arg4[%c0_7, %c0_8], %11 {strides = array<i32>} : memref<1024x128xbf16, #tpu.memory_space<vmem>>, vector<1024x128xbf16>,
    return
  }
  func.func @transform_0(%arg0: i32) -> (i32, i32) {
    %c0_i32 = arith.constant 0 : i32
    %c0_i32_0 = arith.constant 0 : i32
    return %arg0, %c0_i32 : i32, i32
  }
  func.func @transform_1(%arg0: i32) -> (i32, i32) {
    %c0_i32 = arith.constant 0 : i32
    %c0_i32_0 = arith.constant 0 : i32
    %c0_i32_1 = arith.constant 0 : i32
    return %c0_i32, %c0_i32_0 : i32, i32
  }
  func.func @transform_2(%arg0: i32) -> (i32, i32) {
    %c0_i32 = arith.constant 0 : i32
    %c0_i32_0 = arith.constant 0 : i32
    %c0_i32_1 = arith.constant 0 : i32
    return %c0_i32, %c0_i32_0 : i32, i32
  }
  func.func @transform_3(%arg0: i32) -> (i32, i32) {
    %c0_i32 = arith.constant 0 : i32
    %c0_i32_0 = arith.constant 0 : i32
    return %arg0, %c0_i32 : i32, i32
  }
}

module attributes {stable_mosaic.version = 11 : i64} {
  func.func @fused_block_kernel(%arg0: memref<512x128xbf16, #tpu.memory_space<vmem>>, %arg1: memref<128x128xbf16, #tpu.memory_space<vmem>>, %arg2: memref<1x128xf32, #tpu.memory_space<vmem>>, %arg3: memref<1x128xf32, #tpu.memory_space<vmem>>, %arg4: memref<512x128xbf16, #tpu.memory_space<vmem>>) attributes {dimension_semantics = [], scalar_prefetch = 0 : i64, scratch_operands = 0 : i64, tpu.core_type = #tpu.core_type<tc>} {
    %c0 = arith.constant 0 : index
    %c0_0 = arith.constant 0 : index
    %0 = vector.load %arg0[%c0, %c0_0] : memref<512x128xbf16, #tpu.memory_space<vmem>>, vector<512x128xbf16>
    %c0_1 = arith.constant 0 : index
    %c0_2 = arith.constant 0 : index
    %1 = vector.load %arg1[%c0_1, %c0_2] : memref<128x128xbf16, #tpu.memory_space<vmem>>, vector<128x128xbf16>
    %cst = arith.constant dense<0.000000e+00> : vector<512x128xf32>
    %2 = tpu.matmul %0, %1, %cst {dimension_numbers = #tpu.dot_dimension_numbers<[1], [0], [0], [1], [0, 0, 1, 1], [], []>} : vector<512x128xbf16>, vector<128x128xbf16>, vector<512x128xf32> -> vector<512x128xf32>
    %cst_3 = arith.constant dense<0.000000e+00> : vector<128xf32>
    %3 = vector.multi_reduction <add>, %2, %cst_3 [0] : vector<512x128xf32> to vector<128xf32>
    %4 = vector.shape_cast %3 : vector<128xf32> to vector<1x128xf32>
    %cst_4 = arith.constant 0.001953125 : f32
    %5 = vector.broadcast %cst_4 : f32 to vector<1x128xf32>
    %6 = arith.mulf %4, %5 : vector<1x128xf32>
    %7 = vector.broadcast %6 : vector<1x128xf32> to vector<512x128xf32>
    %8 = arith.subf %2, %7 : vector<512x128xf32>
    %9 = arith.mulf %8, %8 : vector<512x128xf32>
    %cst_5 = arith.constant dense<0.000000e+00> : vector<128xf32>
    %10 = vector.multi_reduction <add>, %9, %cst_5 [0] : vector<512x128xf32> to vector<128xf32>
    %11 = vector.shape_cast %10 : vector<128xf32> to vector<1x128xf32>
    %cst_6 = arith.constant 0.001953125 : f32
    %12 = vector.broadcast %cst_6 : f32 to vector<1x128xf32>
    %13 = arith.mulf %11, %12 : vector<1x128xf32>
    %c0_7 = arith.constant 0 : index
    %c0_8 = arith.constant 0 : index
    %14 = vector.load %arg2[%c0_7, %c0_8] : memref<1x128xf32, #tpu.memory_space<vmem>>, vector<1x128xf32>
    %cst_9 = arith.constant 9.99999974E-6 : f32
    %15 = vector.broadcast %cst_9 : f32 to vector<1x128xf32>
    %16 = arith.addf %13, %15 : vector<1x128xf32>
    %17 = math.rsqrt %16 : vector<1x128xf32>
    %18 = arith.mulf %14, %17 : vector<1x128xf32>
    %19 = vector.broadcast %18 : vector<1x128xf32> to vector<512x128xf32>
    %20 = arith.mulf %8, %19 : vector<512x128xf32>
    %c0_10 = arith.constant 0 : index
    %c0_11 = arith.constant 0 : index
    %21 = vector.load %arg3[%c0_10, %c0_11] : memref<1x128xf32, #tpu.memory_space<vmem>>, vector<1x128xf32>
    %22 = vector.broadcast %21 : vector<1x128xf32> to vector<512x128xf32>
    %23 = arith.addf %20, %22 : vector<512x128xf32>
    %cst_12 = arith.constant 0.000000e+00 : f32
    %24 = vector.broadcast %cst_12 : f32 to vector<512x128xf32>
    %25 = arith.cmpf oge, %23, %24 : vector<512x128xf32>
    %cst_13 = arith.constant 2.000000e-01 : f32
    %26 = vector.broadcast %cst_13 : f32 to vector<512x128xf32>
    %27 = arith.mulf %26, %23 : vector<512x128xf32>
    %28 = arith.select %25, %23, %27 : vector<512x128xi1>, vector<512x128xf32>
    %29 = arith.truncf %28 : vector<512x128xf32> to vector<512x128xbf16>
    %c0_14 = arith.constant 0 : index
    %c0_15 = arith.constant 0 : index
    %30 = vector.load %arg4[%c0_14, %c0_15] : memref<512x128xbf16, #tpu.memory_space<vmem>>, vector<512x128xbf16>
    tpu.vector_store %arg4[%c0_14, %c0_15], %29 {strides = array<i32>} : memref<512x128xbf16, #tpu.memory_space<vmem>>, vector<512x128xbf16>,
    return
  }
}

module attributes {stable_mosaic.version = 11 : i64} {
  func.func @fused_block_kernel(%arg0: memref<128x256xbf16, #tpu.memory_space<vmem>>, %arg1: memref<256x128xbf16, #tpu.memory_space<vmem>>, %arg2: memref<1x128xf32, #tpu.memory_space<vmem>>, %arg3: memref<1x128xf32, #tpu.memory_space<vmem>>, %arg4: memref<128x128xbf16, #tpu.memory_space<vmem>>) attributes {dimension_semantics = [], scalar_prefetch = 0 : i64, scratch_operands = 0 : i64, tpu.core_type = #tpu.core_type<tc>} {
    %c0 = arith.constant 0 : index
    %c0_0 = arith.constant 0 : index
    %0 = vector.load %arg0[%c0, %c0_0] : memref<128x256xbf16, #tpu.memory_space<vmem>>, vector<128x256xbf16>
    %c0_1 = arith.constant 0 : index
    %c0_2 = arith.constant 0 : index
    %1 = vector.load %arg1[%c0_1, %c0_2] : memref<256x128xbf16, #tpu.memory_space<vmem>>, vector<256x128xbf16>
    %cst = arith.constant dense<0.000000e+00> : vector<128x128xf32>
    %2 = tpu.matmul %0, %1, %cst {dimension_numbers = #tpu.dot_dimension_numbers<[1], [0], [0], [1], [0, 0, 1, 1], [], []>} : vector<128x256xbf16>, vector<256x128xbf16>, vector<128x128xf32> -> vector<128x128xf32>
    %cst_3 = arith.constant dense<0.000000e+00> : vector<128xf32>
    %3 = vector.multi_reduction <add>, %2, %cst_3 [0] : vector<128x128xf32> to vector<128xf32>
    %4 = vector.shape_cast %3 : vector<128xf32> to vector<1x128xf32>
    %cst_4 = arith.constant 7.812500e-03 : f32
    %5 = vector.broadcast %cst_4 : f32 to vector<1x128xf32>
    %6 = arith.mulf %4, %5 : vector<1x128xf32>
    %7 = vector.broadcast %6 : vector<1x128xf32> to vector<128x128xf32>
    %8 = arith.subf %2, %7 : vector<128x128xf32>
    %9 = arith.mulf %8, %8 : vector<128x128xf32>
    %cst_5 = arith.constant dense<0.000000e+00> : vector<128xf32>
    %10 = vector.multi_reduction <add>, %9, %cst_5 [0] : vector<128x128xf32> to vector<128xf32>
    %11 = vector.shape_cast %10 : vector<128xf32> to vector<1x128xf32>
    %cst_6 = arith.constant 7.812500e-03 : f32
    %12 = vector.broadcast %cst_6 : f32 to vector<1x128xf32>
    %13 = arith.mulf %11, %12 : vector<1x128xf32>
    %c0_7 = arith.constant 0 : index
    %c0_8 = arith.constant 0 : index
    %14 = vector.load %arg2[%c0_7, %c0_8] : memref<1x128xf32, #tpu.memory_space<vmem>>, vector<1x128xf32>
    %cst_9 = arith.constant 9.99999974E-6 : f32
    %15 = vector.broadcast %cst_9 : f32 to vector<1x128xf32>
    %16 = arith.addf %13, %15 : vector<1x128xf32>
    %17 = math.rsqrt %16 : vector<1x128xf32>
    %18 = arith.mulf %14, %17 : vector<1x128xf32>
    %19 = vector.broadcast %18 : vector<1x128xf32> to vector<128x128xf32>
    %20 = arith.mulf %8, %19 : vector<128x128xf32>
    %c0_10 = arith.constant 0 : index
    %c0_11 = arith.constant 0 : index
    %21 = vector.load %arg3[%c0_10, %c0_11] : memref<1x128xf32, #tpu.memory_space<vmem>>, vector<1x128xf32>
    %22 = vector.broadcast %21 : vector<1x128xf32> to vector<128x128xf32>
    %23 = arith.addf %20, %22 : vector<128x128xf32>
    %cst_12 = arith.constant 0.000000e+00 : f32
    %24 = vector.broadcast %cst_12 : f32 to vector<128x128xf32>
    %25 = arith.cmpf oge, %23, %24 : vector<128x128xf32>
    %cst_13 = arith.constant 2.000000e-01 : f32
    %26 = vector.broadcast %cst_13 : f32 to vector<128x128xf32>
    %27 = arith.mulf %26, %23 : vector<128x128xf32>
    %28 = arith.select %25, %23, %27 : vector<128x128xi1>, vector<128x128xf32>
    %29 = arith.truncf %28 : vector<128x128xf32> to vector<128x128xbf16>
    %c0_14 = arith.constant 0 : index
    %c0_15 = arith.constant 0 : index
    %30 = vector.load %arg4[%c0_14, %c0_15] : memref<128x128xbf16, #tpu.memory_space<vmem>>, vector<128x128xbf16>
    tpu.vector_store %arg4[%c0_14, %c0_15], %29 {strides = array<i32>} : memref<128x128xbf16, #tpu.memory_space<vmem>>, vector<128x128xbf16>,
    return
  }
}

module attributes {stable_mosaic.version = 11 : i64} {
  func.func @fused_block_kernel(%arg0: memref<32x512xbf16, #tpu.memory_space<vmem>>, %arg1: memref<512x128xbf16, #tpu.memory_space<vmem>>, %arg2: memref<1x128xf32, #tpu.memory_space<vmem>>, %arg3: memref<1x128xf32, #tpu.memory_space<vmem>>, %arg4: memref<32x128xbf16, #tpu.memory_space<vmem>>) attributes {dimension_semantics = [], scalar_prefetch = 0 : i64, scratch_operands = 0 : i64, tpu.core_type = #tpu.core_type<tc>} {
    %c0 = arith.constant 0 : index
    %c0_0 = arith.constant 0 : index
    %0 = vector.load %arg0[%c0, %c0_0] : memref<32x512xbf16, #tpu.memory_space<vmem>>, vector<32x512xbf16>
    %c0_1 = arith.constant 0 : index
    %c0_2 = arith.constant 0 : index
    %1 = vector.load %arg1[%c0_1, %c0_2] : memref<512x128xbf16, #tpu.memory_space<vmem>>, vector<512x128xbf16>
    %cst = arith.constant dense<0.000000e+00> : vector<32x128xf32>
    %2 = tpu.matmul %0, %1, %cst {dimension_numbers = #tpu.dot_dimension_numbers<[1], [0], [0], [1], [0, 0, 1, 1], [], []>} : vector<32x512xbf16>, vector<512x128xbf16>, vector<32x128xf32> -> vector<32x128xf32>
    %cst_3 = arith.constant dense<0.000000e+00> : vector<128xf32>
    %3 = vector.multi_reduction <add>, %2, %cst_3 [0] : vector<32x128xf32> to vector<128xf32>
    %4 = vector.shape_cast %3 : vector<128xf32> to vector<1x128xf32>
    %cst_4 = arith.constant 3.125000e-02 : f32
    %5 = vector.broadcast %cst_4 : f32 to vector<1x128xf32>
    %6 = arith.mulf %4, %5 : vector<1x128xf32>
    %7 = vector.broadcast %6 : vector<1x128xf32> to vector<32x128xf32>
    %8 = arith.subf %2, %7 : vector<32x128xf32>
    %9 = arith.mulf %8, %8 : vector<32x128xf32>
    %cst_5 = arith.constant dense<0.000000e+00> : vector<128xf32>
    %10 = vector.multi_reduction <add>, %9, %cst_5 [0] : vector<32x128xf32> to vector<128xf32>
    %11 = vector.shape_cast %10 : vector<128xf32> to vector<1x128xf32>
    %cst_6 = arith.constant 3.125000e-02 : f32
    %12 = vector.broadcast %cst_6 : f32 to vector<1x128xf32>
    %13 = arith.mulf %11, %12 : vector<1x128xf32>
    %c0_7 = arith.constant 0 : index
    %c0_8 = arith.constant 0 : index
    %14 = vector.load %arg2[%c0_7, %c0_8] : memref<1x128xf32, #tpu.memory_space<vmem>>, vector<1x128xf32>
    %cst_9 = arith.constant 9.99999974E-6 : f32
    %15 = vector.broadcast %cst_9 : f32 to vector<1x128xf32>
    %16 = arith.addf %13, %15 : vector<1x128xf32>
    %17 = math.rsqrt %16 : vector<1x128xf32>
    %18 = arith.mulf %14, %17 : vector<1x128xf32>
    %19 = vector.broadcast %18 : vector<1x128xf32> to vector<32x128xf32>
    %20 = arith.mulf %8, %19 : vector<32x128xf32>
    %c0_10 = arith.constant 0 : index
    %c0_11 = arith.constant 0 : index
    %21 = vector.load %arg3[%c0_10, %c0_11] : memref<1x128xf32, #tpu.memory_space<vmem>>, vector<1x128xf32>
    %22 = vector.broadcast %21 : vector<1x128xf32> to vector<32x128xf32>
    %23 = arith.addf %20, %22 : vector<32x128xf32>
    %cst_12 = arith.constant 0.000000e+00 : f32
    %24 = vector.broadcast %cst_12 : f32 to vector<32x128xf32>
    %25 = arith.cmpf oge, %23, %24 : vector<32x128xf32>
    %cst_13 = arith.constant 2.000000e-01 : f32
    %26 = vector.broadcast %cst_13 : f32 to vector<32x128xf32>
    %27 = arith.mulf %26, %23 : vector<32x128xf32>
    %28 = arith.select %25, %23, %27 : vector<32x128xi1>, vector<32x128xf32>
    %29 = arith.truncf %28 : vector<32x128xf32> to vector<32x128xbf16>
    %c0_14 = arith.constant 0 : index
    %c0_15 = arith.constant 0 : index
    %30 = vector.load %arg4[%c0_14, %c0_15] : memref<32x128xbf16, #tpu.memory_space<vmem>>, vector<32x128xbf16>
    tpu.vector_store %arg4[%c0_14, %c0_15], %29 {strides = array<i32>} : memref<32x128xbf16, #tpu.memory_space<vmem>>, vector<32x128xbf16>,
    return
  }
}

</mosaic_0001>

<llo_original>
// kernel: _lambda_.4
$region0: #{_lambda_.4}
  #allocation0 [shape = 'u32[]', space=smem, size = 0x4, offset = 0x4, fixed_abs, tag = 'smem constant byte address 0x4 - core index']
  #allocation1 [shape = 'u32[144,128]{1,0:T(1,128)}', space=vmem, size = 0x12000, scoped, tag = 'internal scratch']
  %s0 = inlined_call_operand.vmem [shape: bf16[2048,48], index: 0, kind: input, shape index: {}]
  %s1 = inlined_call_operand.vmem [shape: bf16[48,128], index: 1, kind: input, shape index: {}]
  %s2 = inlined_call_operand.vmem [shape: f32[1,128], index: 2, kind: input, shape index: {}]
  %s3 = inlined_call_operand.vmem [shape: bf16[2048,128], index: 3, kind: output, shape index: {}]
  %s4 = sld [smem:[#allocation0]]
  $region45: #{_lambda_.4} parent=0
    _
  %s6 = ssub.s32 1, %s4
  %s7 = scalar_select 0, %s6, %s4
  loop: start=0, step=1, limit=4
  $region2: #{_lambda_.4} parent=0 // loop_pre_header
    _
  $region3: #{_lambda_.4} parent=0 // loop_header
    %s9 = sphi 0, %s13
    %p10 = scmp.ge.s32.totalorder %s9, 4
    %s19 = sphi 0, %s21
    %s22 = sphi 0, %s19
    %s23 = sphi 0, %s22
    %s39 = sphi 0, %s23
    %s43 = sphi 0, %s43
    %s45 = sphi 0, %s43
    %s46 = sphi 0, %s45
    %s60 = sphi 0, %s46
    %s64 = sphi 0, %s64
    %s66 = sphi 0, %s64
    %s67 = sphi 0, %s66
    %s81 = sphi 0, %s67
    %s87 = sphi 0, %s89
    %s90 = sphi 0, %s87
    %s91 = sphi 0, %s90
    %s107 = sphi 0, %s91
  $region4: #{_lambda_.4} parent=0 // loop_header_branch
    %12 = sbr.rel (%p10) target = $region8
  $region5: #{_lambda_.4} parent=0 // loop_body
    %s14 = ssub.s32 %s9, 1
    %s15 = ssub.s32 %s9, 2
    %s16 = sadd.s32 %s9, 1
    %s17 = ssub.s32 %s9, %s16
    %p18 = scmp.eq.s32.totalorder %s17, 0
    %s20 = sadd.s32 %s19, 1
    %s21 = scalar_select %p18, %s19, %s20
    %p24 = pneg %p18
    %p25 = scmp.eq.s32.totalorder %s9, 1
    %p26 = por %p24, %p25
    %p27 = scmp.ne.s32.totalorder %s19, %s22
    %p28 = scmp.eq.s32.totalorder %s9, 0
    %p29 = por %p27, %p28
    %p30 = scmp.ne.s32.totalorder %s19, %s22
    %p31 = scmp.eq.s32.totalorder %s14, 1
    %p32 = por %p30, %p31
    %p33 = scmp.ne.s32.totalorder %s22, %s23
    %p34 = scmp.eq.s32.totalorder %s14, 0
    %p35 = por %p33, %p34
    %p36 = scmp.ne.s32.totalorder %s22, %s23
    %p37 = scmp.eq.s32.totalorder %s15, 1
    %p38 = por %p36, %p37
    %p40 = scmp.ne.s32.totalorder %s23, %s39
    %p41 = scmp.eq.s32.totalorder %s15, 0
    %p42 = por %p40, %p41
    %s44 = sadd.s32 %s43, 1
    %p47 = scmp.eq.s32.totalorder %s9, 1
    %p48 = scmp.ne.s32.totalorder %s43, %s45
    %p49 = scmp.eq.s32.totalorder %s9, 0
    %p50 = por %p48, %p49
    %p51 = scmp.ne.s32.totalorder %s43, %s45
    %p52 = scmp.eq.s32.totalorder %s14, 1
    %p53 = por %p51, %p52
    %p54 = scmp.ne.s32.totalorder %s45, %s46
    %p55 = scmp.eq.s32.totalorder %s14, 0
    %p56 = por %p54, %p55
    %p57 = scmp.ne.s32.totalorder %s45, %s46
    %p58 = scmp.eq.s32.totalorder %s15, 1
    %p59 = por %p57, %p58
    %p61 = scmp.ne.s32.totalorder %s46, %s60
    %p62 = scmp.eq.s32.totalorder %s15, 0
    %p63 = por %p61, %p62
    %s65 = sadd.s32 %s64, 1
    %p68 = scmp.eq.s32.totalorder %s9, 1
    %p69 = scmp.ne.s32.totalorder %s64, %s66
    %p70 = scmp.eq.s32.totalorder %s9, 0
    %p71 = por %p69, %p70
    %p72 = scmp.ne.s32.totalorder %s64, %s66
    %p73 = scmp.eq.s32.totalorder %s14, 1
    %p74 = por %p72, %p73
    %p75 = scmp.ne.s32.totalorder %s66, %s67
    %p76 = scmp.eq.s32.totalorder %s14, 0
    %p77 = por %p75, %p76
    %p78 = scmp.ne.s32.totalorder %s66, %s67
    %p79 = scmp.eq.s32.totalorder %s15, 1
    %p80 = por %p78, %p79
    %p82 = scmp.ne.s32.totalorder %s67, %s81
    %p83 = scmp.eq.s32.totalorder %s15, 0
    %p84 = por %p82, %p83
    %s85 = ssub.s32 %s9, %s16
    %p86 = scmp.eq.s32.totalorder %s85, 0
    %s88 = sadd.s32 %s87, 1
    %s89 = scalar_select %p86, %s87, %s88
    %p92 = pneg %p86
    %p93 = scmp.eq.s32.totalorder %s9, 1
    %p94 = por %p92, %p93
    %p95 = scmp.ne.s32.totalorder %s87, %s90
    %p96 = scmp.eq.s32.totalorder %s9, 0
    %p97 = por %p95, %p96
    %p98 = scmp.ne.s32.totalorder %s87, %s90
    %p99 = scmp.eq.s32.totalorder %s14, 1
    %p100 = por %p98, %p99
    %p101 = scmp.ne.s32.totalorder %s90, %s91
    %p102 = scmp.eq.s32.totalorder %s14, 0
    %p103 = por %p101, %p102
    %p104 = scmp.ne.s32.totalorder %s90, %s91
    %p105 = scmp.eq.s32.totalorder %s15, 1
    %p106 = por %p104, %p105
    %p108 = scmp.ne.s32.totalorder %s91, %s107
    %p109 = scmp.eq.s32.totalorder %s15, 0
    %p110 = por %p108, %p109
    %p111 = scmp.le.s32.totalorder 1, %s9
    %p112 = scmp.lt.s32.totalorder %s9, 3
    %p113 = pnand %p111, %p112
    %p114 = pneg %p113
    // Predicated region
    $region9: #{_lambda_.4} parent=5 // pred_check
      _
    $region10: #{_lambda_.4} parent=5 // pred_check_branch
      %116 = sbr.rel (%p113) target = $region12
    $region11: #{_lambda_.4} parent=5 // pred_region
      %s117 = ssub.s32 %s9, 1
      // Predicated region
      $region13: #{_lambda_.4} parent=11 // pred_check
        %p118 = pneg %p56
      $region14: #{_lambda_.4} parent=11 // pred_check_branch
        %120 = sbr.rel (%p118) target = $region16
      $region15: #{_lambda_.4} parent=11 // pred_region
        _
      $region16: #{_lambda_.4} parent=11 // pred_fallthru
        _
      // Predicated region
      $region17: #{_lambda_.4} parent=11 // pred_check
        %p121 = pneg %p77
      $region18: #{_lambda_.4} parent=11 // pred_check_branch
        %123 = sbr.rel (%p121) target = $region20
      $region19: #{_lambda_.4} parent=11 // pred_region
        _
      $region20: #{_lambda_.4} parent=11 // pred_fallthru
        _
    $region12: #{_lambda_.4} parent=5 // pred_fallthru
      _
    %p124 = scmp.lt.s32.totalorder %s9, 2
    // Predicated region
    $region21: #{_lambda_.4} parent=5 // pred_check
      %p125 = pneg %p124
    $region22: #{_lambda_.4} parent=5 // pred_check_branch
      %127 = sbr.rel (%p125) target = $region24
    $region23: #{_lambda_.4} parent=5 // pred_region
      // Predicated region
      $region25: #{_lambda_.4} parent=23 // pred_check
        %p128 = pneg %p29
      $region26: #{_lambda_.4} parent=23 // pred_check_branch
        %130 = sbr.rel (%p128) target = $region28
      $region27: #{_lambda_.4} parent=23 // pred_region
        %s131 = smul.u32 128, %s9
        %p132 = scmp.lt.s32.totalorder %s131, 255
        %s133 = scalar_select %p132, %s131, 255
        %s134 = smul.addr %s133, 4
        %s135 = scalar_lea.vmem %s0, %s134
        %s136 = smul.u32 128, %s9
      $region28: #{_lambda_.4} parent=23 // pred_fallthru
        _
    $region24: #{_lambda_.4} parent=5 // pred_fallthru
      _
    %p137 = scmp.le.s32.totalorder 1, %s9
    %p138 = scmp.lt.s32.totalorder %s9, 3
    %p139 = pnand %p137, %p138
    %p140 = pneg %p139
    // Predicated region
    $region29: #{_lambda_.4} parent=5 // pred_check
      _
    $region30: #{_lambda_.4} parent=5 // pred_check_branch
      %142 = sbr.rel (%p139) target = $region32
    $region31: #{_lambda_.4} parent=5 // pred_region
      %s143 = ssub.s32 %s9, 1
      %s144 = smul.u32 128, %s14
      %p145 = scmp.lt.s32.totalorder %s144, 255
      %s146 = scalar_select %p145, %s144, 255
      %s147 = smul.addr %s146, 4
      %s148 = scalar_lea.vmem %s0, %s147
      %p149 = pneg %p35
      %p150 = pneg %p32
      %p151 = pneg %p56
      %p152 = pneg %p53
      %p153 = pneg %p77
      %p154 = pneg %p74
      %p155 = pneg %p103
      %p156 = pneg %p100
      %s157 = smul.u32 128, %s14
      %p158 = scmp.lt.s32.totalorder %s157, 255
      %s159 = scalar_select %p158, %s157, 255
      %s160 = smul.addr %s159, 4
      %s161 = scalar_lea.vmem %s3, %s160
      %s162 = smul.u32 128, %s14
      %p163 = scmp.lt.s32.totalorder %s162, 255
      %s164 = scalar_select %p163, %s162, 255
      %s165 = smul.addr %s164, 4
      %s166 = scalar_lea.vmem %s0, %s165
      %s167 = smul.u32 128, %s14
      %s168 = smul.u32 128, %s14
      %p169 = scmp.lt.s32.totalorder %s168, 255
      %s170 = scalar_select %p169, %s168, 255
      %s171 = smul.addr %s170, 4
      %s172 = scalar_lea.vmem %s3, %s171
      %s173 = smul.u32 128, %s14
      %v175 = vld [vmem:[%s166] sm:$0xf]
      %v176 = vld [vmem:[%s166 + $0x4] sm:$0xf]
      %v177 = vld [vmem:[%s166 + $0x8] sm:$0xf]
      %v178 = vld [vmem:[%s166 + $0xc] sm:$0xf]
      %v179 = vld [vmem:[%s166 + $0x10] sm:$0xf]
      %v180 = vld [vmem:[%s166 + $0x14] sm:$0xf]
      %v181 = vld [vmem:[%s166 + $0x18] sm:$0xf]
      %v182 = vld [vmem:[%s166 + $0x1c] sm:$0xf]
      %v183 = vld [vmem:[%s166 + $0x20] sm:$0xf]
      %v184 = vld [vmem:[%s166 + $0x24] sm:$0xf]
      %v185 = vld [vmem:[%s166 + $0x28] sm:$0xf]
      %v186 = vld [vmem:[%s166 + $0x2c] sm:$0xf]
      %v187 = vld [vmem:[%s166 + $0x30] sm:$0xf]
      %v188 = vld [vmem:[%s166 + $0x34] sm:$0xf]
      %v189 = vld [vmem:[%s166 + $0x38] sm:$0xf]
      %v190 = vld [vmem:[%s166 + $0x3c] sm:$0xf]
      %v191 = vld [vmem:[%s166 + $0x40] sm:$0xf]
      %v192 = vld [vmem:[%s166 + $0x44] sm:$0xf]
      %v193 = vld [vmem:[%s166 + $0x48] sm:$0xf]
      %v194 = vld [vmem:[%s166 + $0x4c] sm:$0xf]
      %v195 = vld [vmem:[%s166 + $0x50] sm:$0xf]
      %v196 = vld [vmem:[%s166 + $0x54] sm:$0xf]
      %v197 = vld [vmem:[%s166 + $0x58] sm:$0xf]
      %v198 = vld [vmem:[%s166 + $0x5c] sm:$0xf]
      %v199 = vld [vmem:[%s166 + $0x60] sm:$0xf]
      %v200 = vld [vmem:[%s166 + $0x64] sm:$0xf]
      %v201 = vld [vmem:[%s166 + $0x68] sm:$0xf]
      %v202 = vld [vmem:[%s166 + $0x6c] sm:$0xf]
      %v203 = vld [vmem:[%s166 + $0x70] sm:$0xf]
      %v204 = vld [vmem:[%s166 + $0x74] sm:$0xf]
      %v205 = vld [vmem:[%s166 + $0x78] sm:$0xf]
      %v206 = vld [vmem:[%s166 + $0x7c] sm:$0xf]
      %v207 = vld [vmem:[%s166 + $0x80] sm:$0xf]
      %v208 = vld [vmem:[%s166 + $0x84] sm:$0xf]
      %v209 = vld [vmem:[%s166 + $0x88] sm:$0xf]
      %v210 = vld [vmem:[%s166 + $0x8c] sm:$0xf]
      %v211 = vld [vmem:[%s166 + $0x90] sm:$0xf]
      %v212 = vld [vmem:[%s166 + $0x94] sm:$0xf]
      %v213 = vld [vmem:[%s166 + $0x98] sm:$0xf]
      %v214 = vld [vmem:[%s166 + $0x9c] sm:$0xf]
      %v215 = vld [vmem:[%s166 + $0xa0] sm:$0xf]
      %v216 = vld [vmem:[%s166 + $0xa4] sm:$0xf]
      %v217 = vld [vmem:[%s166 + $0xa8] sm:$0xf]
      %v218 = vld [vmem:[%s166 + $0xac] sm:$0xf]
      %v219 = vld [vmem:[%s166 + $0xb0] sm:$0xf]
      %v220 = vld [vmem:[%s166 + $0xb4] sm:$0xf]
      %v221 = vld [vmem:[%s166 + $0xb8] sm:$0xf]
      %v222 = vld [vmem:[%s166 + $0xbc] sm:$0xf]
      %v223 = vld [vmem:[%s166 + $0xc0] sm:$0xf]
      %v224 = vld [vmem:[%s166 + $0xc4] sm:$0xf]
      %v225 = vld [vmem:[%s166 + $0xc8] sm:$0xf]
      %v226 = vld [vmem:[%s166 + $0xcc] sm:$0xf]
      %v227 = vld [vmem:[%s166 + $0xd0] sm:$0xf]
      %v228 = vld [vmem:[%s166 + $0xd4] sm:$0xf]
      %v229 = vld [vmem:[%s166 + $0xd8] sm:$0xf]
      %v230 = vld [vmem:[%s166 + $0xdc] sm:$0xf]
      %v231 = vld [vmem:[%s166 + $0xe0] sm:$0xf]
      %v232 = vld [vmem:[%s166 + $0xe4] sm:$0xf]
      %v233 = vld [vmem:[%s166 + $0xe8] sm:$0xf]
      %v234 = vld [vmem:[%s166 + $0xec] sm:$0xf]
      %v235 = vld [vmem:[%s166 + $0xf0] sm:$0xf]
      %v236 = vld [vmem:[%s166 + $0xf4] sm:$0xf]
      %v237 = vld [vmem:[%s166 + $0xf8] sm:$0xf]
      %v238 = vld [vmem:[%s166 + $0xfc] sm:$0xf]
      %v239 = vld [vmem:[%s166 + $0x100] sm:$0xf]
      %v240 = vld [vmem:[%s166 + $0x104] sm:$0xf]
      %v241 = vld [vmem:[%s166 + $0x108] sm:$0xf]
      %v242 = vld [vmem:[%s166 + $0x10c] sm:$0xf]
      %v243 = vld [vmem:[%s166 + $0x110] sm:$0xf]
      %v244 = vld [vmem:[%s166 + $0x114] sm:$0xf]
      %v245 = vld [vmem:[%s166 + $0x118] sm:$0xf]
      %v246 = vld [vmem:[%s166 + $0x11c] sm:$0xf]
      %v247 = vld [vmem:[%s166 + $0x120] sm:$0xf]
      %v248 = vld [vmem:[%s166 + $0x124] sm:$0xf]
      %v249 = vld [vmem:[%s166 + $0x128] sm:$0xf]
      %v250 = vld [vmem:[%s166 + $0x12c] sm:$0xf]
      %v251 = vld [vmem:[%s166 + $0x130] sm:$0xf]
      %v252 = vld [vmem:[%s166 + $0x134] sm:$0xf]
      %v253 = vld [vmem:[%s166 + $0x138] sm:$0xf]
      %v254 = vld [vmem:[%s166 + $0x13c] sm:$0xf]
      %v255 = vld [vmem:[%s166 + $0x140] sm:$0xf]
      %v256 = vld [vmem:[%s166 + $0x144] sm:$0xf]
      %v257 = vld [vmem:[%s166 + $0x148] sm:$0xf]
      %v258 = vld [vmem:[%s166 + $0x14c] sm:$0xf]
      %v259 = vld [vmem:[%s166 + $0x150] sm:$0xf]
      %v260 = vld [vmem:[%s166 + $0x154] sm:$0xf]
      %v261 = vld [vmem:[%s166 + $0x158] sm:$0xf]
      %v262 = vld [vmem:[%s166 + $0x15c] sm:$0xf]
      %v263 = vld [vmem:[%s166 + $0x160] sm:$0xf]
      %v264 = vld [vmem:[%s166 + $0x164] sm:$0xf]
      %v265 = vld [vmem:[%s166 + $0x168] sm:$0xf]
      %v266 = vld [vmem:[%s166 + $0x16c] sm:$0xf]
      %v267 = vld [vmem:[%s166 + $0x170] sm:$0xf]
      %v268 = vld [vmem:[%s166 + $0x174] sm:$0xf]
      %v269 = vld [vmem:[%s166 + $0x178] sm:$0xf]
      %v270 = vld [vmem:[%s166 + $0x17c] sm:$0xf]
      %v271 = vld [vmem:[%s166 + $0x180] sm:$0xf]
      %v272 = vld [vmem:[%s166 + $0x184] sm:$0xf]
      %v273 = vld [vmem:[%s166 + $0x188] sm:$0xf]
      %v274 = vld [vmem:[%s166 + $0x18c] sm:$0xf]
      %v275 = vld [vmem:[%s166 + $0x190] sm:$0xf]
      %v276 = vld [vmem:[%s166 + $0x194] sm:$0xf]
      %v277 = vld [vmem:[%s166 + $0x198] sm:$0xf]
      %v278 = vld [vmem:[%s166 + $0x19c] sm:$0xf]
      %v279 = vld [vmem:[%s166 + $0x1a0] sm:$0xf]
      %v280 = vld [vmem:[%s166 + $0x1a4] sm:$0xf]
      %v281 = vld [vmem:[%s166 + $0x1a8] sm:$0xf]
      %v282 = vld [vmem:[%s166 + $0x1ac] sm:$0xf]
      %v283 = vld [vmem:[%s166 + $0x1b0] sm:$0xf]
      %v284 = vld [vmem:[%s166 + $0x1b4] sm:$0xf]
      %v285 = vld [vmem:[%s166 + $0x1b8] sm:$0xf]
      %v286 = vld [vmem:[%s166 + $0x1bc] sm:$0xf]
      %v287 = vld [vmem:[%s166 + $0x1c0] sm:$0xf]
      %v288 = vld [vmem:[%s166 + $0x1c4] sm:$0xf]
      %v289 = vld [vmem:[%s166 + $0x1c8] sm:$0xf]
      %v290 = vld [vmem:[%s166 + $0x1cc] sm:$0xf]
      %v291 = vld [vmem:[%s166 + $0x1d0] sm:$0xf]
      %v292 = vld [vmem:[%s166 + $0x1d4] sm:$0xf]
      %v293 = vld [vmem:[%s166 + $0x1d8] sm:$0xf]
      %v294 = vld [vmem:[%s166 + $0x1dc] sm:$0xf]
      %v295 = vld [vmem:[%s166 + $0x1e0] sm:$0xf]
      %v296 = vld [vmem:[%s166 + $0x1e4] sm:$0xf]
      %v297 = vld [vmem:[%s166 + $0x1e8] sm:$0xf]
      %v298 = vld [vmem:[%s166 + $0x1ec] sm:$0xf]
      %v299 = vld [vmem:[%s166 + $0x1f0] sm:$0xf]
      %v300 = vld [vmem:[%s166 + $0x1f4] sm:$0xf]
      %v301 = vld [vmem:[%s166 + $0x1f8] sm:$0xf]
      %v302 = vld [vmem:[%s166 + $0x1fc] sm:$0xf]
      %v303 = vld [vmem:[%s1] sm:$0xf]
      %v304 = vld [vmem:[%s1 + $0x4] sm:$0xf]
      %v305 = vld [vmem:[%s1 + $0x8] sm:$0xf]
      %v306 = vld [vmem:[%s1 + $0xc] sm:$0xf]
      %v307 = vld [vmem:[%s1 + $0x10] sm:$0xf]
      %v308 = vld [vmem:[%s1 + $0x14] sm:$0xf]
      %v309 = vld [vmem:[%s2] sm:$0x1]
      %v311 = vlaneseq
      %v312 = vshrl.u32 %v311, 7
      %v313 = vsub.s32 0, %v312
      %v314 = vrot.slane %v309, %v313
      %v444 = vunpack.c.l.b16 %v175
      %v445 = vunpack.c.l.b16 %v176
      %v446 = vunpack.c.l.b16 %v177
      %v447 = vunpack.c.l.b16 %v178
      %v448 = vunpack.c.l.b16 %v179
      %v449 = vunpack.c.l.b16 %v180
      %v450 = vunpack.c.l.b16 %v181
      %v451 = vunpack.c.l.b16 %v182
      %v452 = vunpack.c.l.b16 %v183
      %v453 = vunpack.c.l.b16 %v184
      %v454 = vunpack.c.l.b16 %v185
      %v455 = vunpack.c.l.b16 %v186
      %v456 = vunpack.c.l.b16 %v187
      %v457 = vunpack.c.l.b16 %v188
      %v458 = vunpack.c.l.b16 %v189
      %v459 = vunpack.c.l.b16 %v190
      %v460 = vunpack.c.l.b16 %v191
      %v461 = vunpack.c.l.b16 %v192
      %v462 = vunpack.c.l.b16 %v193
      %v463 = vunpack.c.l.b16 %v194
      %v464 = vunpack.c.l.b16 %v195
      %v465 = vunpack.c.l.b16 %v196
      %v466 = vunpack.c.l.b16 %v197
      %v467 = vunpack.c.l.b16 %v198
      %v468 = vunpack.c.l.b16 %v199
      %v469 = vunpack.c.l.b16 %v200
      %v470 = vunpack.c.l.b16 %v201
      %v471 = vunpack.c.l.b16 %v202
      %v472 = vunpack.c.l.b16 %v203
      %v473 = vunpack.c.l.b16 %v204
      %v474 = vunpack.c.l.b16 %v205
      %v475 = vunpack.c.l.b16 %v206
      %v476 = vunpack.c.l.b16 %v207
      %v477 = vunpack.c.l.b16 %v208
      %v478 = vunpack.c.l.b16 %v209
      %v479 = vunpack.c.l.b16 %v210
      %v480 = vunpack.c.l.b16 %v211
      %v481 = vunpack.c.l.b16 %v212
      %v482 = vunpack.c.l.b16 %v213
      %v483 = vunpack.c.l.b16 %v214
      %v484 = vunpack.c.l.b16 %v215
      %v485 = vunpack.c.l.b16 %v216
      %v486 = vunpack.c.l.b16 %v217
      %v487 = vunpack.c.l.b16 %v218
      %v488 = vunpack.c.l.b16 %v219
      %v489 = vunpack.c.l.b16 %v220
      %v490 = vunpack.c.l.b16 %v221
      %v491 = vunpack.c.l.b16 %v222
      %v492 = vunpack.c.l.b16 %v223
      %v493 = vunpack.c.l.b16 %v224
      %v494 = vunpack.c.l.b16 %v225
      %v495 = vunpack.c.l.b16 %v226
      %v496 = vunpack.c.l.b16 %v227
      %v497 = vunpack.c.l.b16 %v228
      %v498 = vunpack.c.l.b16 %v229
      %v499 = vunpack.c.l.b16 %v230
      %v500 = vunpack.c.l.b16 %v231
      %v501 = vunpack.c.l.b16 %v232
      %v502 = vunpack.c.l.b16 %v233
      %v503 = vunpack.c.l.b16 %v234
      %v504 = vunpack.c.l.b16 %v235
      %v505 = vunpack.c.l.b16 %v236
      %v506 = vunpack.c.l.b16 %v237
      %v507 = vunpack.c.l.b16 %v238
      %v508 = vunpack.c.l.b16 %v239
      %v509 = vunpack.c.l.b16 %v240
      %v510 = vunpack.c.l.b16 %v241
      %v511 = vunpack.c.l.b16 %v242
      %v512 = vunpack.c.l.b16 %v243
      %v513 = vunpack.c.l.b16 %v244
      %v514 = vunpack.c.l.b16 %v245
      %v515 = vunpack.c.l.b16 %v246
      %v516 = vunpack.c.l.b16 %v247
      %v517 = vunpack.c.l.b16 %v248
      %v518 = vunpack.c.l.b16 %v249
      %v519 = vunpack.c.l.b16 %v250
      %v520 = vunpack.c.l.b16 %v251
      %v521 = vunpack.c.l.b16 %v252
      %v522 = vunpack.c.l.b16 %v253
      %v523 = vunpack.c.l.b16 %v254
      %v524 = vunpack.c.l.b16 %v255
      %v525 = vunpack.c.l.b16 %v256
      %v526 = vunpack.c.l.b16 %v257
      %v527 = vunpack.c.l.b16 %v258
      %v528 = vunpack.c.l.b16 %v259
      %v529 = vunpack.c.l.b16 %v260
      %v530 = vunpack.c.l.b16 %v261
      %v531 = vunpack.c.l.b16 %v262
      %v532 = vunpack.c.l.b16 %v263
      %v533 = vunpack.c.l.b16 %v264
      %v534 = vunpack.c.l.b16 %v265
      %v535 = vunpack.c.l.b16 %v266
      %v536 = vunpack.c.l.b16 %v267
      %v537 = vunpack.c.l.b16 %v268
      %v538 = vunpack.c.l.b16 %v269
      %v539 = vunpack.c.l.b16 %v270
      %v540 = vunpack.c.l.b16 %v271
      %v541 = vunpack.c.l.b16 %v272
      %v542 = vunpack.c.l.b16 %v273
      %v543 = vunpack.c.l.b16 %v274
      %v544 = vunpack.c.l.b16 %v275
      %v545 = vunpack.c.l.b16 %v276
      %v546 = vunpack.c.l.b16 %v277
      %v547 = vunpack.c.l.b16 %v278
      %v548 = vunpack.c.l.b16 %v279
      %v549 = vunpack.c.l.b16 %v280
      %v550 = vunpack.c.l.b16 %v281
      %v551 = vunpack.c.l.b16 %v282
      %v552 = vunpack.c.l.b16 %v283
      %v553 = vunpack.c.l.b16 %v284
      %v554 = vunpack.c.l.b16 %v285
      %v555 = vunpack.c.l.b16 %v286
      %v556 = vunpack.c.l.b16 %v287
      %v557 = vunpack.c.l.b16 %v288
      %v558 = vunpack.c.l.b16 %v289
      %v559 = vunpack.c.l.b16 %v290
      %v560 = vunpack.c.l.b16 %v291
      %v561 = vunpack.c.l.b16 %v292
      %v562 = vunpack.c.l.b16 %v293
      %v563 = vunpack.c.l.b16 %v294
      %v564 = vunpack.c.l.b16 %v295
      %v565 = vunpack.c.l.b16 %v296
      %v566 = vunpack.c.l.b16 %v297
      %v567 = vunpack.c.l.b16 %v298
      %v568 = vunpack.c.l.b16 %v299
      %v569 = vunpack.c.l.b16 %v300
      %v570 = vunpack.c.l.b16 %v301
      %v571 = vunpack.c.l.b16 %v302
      %v572 = vpack.c.b16 %v445, %v444
      %v573 = vpack.c.b16 %v447, %v446
      %v574 = vpack.c.b16 %v449, %v448
      %v575 = vpack.c.b16 %v451, %v450
      %v576 = vpack.c.b16 %v453, %v452
      %v577 = vpack.c.b16 %v455, %v454
      %v578 = vpack.c.b16 %v457, %v456
      %v579 = vpack.c.b16 %v459, %v458
      %v580 = vpack.c.b16 %v461, %v460
      %v581 = vpack.c.b16 %v463, %v462
      %v582 = vpack.c.b16 %v465, %v464
      %v583 = vpack.c.b16 %v467, %v466
      %v584 = vpack.c.b16 %v469, %v468
      %v585 = vpack.c.b16 %v471, %v470
      %v586 = vpack.c.b16 %v473, %v472
      %v587 = vpack.c.b16 %v475, %v474
      %v588 = vpack.c.b16 %v477, %v476
      %v589 = vpack.c.b16 %v479, %v478
      %v590 = vpack.c.b16 %v481, %v480
      %v591 = vpack.c.b16 %v483, %v482
      %v592 = vpack.c.b16 %v485, %v484
      %v593 = vpack.c.b16 %v487, %v486
      %v594 = vpack.c.b16 %v489, %v488
      %v595 = vpack.c.b16 %v491, %v490
      %v596 = vpack.c.b16 %v493, %v492
      %v597 = vpack.c.b16 %v495, %v494
      %v598 = vpack.c.b16 %v497, %v496
      %v599 = vpack.c.b16 %v499, %v498
      %v600 = vpack.c.b16 %v501, %v500
      %v601 = vpack.c.b16 %v503, %v502
      %v602 = vpack.c.b16 %v505, %v504
      %v603 = vpack.c.b16 %v507, %v506
      %v604 = vpack.c.b16 %v509, %v508
      %v605 = vpack.c.b16 %v511, %v510
      %v606 = vpack.c.b16 %v513, %v512
      %v607 = vpack.c.b16 %v515, %v514
      %v608 = vpack.c.b16 %v517, %v516
      %v609 = vpack.c.b16 %v519, %v518
      %v610 = vpack.c.b16 %v521, %v520
      %v611 = vpack.c.b16 %v523, %v522
      %v612 = vpack.c.b16 %v525, %v524
      %v613 = vpack.c.b16 %v527, %v526
      %v614 = vpack.c.b16 %v529, %v528
      %v615 = vpack.c.b16 %v531, %v530
      %v616 = vpack.c.b16 %v533, %v532
      %v617 = vpack.c.b16 %v535, %v534
      %v618 = vpack.c.b16 %v537, %v536
      %v619 = vpack.c.b16 %v539, %v538
      %v620 = vpack.c.b16 %v541, %v540
      %v621 = vpack.c.b16 %v543, %v542
      %v622 = vpack.c.b16 %v545, %v544
      %v623 = vpack.c.b16 %v547, %v546
      %v624 = vpack.c.b16 %v549, %v548
      %v625 = vpack.c.b16 %v551, %v550
      %v626 = vpack.c.b16 %v553, %v552
      %v627 = vpack.c.b16 %v555, %v554
      %v628 = vpack.c.b16 %v557, %v556
      %v629 = vpack.c.b16 %v559, %v558
      %v630 = vpack.c.b16 %v561, %v560
      %v631 = vpack.c.b16 %v563, %v562
      %v632 = vpack.c.b16 %v565, %v564
      %v633 = vpack.c.b16 %v567, %v566
      %v634 = vpack.c.b16 %v569, %v568
      %v635 = vpack.c.b16 %v571, %v570
      %v642 = vunpack.c.l.b16 %v303
      %v643 = vunpack.c.l.b16 %v304
      %v644 = vunpack.c.l.b16 %v305
      %v645 = vunpack.c.l.b16 %v306
      %v646 = vunpack.c.l.b16 %v307
      %v647 = vunpack.c.l.b16 %v308
      %v648 = vpack.c.b16 %v643, %v642
      %v649 = vpack.c.b16 %v645, %v644
      %v650 = vpack.c.b16 %v647, %v646
      %vm654 = vcmask 392192
      %v656 = vsel %vm654, %v572, 0
      %v659 = vsel %vm654, %v573, 0
      %v662 = vsel %vm654, %v574, 0
      %v665 = vsel %vm654, %v575, 0
      %v668 = vsel %vm654, %v576, 0
      %v671 = vsel %vm654, %v577, 0
      %v674 = vsel %vm654, %v578, 0
      %v677 = vsel %vm654, %v579, 0
      %v680 = vsel %vm654, %v580, 0
      %v683 = vsel %vm654, %v581, 0
      %v686 = vsel %vm654, %v582, 0
      %v689 = vsel %vm654, %v583, 0
      %v692 = vsel %vm654, %v584, 0
      %v695 = vsel %vm654, %v585, 0
      %v698 = vsel %vm654, %v586, 0
      %v701 = vsel %vm654, %v587, 0
      %v704 = vsel %vm654, %v588, 0
      %v707 = vsel %vm654, %v589, 0
      %v710 = vsel %vm654, %v590, 0
      %v713 = vsel %vm654, %v591, 0
      %v716 = vsel %vm654, %v592, 0
      %v719 = vsel %vm654, %v593, 0
      %v722 = vsel %vm654, %v594, 0
      %v725 = vsel %vm654, %v595, 0
      %v728 = vsel %vm654, %v596, 0
      %v731 = vsel %vm654, %v597, 0
      %v734 = vsel %vm654, %v598, 0
      %v737 = vsel %vm654, %v599, 0
      %v740 = vsel %vm654, %v600, 0
      %v743 = vsel %vm654, %v601, 0
      %v746 = vsel %vm654, %v602, 0
      %v749 = vsel %vm654, %v603, 0
      %v752 = vsel %vm654, %v604, 0
      %v755 = vsel %vm654, %v605, 0
      %v758 = vsel %vm654, %v606, 0
      %v761 = vsel %vm654, %v607, 0
      %v764 = vsel %vm654, %v608, 0
      %v767 = vsel %vm654, %v609, 0
      %v770 = vsel %vm654, %v610, 0
      %v773 = vsel %vm654, %v611, 0
      %v776 = vsel %vm654, %v612, 0
      %v779 = vsel %vm654, %v613, 0
      %v782 = vsel %vm654, %v614, 0
      %v785 = vsel %vm654, %v615, 0
      %v788 = vsel %vm654, %v616, 0
      %v791 = vsel %vm654, %v617, 0
      %v794 = vsel %vm654, %v618, 0
      %v797 = vsel %vm654, %v619, 0
      %v800 = vsel %vm654, %v620, 0
      %v803 = vsel %vm654, %v621, 0
      %v806 = vsel %vm654, %v622, 0
      %v809 = vsel %vm654, %v623, 0
      %v812 = vsel %vm654, %v624, 0
      %v815 = vsel %vm654, %v625, 0
      %v818 = vsel %vm654, %v626, 0
      %v821 = vsel %vm654, %v627, 0
      %v824 = vsel %vm654, %v628, 0
      %v827 = vsel %vm654, %v629, 0
      %v830 = vsel %vm654, %v630, 0
      %v833 = vsel %vm654, %v631, 0
      %v836 = vsel %vm654, %v632, 0
      %v839 = vsel %vm654, %v633, 0
      %v842 = vsel %vm654, %v634, 0
      %v845 = vsel %vm654, %v635, 0
      %847 = vmatprep.subr.bf16.mxu0 0
      %848 = vmatpush1.bf16.msra.mxu0 %v648
      %849 = vmatprep.subr.bf16.mxu0 0
      %850 = vmatpush1.bf16.msra.mxu0 %v649
      %851 = vmatprep.subr.bf16.mxu0 0
      %852 = vmatpush1.bf16.msra.mxu0 %v650
      %853 = vmatprep.subr.bf16.mxu0 0
      %854 = vmatpush1.bf16.msra.mxu0 0
      %855 = vmatprep.subr.bf16.mxu0 0
      %856 = vmatpush1.bf16.msra.mxu0 0
      %857 = vmatprep.subr.bf16.mxu0 0
      %858 = vmatpush1.bf16.msra.mxu0 0
      %859 = vmatprep.subr.bf16.mxu0 0
      %860 = vmatpush1.bf16.msra.mxu0 0
      %861 = vmatprep.subr.bf16.mxu0 0
      %862 = vmatpush1.bf16.msra.mxu0 0
      %863 = vmatprep.subr.bf16.mxu0 0
      %864 = vmatpush1.bf16.msra.mxu0 0
      %865 = vmatprep.subr.bf16.mxu0 0
      %866 = vmatpush1.bf16.msra.mxu0 0
      %867 = vmatprep.subr.bf16.mxu0 0
      %868 = vmatpush1.bf16.msra.mxu0 0
      %869 = vmatprep.subr.bf16.mxu0 0
      %870 = vmatpush1.bf16.msra.mxu0 0
      %871 = vmatprep.subr.bf16.mxu0 0
      %872 = vmatpush1.bf16.msra.mxu0 0
      %873 = vmatprep.subr.bf16.mxu0 0
      %874 = vmatpush1.bf16.msra.mxu0 0
      %875 = vmatprep.subr.bf16.mxu0 0
      %876 = vmatpush1.bf16.msra.mxu0 0
      %877 = vmatprep.subr.bf16.mxu0 0
      %878 = vmatpush1.bf16.msra.mxu0 0
      %879 = vmatprep.mubr.bf16.mxu0 0
      %880 = vmatmul.mubr.bf16.gmra.mrb[0].mxu0 %v656
      %v881 = vpop.f32.mrb[0].mxu0
      %v882 = vadd.f32 %v314, %v881
      %v883 = vpop.f32.mrb[0].mxu0
      %v884 = vpop.f32.mrb[0].mxu0
      %v885 = vadd.f32 %v314, %v884
      %v886 = vpop.f32.mrb[0].mxu0
      %887 = vmatprep.mubr.bf16.mxu0 0
      %888 = vmatmul.mubr.bf16.gmra.mrb[0].mxu0 %v659
      %v889 = vpop.f32.mrb[0].mxu0
      %v890 = vadd.f32 %v314, %v889
      %v891 = vpop.f32.mrb[0].mxu0
      %v892 = vpop.f32.mrb[0].mxu0
      %v893 = vadd.f32 %v314, %v892
      %v894 = vpop.f32.mrb[0].mxu0
      %895 = vmatprep.mubr.bf16.mxu0 0
      %896 = vmatmul.mubr.bf16.gmra.mrb[0].mxu0 %v662
      %v897 = vpop.f32.mrb[0].mxu0
      %v898 = vadd.f32 %v314, %v897
      %v899 = vpop.f32.mrb[0].mxu0
      %v900 = vpop.f32.mrb[0].mxu0
      %v901 = vadd.f32 %v314, %v900
      %v902 = vpop.f32.mrb[0].mxu0
      %903 = vmatprep.mubr.bf16.mxu0 0
      %904 = vmatmul.mubr.bf16.gmra.mrb[0].mxu0 %v665
      %v905 = vpop.f32.mrb[0].mxu0
      %v906 = vadd.f32 %v314, %v905
      %v907 = vpop.f32.mrb[0].mxu0
      %v908 = vpop.f32.mrb[0].mxu0
      %v909 = vadd.f32 %v314, %v908
      %v910 = vpop.f32.mrb[0].mxu0
      %911 = vmatprep.mubr.bf16.mxu0 0
      %912 = vmatmul.mubr.bf16.gmra.mrb[0].mxu0 %v668
      %v913 = vpop.f32.mrb[0].mxu0
      %v914 = vadd.f32 %v314, %v913
      %v915 = vpop.f32.mrb[0].mxu0
      %v916 = vpop.f32.mrb[0].mxu0
      %v917 = vadd.f32 %v314, %v916
      %v918 = vpop.f32.mrb[0].mxu0
      %919 = vmatprep.mubr.bf16.mxu0 0
      %920 = vmatmul.mubr.bf16.gmra.mrb[0].mxu0 %v671
      %v921 = vpop.f32.mrb[0].mxu0
      %v922 = vadd.f32 %v314, %v921
      %v923 = vpop.f32.mrb[0].mxu0
      %v924 = vpop.f32.mrb[0].mxu0
      %v925 = vadd.f32 %v314, %v924
      %v926 = vpop.f32.mrb[0].mxu0
      %927 = vmatprep.mubr.bf16.mxu0 0
      %928 = vmatmul.mubr.bf16.gmra.mrb[0].mxu0 %v674
      %v929 = vpop.f32.mrb[0].mxu0
      %v930 = vadd.f32 %v314, %v929
      %v931 = vpop.f32.mrb[0].mxu0
      %v932 = vpop.f32.mrb[0].mxu0
      %v933 = vadd.f32 %v314, %v932
      %v934 = vpop.f32.mrb[0].mxu0
      %935 = vmatprep.mubr.bf16.mxu0 0
      %936 = vmatmul.mubr.bf16.gmra.mrb[0].mxu0 %v677
      %v937 = vpop.f32.mrb[0].mxu0
      %v938 = vadd.f32 %v314, %v937
      %v939 = vpop.f32.mrb[0].mxu0
      %v940 = vpop.f32.mrb[0].mxu0
      %v941 = vadd.f32 %v314, %v940
      %v942 = vpop.f32.mrb[0].mxu0
      %943 = vmatprep.mubr.bf16.mxu0 0
      %944 = vmatmul.mubr.bf16.gmra.mrb[0].mxu0 %v680
      %v945 = vpop.f32.mrb[0].mxu0
      %v946 = vadd.f32 %v314, %v945
      %v947 = vpop.f32.mrb[0].mxu0
      %v948 = vpop.f32.mrb[0].mxu0
      %v949 = vadd.f32 %v314, %v948
      %v950 = vpop.f32.mrb[0].mxu0
      %951 = vmatprep.mubr.bf16.mxu0 0
      %952 = vmatmul.mubr.bf16.gmra.mrb[0].mxu0 %v683
      %v953 = vpop.f32.mrb[0].mxu0
      %v954 = vadd.f32 %v314, %v953
      %v955 = vpop.f32.mrb[0].mxu0
      %v956 = vpop.f32.mrb[0].mxu0
      %v957 = vadd.f32 %v314, %v956
      %v958 = vpop.f32.mrb[0].mxu0
      %959 = vmatprep.mubr.bf16.mxu0 0
      %960 = vmatmul.mubr.bf16.gmra.mrb[0].mxu0 %v686
      %v961 = vpop.f32.mrb[0].mxu0
      %v962 = vadd.f32 %v314, %v961
      %v963 = vpop.f32.mrb[0].mxu0
      %v964 = vpop.f32.mrb[0].mxu0
      %v965 = vadd.f32 %v314, %v964
      %v966 = vpop.f32.mrb[0].mxu0
      %967 = vmatprep.mubr.bf16.mxu0 0
      %968 = vmatmul.mubr.bf16.gmra.mrb[0].mxu0 %v689
      %v969 = vpop.f32.mrb[0].mxu0
      %v970 = vadd.f32 %v314, %v969
      %v971 = vpop.f32.mrb[0].mxu0
      %v972 = vpop.f32.mrb[0].mxu0
      %v973 = vadd.f32 %v314, %v972
      %v974 = vpop.f32.mrb[0].mxu0
      %975 = vmatprep.mubr.bf16.mxu0 0
      %976 = vmatmul.mubr.bf16.gmra.mrb[0].mxu0 %v692
      %v977 = vpop.f32.mrb[0].mxu0
      %v978 = vadd.f32 %v314, %v977
      %v979 = vpop.f32.mrb[0].mxu0
      %v980 = vpop.f32.mrb[0].mxu0
      %v981 = vadd.f32 %v314, %v980
      %v982 = vpop.f32.mrb[0].mxu0
      %983 = vmatprep.mubr.bf16.mxu0 0
      %984 = vmatmul.mubr.bf16.gmra.mrb[0].mxu0 %v695
      %v985 = vpop.f32.mrb[0].mxu0
      %v986 = vadd.f32 %v314, %v985
      %v987 = vpop.f32.mrb[0].mxu0
      %v988 = vpop.f32.mrb[0].mxu0
      %v989 = vadd.f32 %v314, %v988
      %v990 = vpop.f32.mrb[0].mxu0
      %991 = vmatprep.mubr.bf16.mxu0 0
      %992 = vmatmul.mubr.bf16.gmra.mrb[0].mxu0 %v698
      %v993 = vpop.f32.mrb[0].mxu0
      %v994 = vadd.f32 %v314, %v993
      %v995 = vpop.f32.mrb[0].mxu0
      %v996 = vpop.f32.mrb[0].mxu0
      %v997 = vadd.f32 %v314, %v996
      %v998 = vpop.f32.mrb[0].mxu0
      %999 = vmatprep.mubr.bf16.mxu0 0
      %1000 = vmatmul.mubr.bf16.gmra.mrb[0].mxu0 %v701
      %v1001 = vpop.f32.mrb[0].mxu0
      %v1002 = vadd.f32 %v314, %v1001
      %v1003 = vpop.f32.mrb[0].mxu0
      %v1004 = vpop.f32.mrb[0].mxu0
      %v1005 = vadd.f32 %v314, %v1004
      %v1006 = vpop.f32.mrb[0].mxu0
      %1007 = vmatprep.mubr.bf16.mxu0 0
      %1008 = vmatmul.mubr.bf16.gmra.mrb[0].mxu0 %v704
      %v1009 = vpop.f32.mrb[0].mxu0
      %v1010 = vadd.f32 %v314, %v1009
      %v1011 = vpop.f32.mrb[0].mxu0
      %v1012 = vpop.f32.mrb[0].mxu0
      %v1013 = vadd.f32 %v314, %v1012
      %v1014 = vpop.f32.mrb[0].mxu0
      %1015 = vmatprep.mubr.bf16.mxu0 0
      %1016 = vmatmul.mubr.bf16.gmra.mrb[0].mxu0 %v707
      %v1017 = vpop.f32.mrb[0].mxu0
      %v1018 = vadd.f32 %v314, %v1017
      %v1019 = vpop.f32.mrb[0].mxu0
      %v1020 = vpop.f32.mrb[0].mxu0
      %v1021 = vadd.f32 %v314, %v1020
      %v1022 = vpop.f32.mrb[0].mxu0
      %1023 = vmatprep.mubr.bf16.mxu0 0
      %1024 = vmatmul.mubr.bf16.gmra.mrb[0].mxu0 %v710
      %v1025 = vpop.f32.mrb[0].mxu0
      %v1026 = vadd.f32 %v314, %v1025
      %v1027 = vpop.f32.mrb[0].mxu0
      %v1028 = vpop.f32.mrb[0].mxu0
      %v1029 = vadd.f32 %v314, %v1028
      %v1030 = vpop.f32.mrb[0].mxu0
      %1031 = vmatprep.mubr.bf16.mxu0 0
      %1032 = vmatmul.mubr.bf16.gmra.mrb[0].mxu0 %v713
      %v1033 = vpop.f32.mrb[0].mxu0
      %v1034 = vadd.f32 %v314, %v1033
      %v1035 = vpop.f32.mrb[0].mxu0
      %v1036 = vpop.f32.mrb[0].mxu0
      %v1037 = vadd.f32 %v314, %v1036
      %v1038 = vpop.f32.mrb[0].mxu0
      %1039 = vmatprep.mubr.bf16.mxu0 0
      %1040 = vmatmul.mubr.bf16.gmra.mrb[0].mxu0 %v716
      %v1041 = vpop.f32.mrb[0].mxu0
      %v1042 = vadd.f32 %v314, %v1041
      %v1043 = vpop.f32.mrb[0].mxu0
      %v1044 = vpop.f32.mrb[0].mxu0
      %v1045 = vadd.f32 %v314, %v1044
      %v1046 = vpop.f32.mrb[0].mxu0
      %1047 = vmatprep.mubr.bf16.mxu0 0
      %1048 = vmatmul.mubr.bf16.gmra.mrb[0].mxu0 %v719
      %v1049 = vpop.f32.mrb[0].mxu0
      %v1050 = vadd.f32 %v314, %v1049
      %v1051 = vpop.f32.mrb[0].mxu0
      %v1052 = vpop.f32.mrb[0].mxu0
      %v1053 = vadd.f32 %v314, %v1052
      %v1054 = vpop.f32.mrb[0].mxu0
      %1055 = vmatprep.mubr.bf16.mxu0 0
      %1056 = vmatmul.mubr.bf16.gmra.mrb[0].mxu0 %v722
      %v1057 = vpop.f32.mrb[0].mxu0
      %v1058 = vadd.f32 %v314, %v1057
      %v1059 = vpop.f32.mrb[0].mxu0
      %v1060 = vpop.f32.mrb[0].mxu0
      %v1061 = vadd.f32 %v314, %v1060
      %v1062 = vpop.f32.mrb[0].mxu0
      %1063 = vmatprep.mubr.bf16.mxu0 0
      %1064 = vmatmul.mubr.bf16.gmra.mrb[0].mxu0 %v725
      %v1065 = vpop.f32.mrb[0].mxu0
      %v1066 = vadd.f32 %v314, %v1065
      %v1067 = vpop.f32.mrb[0].mxu0
      %v1068 = vpop.f32.mrb[0].mxu0
      %v1069 = vadd.f32 %v314, %v1068
      %v1070 = vpop.f32.mrb[0].mxu0
      %1071 = vmatprep.mubr.bf16.mxu0 0
      %1072 = vmatmul.mubr.bf16.gmra.mrb[0].mxu0 %v728
      %v1073 = vpop.f32.mrb[0].mxu0
      %v1074 = vadd.f32 %v314, %v1073
      %v1075 = vpop.f32.mrb[0].mxu0
      %v1076 = vpop.f32.mrb[0].mxu0
      %v1077 = vadd.f32 %v314, %v1076
      %v1078 = vpop.f32.mrb[0].mxu0
      %1079 = vmatprep.mubr.bf16.mxu0 0
      %1080 = vmatmul.mubr.bf16.gmra.mrb[0].mxu0 %v731
      %v1081 = vpop.f32.mrb[0].mxu0
      %v1082 = vadd.f32 %v314, %v1081
      %v1083 = vpop.f32.mrb[0].mxu0
      %v1084 = vpop.f32.mrb[0].mxu0
      %v1085 = vadd.f32 %v314, %v1084
      %v1086 = vpop.f32.mrb[0].mxu0
      %1087 = vmatprep.mubr.bf16.mxu0 0
      %1088 = vmatmul.mubr.bf16.gmra.mrb[0].mxu0 %v734
      %v1089 = vpop.f32.mrb[0].mxu0
      %v1090 = vadd.f32 %v314, %v1089
      %v1091 = vpop.f32.mrb[0].mxu0
      %v1092 = vpop.f32.mrb[0].mxu0
      %v1093 = vadd.f32 %v314, %v1092
      %v1094 = vpop.f32.mrb[0].mxu0
      %1095 = vmatprep.mubr.bf16.mxu0 0
      %1096 = vmatmul.mubr.bf16.gmra.mrb[0].mxu0 %v737
      %v1097 = vpop.f32.mrb[0].mxu0
      %v1098 = vadd.f32 %v314, %v1097
      %v1099 = vpop.f32.mrb[0].mxu0
      %v1100 = vpop.f32.mrb[0].mxu0
      %v1101 = vadd.f32 %v314, %v1100
      %v1102 = vpop.f32.mrb[0].mxu0
      %1103 = vmatprep.mubr.bf16.mxu0 0
      %1104 = vmatmul.mubr.bf16.gmra.mrb[0].mxu0 %v740
      %v1105 = vpop.f32.mrb[0].mxu0
      %v1106 = vadd.f32 %v314, %v1105
      %v1107 = vpop.f32.mrb[0].mxu0
      %v1108 = vpop.f32.mrb[0].mxu0
      %v1109 = vadd.f32 %v314, %v1108
      %v1110 = vpop.f32.mrb[0].mxu0
      %1111 = vmatprep.mubr.bf16.mxu0 0
      %1112 = vmatmul.mubr.bf16.gmra.mrb[0].mxu0 %v743
      %v1113 = vpop.f32.mrb[0].mxu0
      %v1114 = vadd.f32 %v314, %v1113
      %v1115 = vpop.f32.mrb[0].mxu0
      %v1116 = vpop.f32.mrb[0].mxu0
      %v1117 = vadd.f32 %v314, %v1116
      %v1118 = vpop.f32.mrb[0].mxu0
      %1119 = vmatprep.mubr.bf16.mxu0 0
      %1120 = vmatmul.mubr.bf16.gmra.mrb[0].mxu0 %v746
      %v1121 = vpop.f32.mrb[0].mxu0
      %v1122 = vadd.f32 %v314, %v1121
      %v1123 = vpop.f32.mrb[0].mxu0
      %v1124 = vpop.f32.mrb[0].mxu0
      %v1125 = vadd.f32 %v314, %v1124
      %v1126 = vpop.f32.mrb[0].mxu0
      %1127 = vmatprep.mubr.bf16.mxu0 0
      %1128 = vmatmul.mubr.bf16.gmra.mrb[0].mxu0 %v749
      %v1129 = vpop.f32.mrb[0].mxu0
      %v1130 = vadd.f32 %v314, %v1129
      %v1131 = vpop.f32.mrb[0].mxu0
      %v1132 = vpop.f32.mrb[0].mxu0
      %v1133 = vadd.f32 %v314, %v1132
      %v1134 = vpop.f32.mrb[0].mxu0
      %1135 = vmatprep.mubr.bf16.mxu0 0
      %1136 = vmatmul.mubr.bf16.gmra.mrb[0].mxu0 %v752
      %v1137 = vpop.f32.mrb[0].mxu0
      %v1138 = vadd.f32 %v314, %v1137
      %v1139 = vpop.f32.mrb[0].mxu0
      %v1140 = vpop.f32.mrb[0].mxu0
      %v1141 = vadd.f32 %v314, %v1140
      %v1142 = vpop.f32.mrb[0].mxu0
      %1143 = vmatprep.mubr.bf16.mxu0 0
      %1144 = vmatmul.mubr.bf16.gmra.mrb[0].mxu0 %v755
      %v1145 = vpop.f32.mrb[0].mxu0
      %v1146 = vadd.f32 %v314, %v1145
      %v1147 = vpop.f32.mrb[0].mxu0
      %v1148 = vpop.f32.mrb[0].mxu0
      %v1149 = vadd.f32 %v314, %v1148
      %v1150 = vpop.f32.mrb[0].mxu0
      %1151 = vmatprep.mubr.bf16.mxu0 0
      %1152 = vmatmul.mubr.bf16.gmra.mrb[0].mxu0 %v758
      %v1153 = vpop.f32.mrb[0].mxu0
      %v1154 = vadd.f32 %v314, %v1153
      %v1155 = vpop.f32.mrb[0].mxu0
      %v1156 = vpop.f32.mrb[0].mxu0
      %v1157 = vadd.f32 %v314, %v1156
      %v1158 = vpop.f32.mrb[0].mxu0
      %1159 = vmatprep.mubr.bf16.mxu0 0
      %1160 = vmatmul.mubr.bf16.gmra.mrb[0].mxu0 %v761
      %v1161 = vpop.f32.mrb[0].mxu0
      %v1162 = vadd.f32 %v314, %v1161
      %v1163 = vpop.f32.mrb[0].mxu0
      %v1164 = vpop.f32.mrb[0].mxu0
      %v1165 = vadd.f32 %v314, %v1164
      %v1166 = vpop.f32.mrb[0].mxu0
      %1167 = vmatprep.mubr.bf16.mxu0 0
      %1168 = vmatmul.mubr.bf16.gmra.mrb[0].mxu0 %v764
      %v1169 = vpop.f32.mrb[0].mxu0
      %v1170 = vadd.f32 %v314, %v1169
      %v1171 = vpop.f32.mrb[0].mxu0
      %v1172 = vpop.f32.mrb[0].mxu0
      %v1173 = vadd.f32 %v314, %v1172
      %v1174 = vpop.f32.mrb[0].mxu0
      %1175 = vmatprep.mubr.bf16.mxu0 0
      %1176 = vmatmul.mubr.bf16.gmra.mrb[0].mxu0 %v767
      %v1177 = vpop.f32.mrb[0].mxu0
      %v1178 = vadd.f32 %v314, %v1177
      %v1179 = vpop.f32.mrb[0].mxu0
      %v1180 = vpop.f32.mrb[0].mxu0
      %v1181 = vadd.f32 %v314, %v1180
      %v1182 = vpop.f32.mrb[0].mxu0
      %1183 = vmatprep.mubr.bf16.mxu0 0
      %1184 = vmatmul.mubr.bf16.gmra.mrb[0].mxu0 %v770
      %v1185 = vpop.f32.mrb[0].mxu0
      %v1186 = vadd.f32 %v314, %v1185
      %v1187 = vpop.f32.mrb[0].mxu0
      %v1188 = vpop.f32.mrb[0].mxu0
      %v1189 = vadd.f32 %v314, %v1188
      %v1190 = vpop.f32.mrb[0].mxu0
      %1191 = vmatprep.mubr.bf16.mxu0 0
      %1192 = vmatmul.mubr.bf16.gmra.mrb[0].mxu0 %v773
      %v1193 = vpop.f32.mrb[0].mxu0
      %v1194 = vadd.f32 %v314, %v1193
      %v1195 = vpop.f32.mrb[0].mxu0
      %v1196 = vpop.f32.mrb[0].mxu0
      %v1197 = vadd.f32 %v314, %v1196
      %v1198 = vpop.f32.mrb[0].mxu0
      %1199 = vmatprep.mubr.bf16.mxu0 0
      %1200 = vmatmul.mubr.bf16.gmra.mrb[0].mxu0 %v776
      %v1201 = vpop.f32.mrb[0].mxu0
      %v1202 = vadd.f32 %v314, %v1201
      %v1203 = vpop.f32.mrb[0].mxu0
      %v1204 = vpop.f32.mrb[0].mxu0
      %v1205 = vadd.f32 %v314, %v1204
      %v1206 = vpop.f32.mrb[0].mxu0
      %1207 = vmatprep.mubr.bf16.mxu0 0
      %1208 = vmatmul.mubr.bf16.gmra.mrb[0].mxu0 %v779
      %v1209 = vpop.f32.mrb[0].mxu0
      %v1210 = vadd.f32 %v314, %v1209
      %v1211 = vpop.f32.mrb[0].mxu0
      %v1212 = vpop.f32.mrb[0].mxu0
      %v1213 = vadd.f32 %v314, %v1212
      %v1214 = vpop.f32.mrb[0].mxu0
      %1215 = vmatprep.mubr.bf16.mxu0 0
      %1216 = vmatmul.mubr.bf16.gmra.mrb[0].mxu0 %v782
      %v1217 = vpop.f32.mrb[0].mxu0
      %v1218 = vadd.f32 %v314, %v1217
      %v1219 = vpop.f32.mrb[0].mxu0
      %v1220 = vpop.f32.mrb[0].mxu0
      %v1221 = vadd.f32 %v314, %v1220
      %v1222 = vpop.f32.mrb[0].mxu0
      %1223 = vmatprep.mubr.bf16.mxu0 0
      %1224 = vmatmul.mubr.bf16.gmra.mrb[0].mxu0 %v785
      %v1225 = vpop.f32.mrb[0].mxu0
      %v1226 = vadd.f32 %v314, %v1225
      %v1227 = vpop.f32.mrb[0].mxu0
      %v1228 = vpop.f32.mrb[0].mxu0
      %v1229 = vadd.f32 %v314, %v1228
      %v1230 = vpop.f32.mrb[0].mxu0
      %1231 = vmatprep.mubr.bf16.mxu0 0
      %1232 = vmatmul.mubr.bf16.gmra.mrb[0].mxu0 %v788
      %v1233 = vpop.f32.mrb[0].mxu0
      %v1234 = vadd.f32 %v314, %v1233
      %v1235 = vpop.f32.mrb[0].mxu0
      %v1236 = vpop.f32.mrb[0].mxu0
      %v1237 = vadd.f32 %v314, %v1236
      %v1238 = vpop.f32.mrb[0].mxu0
      %1239 = vmatprep.mubr.bf16.mxu0 0
      %1240 = vmatmul.mubr.bf16.gmra.mrb[0].mxu0 %v791
      %v1241 = vpop.f32.mrb[0].mxu0
      %v1242 = vadd.f32 %v314, %v1241
      %v1243 = vpop.f32.mrb[0].mxu0
      %v1244 = vpop.f32.mrb[0].mxu0
      %v1245 = vadd.f32 %v314, %v1244
      %v1246 = vpop.f32.mrb[0].mxu0
      %1247 = vmatprep.mubr.bf16.mxu0 0
      %1248 = vmatmul.mubr.bf16.gmra.mrb[0].mxu0 %v794
      %v1249 = vpop.f32.mrb[0].mxu0
      %v1250 = vadd.f32 %v314, %v1249
      %v1251 = vpop.f32.mrb[0].mxu0
      %v1252 = vpop.f32.mrb[0].mxu0
      %v1253 = vadd.f32 %v314, %v1252
      %v1254 = vpop.f32.mrb[0].mxu0
      %1255 = vmatprep.mubr.bf16.mxu0 0
      %1256 = vmatmul.mubr.bf16.gmra.mrb[0].mxu0 %v797
      %v1257 = vpop.f32.mrb[0].mxu0
      %v1258 = vadd.f32 %v314, %v1257
      %v1259 = vpop.f32.mrb[0].mxu0
      %v1260 = vpop.f32.mrb[0].mxu0
      %v1261 = vadd.f32 %v314, %v1260
      %v1262 = vpop.f32.mrb[0].mxu0
      %1263 = vmatprep.mubr.bf16.mxu0 0
      %1264 = vmatmul.mubr.bf16.gmra.mrb[0].mxu0 %v800
      %v1265 = vpop.f32.mrb[0].mxu0
      %v1266 = vadd.f32 %v314, %v1265
      %v1267 = vpop.f32.mrb[0].mxu0
      %v1268 = vpop.f32.mrb[0].mxu0
      %v1269 = vadd.f32 %v314, %v1268
      %v1270 = vpop.f32.mrb[0].mxu0
      %1271 = vmatprep.mubr.bf16.mxu0 0
      %1272 = vmatmul.mubr.bf16.gmra.mrb[0].mxu0 %v803
      %v1273 = vpop.f32.mrb[0].mxu0
      %v1274 = vadd.f32 %v314, %v1273
      %v1275 = vpop.f32.mrb[0].mxu0
      %v1276 = vpop.f32.mrb[0].mxu0
      %v1277 = vadd.f32 %v314, %v1276
      %v1278 = vpop.f32.mrb[0].mxu0
      %1279 = vmatprep.mubr.bf16.mxu0 0
      %1280 = vmatmul.mubr.bf16.gmra.mrb[0].mxu0 %v806
      %v1281 = vpop.f32.mrb[0].mxu0
      %v1282 = vadd.f32 %v314, %v1281
      %v1283 = vpop.f32.mrb[0].mxu0
      %v1284 = vpop.f32.mrb[0].mxu0
      %v1285 = vadd.f32 %v314, %v1284
      %v1286 = vpop.f32.mrb[0].mxu0
      %1287 = vmatprep.mubr.bf16.mxu0 0
      %1288 = vmatmul.mubr.bf16.gmra.mrb[0].mxu0 %v809
      %v1289 = vpop.f32.mrb[0].mxu0
      %v1290 = vadd.f32 %v314, %v1289
      %v1291 = vpop.f32.mrb[0].mxu0
      %v1292 = vpop.f32.mrb[0].mxu0
      %v1293 = vadd.f32 %v314, %v1292
      %v1294 = vpop.f32.mrb[0].mxu0
      %1295 = vmatprep.mubr.bf16.mxu0 0
      %1296 = vmatmul.mubr.bf16.gmra.mrb[0].mxu0 %v812
      %v1297 = vpop.f32.mrb[0].mxu0
      %v1298 = vadd.f32 %v314, %v1297
      %v1299 = vpop.f32.mrb[0].mxu0
      %v1300 = vpop.f32.mrb[0].mxu0
      %v1301 = vadd.f32 %v314, %v1300
      %v1302 = vpop.f32.mrb[0].mxu0
      %1303 = vmatprep.mubr.bf16.mxu0 0
      %1304 = vmatmul.mubr.bf16.gmra.mrb[0].mxu0 %v815
      %v1305 = vpop.f32.mrb[0].mxu0
      %v1306 = vadd.f32 %v314, %v1305
      %v1307 = vpop.f32.mrb[0].mxu0
      %v1308 = vpop.f32.mrb[0].mxu0
      %v1309 = vadd.f32 %v314, %v1308
      %v1310 = vpop.f32.mrb[0].mxu0
      %1311 = vmatprep.mubr.bf16.mxu0 0
      %1312 = vmatmul.mubr.bf16.gmra.mrb[0].mxu0 %v818
      %v1313 = vpop.f32.mrb[0].mxu0
      %v1314 = vadd.f32 %v314, %v1313
      %v1315 = vpop.f32.mrb[0].mxu0
      %v1316 = vpop.f32.mrb[0].mxu0
      %v1317 = vadd.f32 %v314, %v1316
      %v1318 = vpop.f32.mrb[0].mxu0
      %1319 = vmatprep.mubr.bf16.mxu0 0
      %1320 = vmatmul.mubr.bf16.gmra.mrb[0].mxu0 %v821
      %v1321 = vpop.f32.mrb[0].mxu0
      %v1322 = vadd.f32 %v314, %v1321
      %v1323 = vpop.f32.mrb[0].mxu0
      %v1324 = vpop.f32.mrb[0].mxu0
      %v1325 = vadd.f32 %v314, %v1324
      %v1326 = vpop.f32.mrb[0].mxu0
      %1327 = vmatprep.mubr.bf16.mxu0 0
      %1328 = vmatmul.mubr.bf16.gmra.mrb[0].mxu0 %v824
      %v1329 = vpop.f32.mrb[0].mxu0
      %v1330 = vadd.f32 %v314, %v1329
      %v1331 = vpop.f32.mrb[0].mxu0
      %v1332 = vpop.f32.mrb[0].mxu0
      %v1333 = vadd.f32 %v314, %v1332
      %v1334 = vpop.f32.mrb[0].mxu0
      %1335 = vmatprep.mubr.bf16.mxu0 0
      %1336 = vmatmul.mubr.bf16.gmra.mrb[0].mxu0 %v827
      %v1337 = vpop.f32.mrb[0].mxu0
      %v1338 = vadd.f32 %v314, %v1337
      %v1339 = vpop.f32.mrb[0].mxu0
      %v1340 = vpop.f32.mrb[0].mxu0
      %v1341 = vadd.f32 %v314, %v1340
      %v1342 = vpop.f32.mrb[0].mxu0
      %1343 = vmatprep.mubr.bf16.mxu0 0
      %1344 = vmatmul.mubr.bf16.gmra.mrb[0].mxu0 %v830
      %v1345 = vpop.f32.mrb[0].mxu0
      %v1346 = vadd.f32 %v314, %v1345
      %v1347 = vpop.f32.mrb[0].mxu0
      %v1348 = vpop.f32.mrb[0].mxu0
      %v1349 = vadd.f32 %v314, %v1348
      %v1350 = vpop.f32.mrb[0].mxu0
      %1351 = vmatprep.mubr.bf16.mxu0 0
      %1352 = vmatmul.mubr.bf16.gmra.mrb[0].mxu0 %v833
      %v1353 = vpop.f32.mrb[0].mxu0
      %v1354 = vadd.f32 %v314, %v1353
      %v1355 = vpop.f32.mrb[0].mxu0
      %v1356 = vpop.f32.mrb[0].mxu0
      %v1357 = vadd.f32 %v314, %v1356
      %v1358 = vpop.f32.mrb[0].mxu0
      %1359 = vmatprep.mubr.bf16.mxu0 0
      %1360 = vmatmul.mubr.bf16.gmra.mrb[0].mxu0 %v836
      %v1361 = vpop.f32.mrb[0].mxu0
      %v1362 = vadd.f32 %v314, %v1361
      %v1363 = vpop.f32.mrb[0].mxu0
      %v1364 = vpop.f32.mrb[0].mxu0
      %v1365 = vadd.f32 %v314, %v1364
      %v1366 = vpop.f32.mrb[0].mxu0
      %1367 = vmatprep.mubr.bf16.mxu0 0
      %1368 = vmatmul.mubr.bf16.gmra.mrb[0].mxu0 %v839
      %v1369 = vpop.f32.mrb[0].mxu0
      %v1370 = vadd.f32 %v314, %v1369
      %v1371 = vpop.f32.mrb[0].mxu0
      %v1372 = vpop.f32.mrb[0].mxu0
      %v1373 = vadd.f32 %v314, %v1372
      %v1374 = vpop.f32.mrb[0].mxu0
      %1375 = vmatprep.mubr.bf16.mxu0 0
      %1376 = vmatmul.mubr.bf16.gmra.mrb[0].mxu0 %v842
      %v1377 = vpop.f32.mrb[0].mxu0
      %v1378 = vadd.f32 %v314, %v1377
      %v1379 = vpop.f32.mrb[0].mxu0
      %v1380 = vpop.f32.mrb[0].mxu0
      %v1381 = vadd.f32 %v314, %v1380
      %v1382 = vpop.f32.mrb[0].mxu0
      %1383 = vmatprep.mubr.bf16.mxu0 0
      %1384 = vmatmul.mubr.bf16.gmra.mrb[0].mxu0 %v845
      %v1385 = vpop.f32.mrb[0].mxu0
      %v1386 = vadd.f32 %v314, %v1385
      %v1387 = vpop.f32.mrb[0].mxu0
      %v1388 = vpop.f32.mrb[0].mxu0
      %v1389 = vadd.f32 %v314, %v1388
      %v1390 = vpop.f32.mrb[0].mxu0
      %1391 = vdwg.mxu0
      %vm1392 = vcmp.ge.f32.partialorder %v882, 0.0
      %vm1393 = vcmp.ge.f32.partialorder %v885, 0.0
      %vm1394 = vcmp.ge.f32.partialorder %v890, 0.0
      %vm1395 = vcmp.ge.f32.partialorder %v893, 0.0
      %vm1396 = vcmp.ge.f32.partialorder %v898, 0.0
      %vm1397 = vcmp.ge.f32.partialorder %v901, 0.0
      %vm1398 = vcmp.ge.f32.partialorder %v906, 0.0
      %vm1399 = vcmp.ge.f32.partialorder %v909, 0.0
      %vm1400 = vcmp.ge.f32.partialorder %v914, 0.0
      %vm1401 = vcmp.ge.f32.partialorder %v917, 0.0
      %vm1402 = vcmp.ge.f32.partialorder %v922, 0.0
      %vm1403 = vcmp.ge.f32.partialorder %v925, 0.0
      %vm1404 = vcmp.ge.f32.partialorder %v930, 0.0
      %vm1405 = vcmp.ge.f32.partialorder %v933, 0.0
      %vm1406 = vcmp.ge.f32.partialorder %v938, 0.0
      %vm1407 = vcmp.ge.f32.partialorder %v941, 0.0
      %vm1408 = vcmp.ge.f32.partialorder %v946, 0.0
      %vm1409 = vcmp.ge.f32.partialorder %v949, 0.0
      %vm1410 = vcmp.ge.f32.partialorder %v954, 0.0
      %vm1411 = vcmp.ge.f32.partialorder %v957, 0.0
      %vm1412 = vcmp.ge.f32.partialorder %v962, 0.0
      %vm1413 = vcmp.ge.f32.partialorder %v965, 0.0
      %vm1414 = vcmp.ge.f32.partialorder %v970, 0.0
      %vm1415 = vcmp.ge.f32.partialorder %v973, 0.0
      %vm1416 = vcmp.ge.f32.partialorder %v978, 0.0
      %vm1417 = vcmp.ge.f32.partialorder %v981, 0.0
      %vm1418 = vcmp.ge.f32.partialorder %v986, 0.0
      %vm1419 = vcmp.ge.f32.partialorder %v989, 0.0
      %vm1420 = vcmp.ge.f32.partialorder %v994, 0.0
      %vm1421 = vcmp.ge.f32.partialorder %v997, 0.0
      %vm1422 = vcmp.ge.f32.partialorder %v1002, 0.0
      %vm1423 = vcmp.ge.f32.partialorder %v1005, 0.0
      %vm1424 = vcmp.ge.f32.partialorder %v1010, 0.0
      %vm1425 = vcmp.ge.f32.partialorder %v1013, 0.0
      %vm1426 = vcmp.ge.f32.partialorder %v1018, 0.0
      %vm1427 = vcmp.ge.f32.partialorder %v1021, 0.0
      %vm1428 = vcmp.ge.f32.partialorder %v1026, 0.0
      %vm1429 = vcmp.ge.f32.partialorder %v1029, 0.0
      %vm1430 = vcmp.ge.f32.partialorder %v1034, 0.0
      %vm1431 = vcmp.ge.f32.partialorder %v1037, 0.0
      %vm1432 = vcmp.ge.f32.partialorder %v1042, 0.0
      %vm1433 = vcmp.ge.f32.partialorder %v1045, 0.0
      %vm1434 = vcmp.ge.f32.partialorder %v1050, 0.0
      %vm1435 = vcmp.ge.f32.partialorder %v1053, 0.0
      %vm1436 = vcmp.ge.f32.partialorder %v1058, 0.0
      %vm1437 = vcmp.ge.f32.partialorder %v1061, 0.0
      %vm1438 = vcmp.ge.f32.partialorder %v1066, 0.0
      %vm1439 = vcmp.ge.f32.partialorder %v1069, 0.0
      %vm1440 = vcmp.ge.f32.partialorder %v1074, 0.0
      %vm1441 = vcmp.ge.f32.partialorder %v1077, 0.0
      %vm1442 = vcmp.ge.f32.partialorder %v1082, 0.0
      %vm1443 = vcmp.ge.f32.partialorder %v1085, 0.0
      %vm1444 = vcmp.ge.f32.partialorder %v1090, 0.0
      %vm1445 = vcmp.ge.f32.partialorder %v1093, 0.0
      %vm1446 = vcmp.ge.f32.partialorder %v1098, 0.0
      %vm1447 = vcmp.ge.f32.partialorder %v1101, 0.0
      %vm1448 = vcmp.ge.f32.partialorder %v1106, 0.0
      %vm1449 = vcmp.ge.f32.partialorder %v1109, 0.0
      %vm1450 = vcmp.ge.f32.partialorder %v1114, 0.0
      %vm1451 = vcmp.ge.f32.partialorder %v1117, 0.0
      %vm1452 = vcmp.ge.f32.partialorder %v1122, 0.0
      %vm1453 = vcmp.ge.f32.partialorder %v1125, 0.0
      %vm1454 = vcmp.ge.f32.partialorder %v1130, 0.0
      %vm1455 = vcmp.ge.f32.partialorder %v1133, 0.0
      %vm1456 = vcmp.ge.f32.partialorder %v1138, 0.0
      %vm1457 = vcmp.ge.f32.partialorder %v1141, 0.0
      %vm1458 = vcmp.ge.f32.partialorder %v1146, 0.0
      %vm1459 = vcmp.ge.f32.partialorder %v1149, 0.0
      %vm1460 = vcmp.ge.f32.partialorder %v1154, 0.0
      %vm1461 = vcmp.ge.f32.partialorder %v1157, 0.0
      %vm1462 = vcmp.ge.f32.partialorder %v1162, 0.0
      %vm1463 = vcmp.ge.f32.partialorder %v1165, 0.0
      %vm1464 = vcmp.ge.f32.partialorder %v1170, 0.0
      %vm1465 = vcmp.ge.f32.partialorder %v1173, 0.0
      %vm1466 = vcmp.ge.f32.partialorder %v1178, 0.0
      %vm1467 = vcmp.ge.f32.partialorder %v1181, 0.0
      %vm1468 = vcmp.ge.f32.partialorder %v1186, 0.0
      %vm1469 = vcmp.ge.f32.partialorder %v1189, 0.0
      %vm1470 = vcmp.ge.f32.partialorder %v1194, 0.0
      %vm1471 = vcmp.ge.f32.partialorder %v1197, 0.0
      %vm1472 = vcmp.ge.f32.partialorder %v1202, 0.0
      %vm1473 = vcmp.ge.f32.partialorder %v1205, 0.0
      %vm1474 = vcmp.ge.f32.partialorder %v1210, 0.0
      %vm1475 = vcmp.ge.f32.partialorder %v1213, 0.0
      %vm1476 = vcmp.ge.f32.partialorder %v1218, 0.0
      %vm1477 = vcmp.ge.f32.partialorder %v1221, 0.0
      %vm1478 = vcmp.ge.f32.partialorder %v1226, 0.0
      %vm1479 = vcmp.ge.f32.partialorder %v1229, 0.0
      %vm1480 = vcmp.ge.f32.partialorder %v1234, 0.0
      %vm1481 = vcmp.ge.f32.partialorder %v1237, 0.0
      %vm1482 = vcmp.ge.f32.partialorder %v1242, 0.0
      %vm1483 = vcmp.ge.f32.partialorder %v1245, 0.0
      %vm1484 = vcmp.ge.f32.partialorder %v1250, 0.0
      %vm1485 = vcmp.ge.f32.partialorder %v1253, 0.0
      %vm1486 = vcmp.ge.f32.partialorder %v1258, 0.0
      %vm1487 = vcmp.ge.f32.partialorder %v1261, 0.0
      %vm1488 = vcmp.ge.f32.partialorder %v1266, 0.0
      %vm1489 = vcmp.ge.f32.partialorder %v1269, 0.0
      %vm1490 = vcmp.ge.f32.partialorder %v1274, 0.0
      %vm1491 = vcmp.ge.f32.partialorder %v1277, 0.0
      %vm1492 = vcmp.ge.f32.partialorder %v1282, 0.0
      %vm1493 = vcmp.ge.f32.partialorder %v1285, 0.0
      %vm1494 = vcmp.ge.f32.partialorder %v1290, 0.0
      %vm1495 = vcmp.ge.f32.partialorder %v1293, 0.0
      %vm1496 = vcmp.ge.f32.partialorder %v1298, 0.0
      %vm1497 = vcmp.ge.f32.partialorder %v1301, 0.0
      %vm1498 = vcmp.ge.f32.partialorder %v1306, 0.0
      %vm1499 = vcmp.ge.f32.partialorder %v1309, 0.0
      %vm1500 = vcmp.ge.f32.partialorder %v1314, 0.0
      %vm1501 = vcmp.ge.f32.partialorder %v1317, 0.0
      %vm1502 = vcmp.ge.f32.partialorder %v1322, 0.0
      %vm1503 = vcmp.ge.f32.partialorder %v1325, 0.0
      %vm1504 = vcmp.ge.f32.partialorder %v1330, 0.0
      %vm1505 = vcmp.ge.f32.partialorder %v1333, 0.0
      %vm1506 = vcmp.ge.f32.partialorder %v1338, 0.0
      %vm1507 = vcmp.ge.f32.partialorder %v1341, 0.0
      %vm1508 = vcmp.ge.f32.partialorder %v1346, 0.0
      %vm1509 = vcmp.ge.f32.partialorder %v1349, 0.0
      %vm1510 = vcmp.ge.f32.partialorder %v1354, 0.0
      %vm1511 = vcmp.ge.f32.partialorder %v1357, 0.0
      %vm1512 = vcmp.ge.f32.partialorder %v1362, 0.0
      %vm1513 = vcmp.ge.f32.partialorder %v1365, 0.0
      %vm1514 = vcmp.ge.f32.partialorder %v1370, 0.0
      %vm1515 = vcmp.ge.f32.partialorder %v1373, 0.0
      %vm1516 = vcmp.ge.f32.partialorder %v1378, 0.0
      %vm1517 = vcmp.ge.f32.partialorder %v1381, 0.0
      %vm1518 = vcmp.ge.f32.partialorder %v1386, 0.0
      %vm1519 = vcmp.ge.f32.partialorder %v1389, 0.0
      %v1520 = vmul.f32 %v882, 0.2
      %v1521 = vmul.f32 %v885, 0.2
      %v1522 = vmul.f32 %v890, 0.2
      %v1523 = vmul.f32 %v893, 0.2
      %v1524 = vmul.f32 %v898, 0.2
      %v1525 = vmul.f32 %v901, 0.2
      %v1526 = vmul.f32 %v906, 0.2
      %v1527 = vmul.f32 %v909, 0.2
      %v1528 = vmul.f32 %v914, 0.2
      %v1529 = vmul.f32 %v917, 0.2
      %v1530 = vmul.f32 %v922, 0.2
      %v1531 = vmul.f32 %v925, 0.2
      %v1532 = vmul.f32 %v930, 0.2
      %v1533 = vmul.f32 %v933, 0.2
      %v1534 = vmul.f32 %v938, 0.2
      %v1535 = vmul.f32 %v941, 0.2
      %v1536 = vmul.f32 %v946, 0.2
      %v1537 = vmul.f32 %v949, 0.2
      %v1538 = vmul.f32 %v954, 0.2
      %v1539 = vmul.f32 %v957, 0.2
      %v1540 = vmul.f32 %v962, 0.2
      %v1541 = vmul.f32 %v965, 0.2
      %v1542 = vmul.f32 %v970, 0.2
      %v1543 = vmul.f32 %v973, 0.2
      %v1544 = vmul.f32 %v978, 0.2
      %v1545 = vmul.f32 %v981, 0.2
      %v1546 = vmul.f32 %v986, 0.2
      %v1547 = vmul.f32 %v989, 0.2
      %v1548 = vmul.f32 %v994, 0.2
      %v1549 = vmul.f32 %v997, 0.2
      %v1550 = vmul.f32 %v1002, 0.2
      %v1551 = vmul.f32 %v1005, 0.2
      %v1552 = vmul.f32 %v1010, 0.2
      %v1553 = vmul.f32 %v1013, 0.2
      %v1554 = vmul.f32 %v1018, 0.2
      %v1555 = vmul.f32 %v1021, 0.2
      %v1556 = vmul.f32 %v1026, 0.2
      %v1557 = vmul.f32 %v1029, 0.2
      %v1558 = vmul.f32 %v1034, 0.2
      %v1559 = vmul.f32 %v1037, 0.2
      %v1560 = vmul.f32 %v1042, 0.2
      %v1561 = vmul.f32 %v1045, 0.2
      %v1562 = vmul.f32 %v1050, 0.2
      %v1563 = vmul.f32 %v1053, 0.2
      %v1564 = vmul.f32 %v1058, 0.2
      %v1565 = vmul.f32 %v1061, 0.2
      %v1566 = vmul.f32 %v1066, 0.2
      %v1567 = vmul.f32 %v1069, 0.2
      %v1568 = vmul.f32 %v1074, 0.2
      %v1569 = vmul.f32 %v1077, 0.2
      %v1570 = vmul.f32 %v1082, 0.2
      %v1571 = vmul.f32 %v1085, 0.2
      %v1572 = vmul.f32 %v1090, 0.2
      %v1573 = vmul.f32 %v1093, 0.2
      %v1574 = vmul.f32 %v1098, 0.2
      %v1575 = vmul.f32 %v1101, 0.2
      %v1576 = vmul.f32 %v1106, 0.2
      %v1577 = vmul.f32 %v1109, 0.2
      %v1578 = vmul.f32 %v1114, 0.2
      %v1579 = vmul.f32 %v1117, 0.2
      %v1580 = vmul.f32 %v1122, 0.2
      %v1581 = vmul.f32 %v1125, 0.2
      %v1582 = vmul.f32 %v1130, 0.2
      %v1583 = vmul.f32 %v1133, 0.2
      %v1584 = vmul.f32 %v1138, 0.2
      %v1585 = vmul.f32 %v1141, 0.2
      %v1586 = vmul.f32 %v1146, 0.2
      %v1587 = vmul.f32 %v1149, 0.2
      %v1588 = vmul.f32 %v1154, 0.2
      %v1589 = vmul.f32 %v1157, 0.2
      %v1590 = vmul.f32 %v1162, 0.2
      %v1591 = vmul.f32 %v1165, 0.2
      %v1592 = vmul.f32 %v1170, 0.2
      %v1593 = vmul.f32 %v1173, 0.2
      %v1594 = vmul.f32 %v1178, 0.2
      %v1595 = vmul.f32 %v1181, 0.2
      %v1596 = vmul.f32 %v1186, 0.2
      %v1597 = vmul.f32 %v1189, 0.2
      %v1598 = vmul.f32 %v1194, 0.2
      %v1599 = vmul.f32 %v1197, 0.2
      %v1600 = vmul.f32 %v1202, 0.2
      %v1601 = vmul.f32 %v1205, 0.2
      %v1602 = vmul.f32 %v1210, 0.2
      %v1603 = vmul.f32 %v1213, 0.2
      %v1604 = vmul.f32 %v1218, 0.2
      %v1605 = vmul.f32 %v1221, 0.2
      %v1606 = vmul.f32 %v1226, 0.2
      %v1607 = vmul.f32 %v1229, 0.2
      %v1608 = vmul.f32 %v1234, 0.2
      %v1609 = vmul.f32 %v1237, 0.2
      %v1610 = vmul.f32 %v1242, 0.2
      %v1611 = vmul.f32 %v1245, 0.2
      %v1612 = vmul.f32 %v1250, 0.2
      %v1613 = vmul.f32 %v1253, 0.2
      %v1614 = vmul.f32 %v1258, 0.2
      %v1615 = vmul.f32 %v1261, 0.2
      %v1616 = vmul.f32 %v1266, 0.2
      %v1617 = vmul.f32 %v1269, 0.2
      %v1618 = vmul.f32 %v1274, 0.2
      %v1619 = vmul.f32 %v1277, 0.2
      %v1620 = vmul.f32 %v1282, 0.2
      %v1621 = vmul.f32 %v1285, 0.2
      %v1622 = vmul.f32 %v1290, 0.2
      %v1623 = vmul.f32 %v1293, 0.2
      %v1624 = vmul.f32 %v1298, 0.2
      %v1625 = vmul.f32 %v1301, 0.2
      %v1626 = vmul.f32 %v1306, 0.2
      %v1627 = vmul.f32 %v1309, 0.2
      %v1628 = vmul.f32 %v1314, 0.2
      %v1629 = vmul.f32 %v1317, 0.2
      %v1630 = vmul.f32 %v1322, 0.2
      %v1631 = vmul.f32 %v1325, 0.2
      %v1632 = vmul.f32 %v1330, 0.2
      %v1633 = vmul.f32 %v1333, 0.2
      %v1634 = vmul.f32 %v1338, 0.2
      %v1635 = vmul.f32 %v1341, 0.2
      %v1636 = vmul.f32 %v1346, 0.2
      %v1637 = vmul.f32 %v1349, 0.2
      %v1638 = vmul.f32 %v1354, 0.2
      %v1639 = vmul.f32 %v1357, 0.2
      %v1640 = vmul.f32 %v1362, 0.2
      %v1641 = vmul.f32 %v1365, 0.2
      %v1642 = vmul.f32 %v1370, 0.2
      %v1643 = vmul.f32 %v1373, 0.2
      %v1644 = vmul.f32 %v1378, 0.2
      %v1645 = vmul.f32 %v1381, 0.2
      %v1646 = vmul.f32 %v1386, 0.2
      %v1647 = vmul.f32 %v1389, 0.2
      %v1648 = vsel %vm1392, %v882, %v1520
      %v1649 = vsel %vm1393, %v885, %v1521
      %v1650 = vsel %vm1394, %v890, %v1522
      %v1651 = vsel %vm1395, %v893, %v1523
      %v1652 = vsel %vm1396, %v898, %v1524
      %v1653 = vsel %vm1397, %v901, %v1525
      %v1654 = vsel %vm1398, %v906, %v1526
      %v1655 = vsel %vm1399, %v909, %v1527
      %v1656 = vsel %vm1400, %v914, %v1528
      %v1657 = vsel %vm1401, %v917, %v1529
      %v1658 = vsel %vm1402, %v922, %v1530
      %v1659 = vsel %vm1403, %v925, %v1531
      %v1660 = vsel %vm1404, %v930, %v1532
      %v1661 = vsel %vm1405, %v933, %v1533
      %v1662 = vsel %vm1406, %v938, %v1534
      %v1663 = vsel %vm1407, %v941, %v1535
      %v1664 = vsel %vm1408, %v946, %v1536
      %v1665 = vsel %vm1409, %v949, %v1537
      %v1666 = vsel %vm1410, %v954, %v1538
      %v1667 = vsel %vm1411, %v957, %v1539
      %v1668 = vsel %vm1412, %v962, %v1540
      %v1669 = vsel %vm1413, %v965, %v1541
      %v1670 = vsel %vm1414, %v970, %v1542
      %v1671 = vsel %vm1415, %v973, %v1543
      %v1672 = vsel %vm1416, %v978, %v1544
      %v1673 = vsel %vm1417, %v981, %v1545
      %v1674 = vsel %vm1418, %v986, %v1546
      %v1675 = vsel %vm1419, %v989, %v1547
      %v1676 = vsel %vm1420, %v994, %v1548
      %v1677 = vsel %vm1421, %v997, %v1549
      %v1678 = vsel %vm1422, %v1002, %v1550
      %v1679 = vsel %vm1423, %v1005, %v1551
      %v1680 = vsel %vm1424, %v1010, %v1552
      %v1681 = vsel %vm1425, %v1013, %v1553
      %v1682 = vsel %vm1426, %v1018, %v1554
      %v1683 = vsel %vm1427, %v1021, %v1555
      %v1684 = vsel %vm1428, %v1026, %v1556
      %v1685 = vsel %vm1429, %v1029, %v1557
      %v1686 = vsel %vm1430, %v1034, %v1558
      %v1687 = vsel %vm1431, %v1037, %v1559
      %v1688 = vsel %vm1432, %v1042, %v1560
      %v1689 = vsel %vm1433, %v1045, %v1561
      %v1690 = vsel %vm1434, %v1050, %v1562
      %v1691 = vsel %vm1435, %v1053, %v1563
      %v1692 = vsel %vm1436, %v1058, %v1564
      %v1693 = vsel %vm1437, %v1061, %v1565
      %v1694 = vsel %vm1438, %v1066, %v1566
      %v1695 = vsel %vm1439, %v1069, %v1567
      %v1696 = vsel %vm1440, %v1074, %v1568
      %v1697 = vsel %vm1441, %v1077, %v1569
      %v1698 = vsel %vm1442, %v1082, %v1570
      %v1699 = vsel %vm1443, %v1085, %v1571
      %v1700 = vsel %vm1444, %v1090, %v1572
      %v1701 = vsel %vm1445, %v1093, %v1573
      %v1702 = vsel %vm1446, %v1098, %v1574
      %v1703 = vsel %vm1447, %v1101, %v1575
      %v1704 = vsel %vm1448, %v1106, %v1576
      %v1705 = vsel %vm1449, %v1109, %v1577
      %v1706 = vsel %vm1450, %v1114, %v1578
      %v1707 = vsel %vm1451, %v1117, %v1579
      %v1708 = vsel %vm1452, %v1122, %v1580
      %v1709 = vsel %vm1453, %v1125, %v1581
      %v1710 = vsel %vm1454, %v1130, %v1582
      %v1711 = vsel %vm1455, %v1133, %v1583
      %v1712 = vsel %vm1456, %v1138, %v1584
      %v1713 = vsel %vm1457, %v1141, %v1585
      %v1714 = vsel %vm1458, %v1146, %v1586
      %v1715 = vsel %vm1459, %v1149, %v1587
      %v1716 = vsel %vm1460, %v1154, %v1588
      %v1717 = vsel %vm1461, %v1157, %v1589
      %v1718 = vsel %vm1462, %v1162, %v1590
      %v1719 = vsel %vm1463, %v1165, %v1591
      %v1720 = vsel %vm1464, %v1170, %v1592
      %v1721 = vsel %vm1465, %v1173, %v1593
      %v1722 = vsel %vm1466, %v1178, %v1594
      %v1723 = vsel %vm1467, %v1181, %v1595
      %v1724 = vsel %vm1468, %v1186, %v1596
      %v1725 = vsel %vm1469, %v1189, %v1597
      %v1726 = vsel %vm1470, %v1194, %v1598
      %v1727 = vsel %vm1471, %v1197, %v1599
      %v1728 = vsel %vm1472, %v1202, %v1600
      %v1729 = vsel %vm1473, %v1205, %v1601
      %v1730 = vsel %vm1474, %v1210, %v1602
      %v1731 = vsel %vm1475, %v1213, %v1603
      %v1732 = vsel %vm1476, %v1218, %v1604
      %v1733 = vsel %vm1477, %v1221, %v1605
      %v1734 = vsel %vm1478, %v1226, %v1606
      %v1735 = vsel %vm1479, %v1229, %v1607
      %v1736 = vsel %vm1480, %v1234, %v1608
      %v1737 = vsel %vm1481, %v1237, %v1609
      %v1738 = vsel %vm1482, %v1242, %v1610
      %v1739 = vsel %vm1483, %v1245, %v1611
      %v1740 = vsel %vm1484, %v1250, %v1612
      %v1741 = vsel %vm1485, %v1253, %v1613
      %v1742 = vsel %vm1486, %v1258, %v1614
      %v1743 = vsel %vm1487, %v1261, %v1615
      %v1744 = vsel %vm1488, %v1266, %v1616
      %v1745 = vsel %vm1489, %v1269, %v1617
      %v1746 = vsel %vm1490, %v1274, %v1618
      %v1747 = vsel %vm1491, %v1277, %v1619
      %v1748 = vsel %vm1492, %v1282, %v1620
      %v1749 = vsel %vm1493, %v1285, %v1621
      %v1750 = vsel %vm1494, %v1290, %v1622
      %v1751 = vsel %vm1495, %v1293, %v1623
      %v1752 = vsel %vm1496, %v1298, %v1624
      %v1753 = vsel %vm1497, %v1301, %v1625
      %v1754 = vsel %vm1498, %v1306, %v1626
      %v1755 = vsel %vm1499, %v1309, %v1627
      %v1756 = vsel %vm1500, %v1314, %v1628
      %v1757 = vsel %vm1501, %v1317, %v1629
      %v1758 = vsel %vm1502, %v1322, %v1630
      %v1759 = vsel %vm1503, %v1325, %v1631
      %v1760 = vsel %vm1504, %v1330, %v1632
      %v1761 = vsel %vm1505, %v1333, %v1633
      %v1762 = vsel %vm1506, %v1338, %v1634
      %v1763 = vsel %vm1507, %v1341, %v1635
      %v1764 = vsel %vm1508, %v1346, %v1636
      %v1765 = vsel %vm1509, %v1349, %v1637
      %v1766 = vsel %vm1510, %v1354, %v1638
      %v1767 = vsel %vm1511, %v1357, %v1639
      %v1768 = vsel %vm1512, %v1362, %v1640
      %v1769 = vsel %vm1513, %v1365, %v1641
      %v1770 = vsel %vm1514, %v1370, %v1642
      %v1771 = vsel %vm1515, %v1373, %v1643
      %v1772 = vsel %vm1516, %v1378, %v1644
      %v1773 = vsel %vm1517, %v1381, %v1645
      %v1774 = vsel %vm1518, %v1386, %v1646
      %v1775 = vsel %vm1519, %v1389, %v1647
      %v1776 = vpack.c.bf16 %v1649, %v1648
      %v1777 = vpack.c.bf16 %v1651, %v1650
      %v1778 = vpack.c.bf16 %v1653, %v1652
      %v1779 = vpack.c.bf16 %v1655, %v1654
      %v1780 = vpack.c.bf16 %v1657, %v1656
      %v1781 = vpack.c.bf16 %v1659, %v1658
      %v1782 = vpack.c.bf16 %v1661, %v1660
      %v1783 = vpack.c.bf16 %v1663, %v1662
      %v1784 = vpack.c.bf16 %v1665, %v1664
      %v1785 = vpack.c.bf16 %v1667, %v1666
      %v1786 = vpack.c.bf16 %v1669, %v1668
      %v1787 = vpack.c.bf16 %v1671, %v1670
      %v1788 = vpack.c.bf16 %v1673, %v1672
      %v1789 = vpack.c.bf16 %v1675, %v1674
      %v1790 = vpack.c.bf16 %v1677, %v1676
      %v1791 = vpack.c.bf16 %v1679, %v1678
      %v1792 = vpack.c.bf16 %v1681, %v1680
      %v1793 = vpack.c.bf16 %v1683, %v1682
      %v1794 = vpack.c.bf16 %v1685, %v1684
      %v1795 = vpack.c.bf16 %v1687, %v1686
      %v1796 = vpack.c.bf16 %v1689, %v1688
      %v1797 = vpack.c.bf16 %v1691, %v1690
      %v1798 = vpack.c.bf16 %v1693, %v1692
      %v1799 = vpack.c.bf16 %v1695, %v1694
      %v1800 = vpack.c.bf16 %v1697, %v1696
      %v1801 = vpack.c.bf16 %v1699, %v1698
      %v1802 = vpack.c.bf16 %v1701, %v1700
      %v1803 = vpack.c.bf16 %v1703, %v1702
      %v1804 = vpack.c.bf16 %v1705, %v1704
      %v1805 = vpack.c.bf16 %v1707, %v1706
      %v1806 = vpack.c.bf16 %v1709, %v1708
      %v1807 = vpack.c.bf16 %v1711, %v1710
      %v1808 = vpack.c.bf16 %v1713, %v1712
      %v1809 = vpack.c.bf16 %v1715, %v1714
      %v1810 = vpack.c.bf16 %v1717, %v1716
      %v1811 = vpack.c.bf16 %v1719, %v1718
      %v1812 = vpack.c.bf16 %v1721, %v1720
      %v1813 = vpack.c.bf16 %v1723, %v1722
      %v1814 = vpack.c.bf16 %v1725, %v1724
      %v1815 = vpack.c.bf16 %v1727, %v1726
      %v1816 = vpack.c.bf16 %v1729, %v1728
      %v1817 = vpack.c.bf16 %v1731, %v1730
      %v1818 = vpack.c.bf16 %v1733, %v1732
      %v1819 = vpack.c.bf16 %v1735, %v1734
      %v1820 = vpack.c.bf16 %v1737, %v1736
      %v1821 = vpack.c.bf16 %v1739, %v1738
      %v1822 = vpack.c.bf16 %v1741, %v1740
      %v1823 = vpack.c.bf16 %v1743, %v1742
      %v1824 = vpack.c.bf16 %v1745, %v1744
      %v1825 = vpack.c.bf16 %v1747, %v1746
      %v1826 = vpack.c.bf16 %v1749, %v1748
      %v1827 = vpack.c.bf16 %v1751, %v1750
      %v1828 = vpack.c.bf16 %v1753, %v1752
      %v1829 = vpack.c.bf16 %v1755, %v1754
      %v1830 = vpack.c.bf16 %v1757, %v1756
      %v1831 = vpack.c.bf16 %v1759, %v1758
      %v1832 = vpack.c.bf16 %v1761, %v1760
      %v1833 = vpack.c.bf16 %v1763, %v1762
      %v1834 = vpack.c.bf16 %v1765, %v1764
      %v1835 = vpack.c.bf16 %v1767, %v1766
      %v1836 = vpack.c.bf16 %v1769, %v1768
      %v1837 = vpack.c.bf16 %v1771, %v1770
      %v1838 = vpack.c.bf16 %v1773, %v1772
      %v1839 = vpack.c.bf16 %v1775, %v1774
      %v1904 = vunpack.c.l.b16 %v1776
      %v1905 = vunpack.c.h.b16 %v1776
      %v1906 = vunpack.c.l.b16 %v1777
      %v1907 = vunpack.c.h.b16 %v1777
      %v1908 = vunpack.c.l.b16 %v1778
      %v1909 = vunpack.c.h.b16 %v1778
      %v1910 = vunpack.c.l.b16 %v1779
      %v1911 = vunpack.c.h.b16 %v1779
      %v1912 = vunpack.c.l.b16 %v1780
      %v1913 = vunpack.c.h.b16 %v1780
      %v1914 = vunpack.c.l.b16 %v1781
      %v1915 = vunpack.c.h.b16 %v1781
      %v1916 = vunpack.c.l.b16 %v1782
      %v1917 = vunpack.c.h.b16 %v1782
      %v1918 = vunpack.c.l.b16 %v1783
      %v1919 = vunpack.c.h.b16 %v1783
      %v1920 = vunpack.c.l.b16 %v1784
      %v1921 = vunpack.c.h.b16 %v1784
      %v1922 = vunpack.c.l.b16 %v1785
      %v1923 = vunpack.c.h.b16 %v1785
      %v1924 = vunpack.c.l.b16 %v1786
      %v1925 = vunpack.c.h.b16 %v1786
      %v1926 = vunpack.c.l.b16 %v1787
      %v1927 = vunpack.c.h.b16 %v1787
      %v1928 = vunpack.c.l.b16 %v1788
      %v1929 = vunpack.c.h.b16 %v1788
      %v1930 = vunpack.c.l.b16 %v1789
      %v1931 = vunpack.c.h.b16 %v1789
      %v1932 = vunpack.c.l.b16 %v1790
      %v1933 = vunpack.c.h.b16 %v1790
      %v1934 = vunpack.c.l.b16 %v1791
      %v1935 = vunpack.c.h.b16 %v1791
      %v1936 = vunpack.c.l.b16 %v1792
      %v1937 = vunpack.c.h.b16 %v1792
      %v1938 = vunpack.c.l.b16 %v1793
      %v1939 = vunpack.c.h.b16 %v1793
      %v1940 = vunpack.c.l.b16 %v1794
      %v1941 = vunpack.c.h.b16 %v1794
      %v1942 = vunpack.c.l.b16 %v1795
      %v1943 = vunpack.c.h.b16 %v1795
      %v1944 = vunpack.c.l.b16 %v1796
      %v1945 = vunpack.c.h.b16 %v1796
      %v1946 = vunpack.c.l.b16 %v1797
      %v1947 = vunpack.c.h.b16 %v1797
      %v1948 = vunpack.c.l.b16 %v1798
      %v1949 = vunpack.c.h.b16 %v1798
      %v1950 = vunpack.c.l.b16 %v1799
      %v1951 = vunpack.c.h.b16 %v1799
      %v1952 = vunpack.c.l.b16 %v1800
      %v1953 = vunpack.c.h.b16 %v1800
      %v1954 = vunpack.c.l.b16 %v1801
      %v1955 = vunpack.c.h.b16 %v1801
      %v1956 = vunpack.c.l.b16 %v1802
      %v1957 = vunpack.c.h.b16 %v1802
      %v1958 = vunpack.c.l.b16 %v1803
      %v1959 = vunpack.c.h.b16 %v1803
      %v1960 = vunpack.c.l.b16 %v1804
      %v1961 = vunpack.c.h.b16 %v1804
      %v1962 = vunpack.c.l.b16 %v1805
      %v1963 = vunpack.c.h.b16 %v1805
      %v1964 = vunpack.c.l.b16 %v1806
      %v1965 = vunpack.c.h.b16 %v1806
      %v1966 = vunpack.c.l.b16 %v1807
      %v1967 = vunpack.c.h.b16 %v1807
      %v1968 = vunpack.c.l.b16 %v1808
      %v1969 = vunpack.c.h.b16 %v1808
      %v1970 = vunpack.c.l.b16 %v1809
      %v1971 = vunpack.c.h.b16 %v1809
      %v1972 = vunpack.c.l.b16 %v1810
      %v1973 = vunpack.c.h.b16 %v1810
      %v1974 = vunpack.c.l.b16 %v1811
      %v1975 = vunpack.c.h.b16 %v1811
      %v1976 = vunpack.c.l.b16 %v1812
      %v1977 = vunpack.c.h.b16 %v1812
      %v1978 = vunpack.c.l.b16 %v1813
      %v1979 = vunpack.c.h.b16 %v1813
      %v1980 = vunpack.c.l.b16 %v1814
      %v1981 = vunpack.c.h.b16 %v1814
      %v1982 = vunpack.c.l.b16 %v1815
      %v1983 = vunpack.c.h.b16 %v1815
      %v1984 = vunpack.c.l.b16 %v1816
      %v1985 = vunpack.c.h.b16 %v1816
      %v1986 = vunpack.c.l.b16 %v1817
      %v1987 = vunpack.c.h.b16 %v1817
      %v1988 = vunpack.c.l.b16 %v1818
      %v1989 = vunpack.c.h.b16 %v1818
      %v1990 = vunpack.c.l.b16 %v1819
      %v1991 = vunpack.c.h.b16 %v1819
      %v1992 = vunpack.c.l.b16 %v1820
      %v1993 = vunpack.c.h.b16 %v1820
      %v1994 = vunpack.c.l.b16 %v1821
      %v1995 = vunpack.c.h.b16 %v1821
      %v1996 = vunpack.c.l.b16 %v1822
      %v1997 = vunpack.c.h.b16 %v1822
      %v1998 = vunpack.c.l.b16 %v1823
      %v1999 = vunpack.c.h.b16 %v1823
      %v2000 = vunpack.c.l.b16 %v1824
      %v2001 = vunpack.c.h.b16 %v1824
      %v2002 = vunpack.c.l.b16 %v1825
      %v2003 = vunpack.c.h.b16 %v1825
      %v2004 = vunpack.c.l.b16 %v1826
      %v2005 = vunpack.c.h.b16 %v1826
      %v2006 = vunpack.c.l.b16 %v1827
      %v2007 = vunpack.c.h.b16 %v1827
      %v2008 = vunpack.c.l.b16 %v1828
      %v2009 = vunpack.c.h.b16 %v1828
      %v2010 = vunpack.c.l.b16 %v1829
      %v2011 = vunpack.c.h.b16 %v1829
      %v2012 = vunpack.c.l.b16 %v1830
      %v2013 = vunpack.c.h.b16 %v1830
      %v2014 = vunpack.c.l.b16 %v1831
      %v2015 = vunpack.c.h.b16 %v1831
      %v2016 = vunpack.c.l.b16 %v1832
      %v2017 = vunpack.c.h.b16 %v1832
      %v2018 = vunpack.c.l.b16 %v1833
      %v2019 = vunpack.c.h.b16 %v1833
      %v2020 = vunpack.c.l.b16 %v1834
      %v2021 = vunpack.c.h.b16 %v1834
      %v2022 = vunpack.c.l.b16 %v1835
      %v2023 = vunpack.c.h.b16 %v1835
      %v2024 = vunpack.c.l.b16 %v1836
      %v2025 = vunpack.c.h.b16 %v1836
      %v2026 = vunpack.c.l.b16 %v1837
      %v2027 = vunpack.c.h.b16 %v1837
      %v2028 = vunpack.c.l.b16 %v1838
      %v2029 = vunpack.c.h.b16 %v1838
      %v2030 = vunpack.c.l.b16 %v1839
      %v2031 = vunpack.c.h.b16 %v1839
      %v2032 = vpack.c.b16 %v1904, %v1904
      %v2033 = vpack.c.b16 %v1905, %v1905
      %v2034 = vpack.c.b16 %v1906, %v1906
      %v2035 = vpack.c.b16 %v1907, %v1907
      %v2036 = vpack.c.b16 %v1908, %v1908
      %v2037 = vpack.c.b16 %v1909, %v1909
      %v2038 = vpack.c.b16 %v1910, %v1910
      %v2039 = vpack.c.b16 %v1911, %v1911
      %v2040 = vpack.c.b16 %v1912, %v1912
      %v2041 = vpack.c.b16 %v1913, %v1913
      %v2042 = vpack.c.b16 %v1914, %v1914
      %v2043 = vpack.c.b16 %v1915, %v1915
      %v2044 = vpack.c.b16 %v1916, %v1916
      %v2045 = vpack.c.b16 %v1917, %v1917
      %v2046 = vpack.c.b16 %v1918, %v1918
      %v2047 = vpack.c.b16 %v1919, %v1919
      %v2048 = vpack.c.b16 %v1920, %v1920
      %v2049 = vpack.c.b16 %v1921, %v1921
      %v2050 = vpack.c.b16 %v1922, %v1922
      %v2051 = vpack.c.b16 %v1923, %v1923
      %v2052 = vpack.c.b16 %v1924, %v1924
      %v2053 = vpack.c.b16 %v1925, %v1925
      %v2054 = vpack.c.b16 %v1926, %v1926
      %v2055 = vpack.c.b16 %v1927, %v1927
      %v2056 = vpack.c.b16 %v1928, %v1928
      %v2057 = vpack.c.b16 %v1929, %v1929
      %v2058 = vpack.c.b16 %v1930, %v1930
      %v2059 = vpack.c.b16 %v1931, %v1931
      %v2060 = vpack.c.b16 %v1932, %v1932
      %v2061 = vpack.c.b16 %v1933, %v1933
      %v2062 = vpack.c.b16 %v1934, %v1934
      %v2063 = vpack.c.b16 %v1935, %v1935
      %v2064 = vpack.c.b16 %v1936, %v1936
      %v2065 = vpack.c.b16 %v1937, %v1937
      %v2066 = vpack.c.b16 %v1938, %v1938
      %v2067 = vpack.c.b16 %v1939, %v1939
      %v2068 = vpack.c.b16 %v1940, %v1940
      %v2069 = vpack.c.b16 %v1941, %v1941
      %v2070 = vpack.c.b16 %v1942, %v1942
      %v2071 = vpack.c.b16 %v1943, %v1943
      %v2072 = vpack.c.b16 %v1944, %v1944
      %v2073 = vpack.c.b16 %v1945, %v1945
      %v2074 = vpack.c.b16 %v1946, %v1946
      %v2075 = vpack.c.b16 %v1947, %v1947
      %v2076 = vpack.c.b16 %v1948, %v1948
      %v2077 = vpack.c.b16 %v1949, %v1949
      %v2078 = vpack.c.b16 %v1950, %v1950
      %v2079 = vpack.c.b16 %v1951, %v1951
      %v2080 = vpack.c.b16 %v1952, %v1952
      %v2081 = vpack.c.b16 %v1953, %v1953
      %v2082 = vpack.c.b16 %v1954, %v1954
      %v2083 = vpack.c.b16 %v1955, %v1955
      %v2084 = vpack.c.b16 %v1956, %v1956
      %v2085 = vpack.c.b16 %v1957, %v1957
      %v2086 = vpack.c.b16 %v1958, %v1958
      %v2087 = vpack.c.b16 %v1959, %v1959
      %v2088 = vpack.c.b16 %v1960, %v1960
      %v2089 = vpack.c.b16 %v1961, %v1961
      %v2090 = vpack.c.b16 %v1962, %v1962
      %v2091 = vpack.c.b16 %v1963, %v1963
      %v2092 = vpack.c.b16 %v1964, %v1964
      %v2093 = vpack.c.b16 %v1965, %v1965
      %v2094 = vpack.c.b16 %v1966, %v1966
      %v2095 = vpack.c.b16 %v1967, %v1967
      %v2096 = vpack.c.b16 %v1968, %v1968
      %v2097 = vpack.c.b16 %v1969, %v1969
      %v2098 = vpack.c.b16 %v1970, %v1970
      %v2099 = vpack.c.b16 %v1971, %v1971
      %v2100 = vpack.c.b16 %v1972, %v1972
      %v2101 = vpack.c.b16 %v1973, %v1973
      %v2102 = vpack.c.b16 %v1974, %v1974
      %v2103 = vpack.c.b16 %v1975, %v1975
      %v2104 = vpack.c.b16 %v1976, %v1976
      %v2105 = vpack.c.b16 %v1977, %v1977
      %v2106 = vpack.c.b16 %v1978, %v1978
      %v2107 = vpack.c.b16 %v1979, %v1979
      %v2108 = vpack.c.b16 %v1980, %v1980
      %v2109 = vpack.c.b16 %v1981, %v1981
      %v2110 = vpack.c.b16 %v1982, %v1982
      %v2111 = vpack.c.b16 %v1983, %v1983
      %v2112 = vpack.c.b16 %v1984, %v1984
      %v2113 = vpack.c.b16 %v1985, %v1985
      %v2114 = vpack.c.b16 %v1986, %v1986
      %v2115 = vpack.c.b16 %v1987, %v1987
      %v2116 = vpack.c.b16 %v1988, %v1988
      %v2117 = vpack.c.b16 %v1989, %v1989
      %v2118 = vpack.c.b16 %v1990, %v1990
      %v2119 = vpack.c.b16 %v1991, %v1991
      %v2120 = vpack.c.b16 %v1992, %v1992
      %v2121 = vpack.c.b16 %v1993, %v1993
      %v2122 = vpack.c.b16 %v1994, %v1994
      %v2123 = vpack.c.b16 %v1995, %v1995
      %v2124 = vpack.c.b16 %v1996, %v1996
      %v2125 = vpack.c.b16 %v1997, %v1997
      %v2126 = vpack.c.b16 %v1998, %v1998
      %v2127 = vpack.c.b16 %v1999, %v1999
      %v2128 = vpack.c.b16 %v2000, %v2000
      %v2129 = vpack.c.b16 %v2001, %v2001
      %v2130 = vpack.c.b16 %v2002, %v2002
      %v2131 = vpack.c.b16 %v2003, %v2003
      %v2132 = vpack.c.b16 %v2004, %v2004
      %v2133 = vpack.c.b16 %v2005, %v2005
      %v2134 = vpack.c.b16 %v2006, %v2006
      %v2135 = vpack.c.b16 %v2007, %v2007
      %v2136 = vpack.c.b16 %v2008, %v2008
      %v2137 = vpack.c.b16 %v2009, %v2009
      %v2138 = vpack.c.b16 %v2010, %v2010
      %v2139 = vpack.c.b16 %v2011, %v2011
      %v2140 = vpack.c.b16 %v2012, %v2012
      %v2141 = vpack.c.b16 %v2013, %v2013
      %v2142 = vpack.c.b16 %v2014, %v2014
      %v2143 = vpack.c.b16 %v2015, %v2015
      %v2144 = vpack.c.b16 %v2016, %v2016
      %v2145 = vpack.c.b16 %v2017, %v2017
      %v2146 = vpack.c.b16 %v2018, %v2018
      %v2147 = vpack.c.b16 %v2019, %v2019
      %v2148 = vpack.c.b16 %v2020, %v2020
      %v2149 = vpack.c.b16 %v2021, %v2021
      %v2150 = vpack.c.b16 %v2022, %v2022
      %v2151 = vpack.c.b16 %v2023, %v2023
      %v2152 = vpack.c.b16 %v2024, %v2024
      %v2153 = vpack.c.b16 %v2025, %v2025
      %v2154 = vpack.c.b16 %v2026, %v2026
      %v2155 = vpack.c.b16 %v2027, %v2027
      %v2156 = vpack.c.b16 %v2028, %v2028
      %v2157 = vpack.c.b16 %v2029, %v2029
      %v2158 = vpack.c.b16 %v2030, %v2030
      %v2159 = vpack.c.b16 %v2031, %v2031
      %2288 = vst [vmem:[%s172] sm:$0xf] %v2032
      %2289 = vst [vmem:[%s172 + $0x4] sm:$0xf] %v2033
      %2290 = vst [vmem:[%s172 + $0x8] sm:$0xf] %v2034
      %2291 = vst [vmem:[%s172 + $0xc] sm:$0xf] %v2035
      %2292 = vst [vmem:[%s172 + $0x10] sm:$0xf] %v2036
      %2293 = vst [vmem:[%s172 + $0x14] sm:$0xf] %v2037
      %2294 = vst [vmem:[%s172 + $0x18] sm:$0xf] %v2038
      %2295 = vst [vmem:[%s172 + $0x1c] sm:$0xf] %v2039
      %2296 = vst [vmem:[%s172 + $0x20] sm:$0xf] %v2040
      %2297 = vst [vmem:[%s172 + $0x24] sm:$0xf] %v2041
      %2298 = vst [vmem:[%s172 + $0x28] sm:$0xf] %v2042
      %2299 = vst [vmem:[%s172 + $0x2c] sm:$0xf] %v2043
      %2300 = vst [vmem:[%s172 + $0x30] sm:$0xf] %v2044
      %2301 = vst [vmem:[%s172 + $0x34] sm:$0xf] %v2045
      %2302 = vst [vmem:[%s172 + $0x38] sm:$0xf] %v2046
      %2303 = vst [vmem:[%s172 + $0x3c] sm:$0xf] %v2047
      %2304 = vst [vmem:[%s172 + $0x40] sm:$0xf] %v2048
      %2305 = vst [vmem:[%s172 + $0x44] sm:$0xf] %v2049
      %2306 = vst [vmem:[%s172 + $0x48] sm:$0xf] %v2050
      %2307 = vst [vmem:[%s172 + $0x4c] sm:$0xf] %v2051
      %2308 = vst [vmem:[%s172 + $0x50] sm:$0xf] %v2052
      %2309 = vst [vmem:[%s172 + $0x54] sm:$0xf] %v2053
      %2310 = vst [vmem:[%s172 + $0x58] sm:$0xf] %v2054
      %2311 = vst [vmem:[%s172 + $0x5c] sm:$0xf] %v2055
      %2312 = vst [vmem:[%s172 + $0x60] sm:$0xf] %v2056
      %2313 = vst [vmem:[%s172 + $0x64] sm:$0xf] %v2057
      %2314 = vst [vmem:[%s172 + $0x68] sm:$0xf] %v2058
      %2315 = vst [vmem:[%s172 + $0x6c] sm:$0xf] %v2059
      %2316 = vst [vmem:[%s172 + $0x70] sm:$0xf] %v2060
      %2317 = vst [vmem:[%s172 + $0x74] sm:$0xf] %v2061
      %2318 = vst [vmem:[%s172 + $0x78] sm:$0xf] %v2062
      %2319 = vst [vmem:[%s172 + $0x7c] sm:$0xf] %v2063
      %2320 = vst [vmem:[%s172 + $0x80] sm:$0xf] %v2064
      %2321 = vst [vmem:[%s172 + $0x84] sm:$0xf] %v2065
      %2322 = vst [vmem:[%s172 + $0x88] sm:$0xf] %v2066
      %2323 = vst [vmem:[%s172 + $0x8c] sm:$0xf] %v2067
      %2324 = vst [vmem:[%s172 + $0x90] sm:$0xf] %v2068
      %2325 = vst [vmem:[%s172 + $0x94] sm:$0xf] %v2069
      %2326 = vst [vmem:[%s172 + $0x98] sm:$0xf] %v2070
      %2327 = vst [vmem:[%s172 + $0x9c] sm:$0xf] %v2071
      %2328 = vst [vmem:[%s172 + $0xa0] sm:$0xf] %v2072
      %2329 = vst [vmem:[%s172 + $0xa4] sm:$0xf] %v2073
      %2330 = vst [vmem:[%s172 + $0xa8] sm:$0xf] %v2074
      %2331 = vst [vmem:[%s172 + $0xac] sm:$0xf] %v2075
      %2332 = vst [vmem:[%s172 + $0xb0] sm:$0xf] %v2076
      %2333 = vst [vmem:[%s172 + $0xb4] sm:$0xf] %v2077
      %2334 = vst [vmem:[%s172 + $0xb8] sm:$0xf] %v2078
      %2335 = vst [vmem:[%s172 + $0xbc] sm:$0xf] %v2079
      %2336 = vst [vmem:[%s172 + $0xc0] sm:$0xf] %v2080
      %2337 = vst [vmem:[%s172 + $0xc4] sm:$0xf] %v2081
      %2338 = vst [vmem:[%s172 + $0xc8] sm:$0xf] %v2082
      %2339 = vst [vmem:[%s172 + $0xcc] sm:$0xf] %v2083
      %2340 = vst [vmem:[%s172 + $0xd0] sm:$0xf] %v2084
      %2341 = vst [vmem:[%s172 + $0xd4] sm:$0xf] %v2085
      %2342 = vst [vmem:[%s172 + $0xd8] sm:$0xf] %v2086
      %2343 = vst [vmem:[%s172 + $0xdc] sm:$0xf] %v2087
      %2344 = vst [vmem:[%s172 + $0xe0] sm:$0xf] %v2088
      %2345 = vst [vmem:[%s172 + $0xe4] sm:$0xf] %v2089
      %2346 = vst [vmem:[%s172 + $0xe8] sm:$0xf] %v2090
      %2347 = vst [vmem:[%s172 + $0xec] sm:$0xf] %v2091
      %2348 = vst [vmem:[%s172 + $0xf0] sm:$0xf] %v2092
      %2349 = vst [vmem:[%s172 + $0xf4] sm:$0xf] %v2093
      %2350 = vst [vmem:[%s172 + $0xf8] sm:$0xf] %v2094
      %2351 = vst [vmem:[%s172 + $0xfc] sm:$0xf] %v2095
      %2352 = vst [vmem:[%s172 + $0x100] sm:$0xf] %v2096
      %2353 = vst [vmem:[%s172 + $0x104] sm:$0xf] %v2097
      %2354 = vst [vmem:[%s172 + $0x108] sm:$0xf] %v2098
      %2355 = vst [vmem:[%s172 + $0x10c] sm:$0xf] %v2099
      %2356 = vst [vmem:[%s172 + $0x110] sm:$0xf] %v2100
      %2357 = vst [vmem:[%s172 + $0x114] sm:$0xf] %v2101
      %2358 = vst [vmem:[%s172 + $0x118] sm:$0xf] %v2102
      %2359 = vst [vmem:[%s172 + $0x11c] sm:$0xf] %v2103
      %2360 = vst [vmem:[%s172 + $0x120] sm:$0xf] %v2104
      %2361 = vst [vmem:[%s172 + $0x124] sm:$0xf] %v2105
      %2362 = vst [vmem:[%s172 + $0x128] sm:$0xf] %v2106
      %2363 = vst [vmem:[%s172 + $0x12c] sm:$0xf] %v2107
      %2364 = vst [vmem:[%s172 + $0x130] sm:$0xf] %v2108
      %2365 = vst [vmem:[%s172 + $0x134] sm:$0xf] %v2109
      %2366 = vst [vmem:[%s172 + $0x138] sm:$0xf] %v2110
      %2367 = vst [vmem:[%s172 + $0x13c] sm:$0xf] %v2111
      %2368 = vst [vmem:[%s172 + $0x140] sm:$0xf] %v2112
      %2369 = vst [vmem:[%s172 + $0x144] sm:$0xf] %v2113
      %2370 = vst [vmem:[%s172 + $0x148] sm:$0xf] %v2114
      %2371 = vst [vmem:[%s172 + $0x14c] sm:$0xf] %v2115
      %2372 = vst [vmem:[%s172 + $0x150] sm:$0xf] %v2116
      %2373 = vst [vmem:[%s172 + $0x154] sm:$0xf] %v2117
      %2374 = vst [vmem:[%s172 + $0x158] sm:$0xf] %v2118
      %2375 = vst [vmem:[%s172 + $0x15c] sm:$0xf] %v2119
      %2376 = vst [vmem:[%s172 + $0x160] sm:$0xf] %v2120
      %2377 = vst [vmem:[%s172 + $0x164] sm:$0xf] %v2121
      %2378 = vst [vmem:[%s172 + $0x168] sm:$0xf] %v2122
      %2379 = vst [vmem:[%s172 + $0x16c] sm:$0xf] %v2123
      %2380 = vst [vmem:[%s172 + $0x170] sm:$0xf] %v2124
      %2381 = vst [vmem:[%s172 + $0x174] sm:$0xf] %v2125
      %2382 = vst [vmem:[%s172 + $0x178] sm:$0xf] %v2126
      %2383 = vst [vmem:[%s172 + $0x17c] sm:$0xf] %v2127
      %2384 = vst [vmem:[%s172 + $0x180] sm:$0xf] %v2128
      %2385 = vst [vmem:[%s172 + $0x184] sm:$0xf] %v2129
      %2386 = vst [vmem:[%s172 + $0x188] sm:$0xf] %v2130
      %2387 = vst [vmem:[%s172 + $0x18c] sm:$0xf] %v2131
      %2388 = vst [vmem:[%s172 + $0x190] sm:$0xf] %v2132
      %2389 = vst [vmem:[%s172 + $0x194] sm:$0xf] %v2133
      %2390 = vst [vmem:[%s172 + $0x198] sm:$0xf] %v2134
      %2391 = vst [vmem:[%s172 + $0x19c] sm:$0xf] %v2135
      %2392 = vst [vmem:[%s172 + $0x1a0] sm:$0xf] %v2136
      %2393 = vst [vmem:[%s172 + $0x1a4] sm:$0xf] %v2137
      %2394 = vst [vmem:[%s172 + $0x1a8] sm:$0xf] %v2138
      %2395 = vst [vmem:[%s172 + $0x1ac] sm:$0xf] %v2139
      %2396 = vst [vmem:[%s172 + $0x1b0] sm:$0xf] %v2140
      %2397 = vst [vmem:[%s172 + $0x1b4] sm:$0xf] %v2141
      %2398 = vst [vmem:[%s172 + $0x1b8] sm:$0xf] %v2142
      %2399 = vst [vmem:[%s172 + $0x1bc] sm:$0xf] %v2143
      %2400 = vst [vmem:[%s172 + $0x1c0] sm:$0xf] %v2144
      %2401 = vst [vmem:[%s172 + $0x1c4] sm:$0xf] %v2145
      %2402 = vst [vmem:[%s172 + $0x1c8] sm:$0xf] %v2146
      %2403 = vst [vmem:[%s172 + $0x1cc] sm:$0xf] %v2147
      %2404 = vst [vmem:[%s172 + $0x1d0] sm:$0xf] %v2148
      %2405 = vst [vmem:[%s172 + $0x1d4] sm:$0xf] %v2149
      %2406 = vst [vmem:[%s172 + $0x1d8] sm:$0xf] %v2150
      %2407 = vst [vmem:[%s172 + $0x1dc] sm:$0xf] %v2151
      %2408 = vst [vmem:[%s172 + $0x1e0] sm:$0xf] %v2152
      %2409 = vst [vmem:[%s172 + $0x1e4] sm:$0xf] %v2153
      %2410 = vst [vmem:[%s172 + $0x1e8] sm:$0xf] %v2154
      %2411 = vst [vmem:[%s172 + $0x1ec] sm:$0xf] %v2155
      %2412 = vst [vmem:[%s172 + $0x1f0] sm:$0xf] %v2156
      %2413 = vst [vmem:[%s172 + $0x1f4] sm:$0xf] %v2157
      %2414 = vst [vmem:[%s172 + $0x1f8] sm:$0xf] %v2158
      %2415 = vst [vmem:[%s172 + $0x1fc] sm:$0xf] %v2159
      %s2416 = smul.u32 128, %s14
      %p2417 = scmp.lt.s32.totalorder %s2416, 255
      %s2418 = scalar_select %p2417, %s2416, 255
      %s2419 = smul.addr %s2418, 4
      %s2420 = scalar_lea.vmem %s3, %s2419
      // Predicated region
      $region33: #{_lambda_.4} parent=31 // pred_check
        %p2421 = pneg %p100
      $region34: #{_lambda_.4} parent=31 // pred_check_branch
        %2423 = sbr.rel (%p2421) target = $region36
      $region35: #{_lambda_.4} parent=31 // pred_region
        %s2424 = smul.u32 128, %s14
      $region36: #{_lambda_.4} parent=31 // pred_fallthru
        _
    $region32: #{_lambda_.4} parent=5 // pred_fallthru
      _
    %p2425 = scmp.le.s32.totalorder 2, %s9
    // Predicated region
    $region37: #{_lambda_.4} parent=5 // pred_check
      %p2426 = pneg %p2425
    $region38: #{_lambda_.4} parent=5 // pred_check_branch
      %2428 = sbr.rel (%p2426) target = $region40
    $region39: #{_lambda_.4} parent=5 // pred_region
      %s2429 = ssub.s32 %s9, 2
      // Predicated region
      $region41: #{_lambda_.4} parent=39 // pred_check
        %p2430 = pneg %p106
      $region42: #{_lambda_.4} parent=39 // pred_check_branch
        %2432 = sbr.rel (%p2430) target = $region44
      $region43: #{_lambda_.4} parent=39 // pred_region
        %s2433 = smul.u32 128, %s15
        %p2434 = scmp.lt.s32.totalorder %s2433, 255
        %s2435 = scalar_select %p2434, %s2433, 255
        %s2436 = smul.addr %s2435, 4
        %s2437 = scalar_lea.vmem %s3, %s2436
      $region44: #{_lambda_.4} parent=39 // pred_fallthru
        _
    $region40: #{_lambda_.4} parent=5 // pred_fallthru
      _
  $region6: #{_lambda_.4} parent=0 // loop_footer
    %s13 = sadd.s32 1, %s9
  $region7: #{_lambda_.4} parent=0 // loop_footer_branch
    %8 = sbr.rel target = $region3
  $region8: #{_lambda_.4} parent=0 // loop_exit
    _

// kernel: _lambda_.5
$region0: #{_lambda_.5}
  #allocation0 [shape = 'u32[]', space=smem, size = 0x4, offset = 0x4, fixed_abs, tag = 'smem constant byte address 0x4 - core index']
  #allocation1 [shape = 'u32[144,128]{1,0:T(1,128)}', space=vmem, size = 0x12000, scoped, tag = 'internal scratch']
  %s0 = inlined_call_operand.vmem [shape: bf16[512,128], index: 0, kind: input, shape index: {}]
  %s1 = inlined_call_operand.vmem [shape: bf16[128,128], index: 1, kind: input, shape index: {}]
  %s2 = inlined_call_operand.vmem [shape: f32[1,128], index: 2, kind: input, shape index: {}]
  %s3 = inlined_call_operand.vmem [shape: f32[1,128], index: 3, kind: input, shape index: {}]
  %s4 = inlined_call_operand.vmem [shape: bf16[512,128], index: 4, kind: output, shape index: {}]
  %s5 = sld [smem:[#allocation0]]
  $region26: #{_lambda_.5} parent=0
    _
  %s7 = ssub.s32 1, %s5
  %s8 = scalar_select 0, %s7, %s5
  // Predicated region
  $region2: #{_lambda_.5} parent=0 // pred_check
    _
  $region3: #{_lambda_.5} parent=0 // pred_check_branch
    %10 = sbr.rel (0) target = $region5
  $region4: #{_lambda_.5} parent=0 // pred_region
    _
  $region5: #{_lambda_.5} parent=0 // pred_fallthru
    _
  // Predicated region
  $region6: #{_lambda_.5} parent=0 // pred_check
    _
  $region7: #{_lambda_.5} parent=0 // pred_check_branch
    %12 = sbr.rel (0) target = $region9
  $region8: #{_lambda_.5} parent=0 // pred_region
    _
  $region9: #{_lambda_.5} parent=0 // pred_fallthru
    _
  // Predicated region
  $region10: #{_lambda_.5} parent=0 // pred_check
    _
  $region11: #{_lambda_.5} parent=0 // pred_check_branch
    %14 = sbr.rel (0) target = $region13
  $region12: #{_lambda_.5} parent=0 // pred_region
    _
  $region13: #{_lambda_.5} parent=0 // pred_fallthru
    _
  // Predicated region
  $region14: #{_lambda_.5} parent=0 // pred_check
    _
  $region15: #{_lambda_.5} parent=0 // pred_check_branch
    %16 = sbr.rel (0) target = $region17
  $region16: #{_lambda_.5} parent=0 // pred_region
    _
  $region17: #{_lambda_.5} parent=0 // pred_fallthru
    _
  %v18 = vld [vmem:[%s0] sm:$0xf]
  %v19 = vld [vmem:[%s0 + $0x4] sm:$0xf]
  %v20 = vld [vmem:[%s0 + $0x8] sm:$0xf]
  %v21 = vld [vmem:[%s0 + $0xc] sm:$0xf]
  %v22 = vld [vmem:[%s0 + $0x10] sm:$0xf]
  %v23 = vld [vmem:[%s0 + $0x14] sm:$0xf]
  %v24 = vld [vmem:[%s0 + $0x18] sm:$0xf]
  %v25 = vld [vmem:[%s0 + $0x1c] sm:$0xf]
  %v26 = vld [vmem:[%s0 + $0x20] sm:$0xf]
  %v27 = vld [vmem:[%s0 + $0x24] sm:$0xf]
  %v28 = vld [vmem:[%s0 + $0x28] sm:$0xf]
  %v29 = vld [vmem:[%s0 + $0x2c] sm:$0xf]
  %v30 = vld [vmem:[%s0 + $0x30] sm:$0xf]
  %v31 = vld [vmem:[%s0 + $0x34] sm:$0xf]
  %v32 = vld [vmem:[%s0 + $0x38] sm:$0xf]
  %v33 = vld [vmem:[%s0 + $0x3c] sm:$0xf]
  %v34 = vld [vmem:[%s0 + $0x40] sm:$0xf]
  %v35 = vld [vmem:[%s0 + $0x44] sm:$0xf]
  %v36 = vld [vmem:[%s0 + $0x48] sm:$0xf]
  %v37 = vld [vmem:[%s0 + $0x4c] sm:$0xf]
  %v38 = vld [vmem:[%s0 + $0x50] sm:$0xf]
  %v39 = vld [vmem:[%s0 + $0x54] sm:$0xf]
  %v40 = vld [vmem:[%s0 + $0x58] sm:$0xf]
  %v41 = vld [vmem:[%s0 + $0x5c] sm:$0xf]
  %v42 = vld [vmem:[%s0 + $0x60] sm:$0xf]
  %v43 = vld [vmem:[%s0 + $0x64] sm:$0xf]
  %v44 = vld [vmem:[%s0 + $0x68] sm:$0xf]
  %v45 = vld [vmem:[%s0 + $0x6c] sm:$0xf]
  %v46 = vld [vmem:[%s0 + $0x70] sm:$0xf]
  %v47 = vld [vmem:[%s0 + $0x74] sm:$0xf]
  %v48 = vld [vmem:[%s0 + $0x78] sm:$0xf]
  %v49 = vld [vmem:[%s0 + $0x7c] sm:$0xf]
  %v50 = vld [vmem:[%s0 + $0x80] sm:$0xf]
  %v51 = vld [vmem:[%s0 + $0x84] sm:$0xf]
  %v52 = vld [vmem:[%s0 + $0x88] sm:$0xf]
  %v53 = vld [vmem:[%s0 + $0x8c] sm:$0xf]
  %v54 = vld [vmem:[%s0 + $0x90] sm:$0xf]
  %v55 = vld [vmem:[%s0 + $0x94] sm:$0xf]
  %v56 = vld [vmem:[%s0 + $0x98] sm:$0xf]
  %v57 = vld [vmem:[%s0 + $0x9c] sm:$0xf]
  %v58 = vld [vmem:[%s0 + $0xa0] sm:$0xf]
  %v59 = vld [vmem:[%s0 + $0xa4] sm:$0xf]
  %v60 = vld [vmem:[%s0 + $0xa8] sm:$0xf]
  %v61 = vld [vmem:[%s0 + $0xac] sm:$0xf]
  %v62 = vld [vmem:[%s0 + $0xb0] sm:$0xf]
  %v63 = vld [vmem:[%s0 + $0xb4] sm:$0xf]
  %v64 = vld [vmem:[%s0 + $0xb8] sm:$0xf]
  %v65 = vld [vmem:[%s0 + $0xbc] sm:$0xf]
  %v66 = vld [vmem:[%s0 + $0xc0] sm:$0xf]
  %v67 = vld [vmem:[%s0 + $0xc4] sm:$0xf]
  %v68 = vld [vmem:[%s0 + $0xc8] sm:$0xf]
  %v69 = vld [vmem:[%s0 + $0xcc] sm:$0xf]
  %v70 = vld [vmem:[%s0 + $0xd0] sm:$0xf]
  %v71 = vld [vmem:[%s0 + $0xd4] sm:$0xf]
  %v72 = vld [vmem:[%s0 + $0xd8] sm:$0xf]
  %v73 = vld [vmem:[%s0 + $0xdc] sm:$0xf]
  %v74 = vld [vmem:[%s0 + $0xe0] sm:$0xf]
  %v75 = vld [vmem:[%s0 + $0xe4] sm:$0xf]
  %v76 = vld [vmem:[%s0 + $0xe8] sm:$0xf]
  %v77 = vld [vmem:[%s0 + $0xec] sm:$0xf]
  %v78 = vld [vmem:[%s0 + $0xf0] sm:$0xf]
  %v79 = vld [vmem:[%s0 + $0xf4] sm:$0xf]
  %v80 = vld [vmem:[%s0 + $0xf8] sm:$0xf]
  %v81 = vld [vmem:[%s0 + $0xfc] sm:$0xf]
  %v82 = vld [vmem:[%s1] sm:$0xf]
  %v83 = vld [vmem:[%s1 + $0x4] sm:$0xf]
  %v84 = vld [vmem:[%s1 + $0x8] sm:$0xf]
  %v85 = vld [vmem:[%s1 + $0xc] sm:$0xf]
  %v86 = vld [vmem:[%s1 + $0x10] sm:$0xf]
  %v87 = vld [vmem:[%s1 + $0x14] sm:$0xf]
  %v88 = vld [vmem:[%s1 + $0x18] sm:$0xf]
  %v89 = vld [vmem:[%s1 + $0x1c] sm:$0xf]
  %v90 = vld [vmem:[%s1 + $0x20] sm:$0xf]
  %v91 = vld [vmem:[%s1 + $0x24] sm:$0xf]
  %v92 = vld [vmem:[%s1 + $0x28] sm:$0xf]
  %v93 = vld [vmem:[%s1 + $0x2c] sm:$0xf]
  %v94 = vld [vmem:[%s1 + $0x30] sm:$0xf]
  %v95 = vld [vmem:[%s1 + $0x34] sm:$0xf]
  %v96 = vld [vmem:[%s1 + $0x38] sm:$0xf]
  %v97 = vld [vmem:[%s1 + $0x3c] sm:$0xf]
  %v162 = vunpack.c.l.b16 %v18
  %v163 = vunpack.c.l.b16 %v19
  %v164 = vunpack.c.l.b16 %v20
  %v165 = vunpack.c.l.b16 %v21
  %v166 = vunpack.c.l.b16 %v22
  %v167 = vunpack.c.l.b16 %v23
  %v168 = vunpack.c.l.b16 %v24
  %v169 = vunpack.c.l.b16 %v25
  %v170 = vunpack.c.l.b16 %v26
  %v171 = vunpack.c.l.b16 %v27
  %v172 = vunpack.c.l.b16 %v28
  %v173 = vunpack.c.l.b16 %v29
  %v174 = vunpack.c.l.b16 %v30
  %v175 = vunpack.c.l.b16 %v31
  %v176 = vunpack.c.l.b16 %v32
  %v177 = vunpack.c.l.b16 %v33
  %v178 = vunpack.c.l.b16 %v34
  %v179 = vunpack.c.l.b16 %v35
  %v180 = vunpack.c.l.b16 %v36
  %v181 = vunpack.c.l.b16 %v37
  %v182 = vunpack.c.l.b16 %v38
  %v183 = vunpack.c.l.b16 %v39
  %v184 = vunpack.c.l.b16 %v40
  %v185 = vunpack.c.l.b16 %v41
  %v186 = vunpack.c.l.b16 %v42
  %v187 = vunpack.c.l.b16 %v43
  %v188 = vunpack.c.l.b16 %v44
  %v189 = vunpack.c.l.b16 %v45
  %v190 = vunpack.c.l.b16 %v46
  %v191 = vunpack.c.l.b16 %v47
  %v192 = vunpack.c.l.b16 %v48
  %v193 = vunpack.c.l.b16 %v49
  %v194 = vunpack.c.l.b16 %v50
  %v195 = vunpack.c.l.b16 %v51
  %v196 = vunpack.c.l.b16 %v52
  %v197 = vunpack.c.l.b16 %v53
  %v198 = vunpack.c.l.b16 %v54
  %v199 = vunpack.c.l.b16 %v55
  %v200 = vunpack.c.l.b16 %v56
  %v201 = vunpack.c.l.b16 %v57
  %v202 = vunpack.c.l.b16 %v58
  %v203 = vunpack.c.l.b16 %v59
  %v204 = vunpack.c.l.b16 %v60
  %v205 = vunpack.c.l.b16 %v61
  %v206 = vunpack.c.l.b16 %v62
  %v207 = vunpack.c.l.b16 %v63
  %v208 = vunpack.c.l.b16 %v64
  %v209 = vunpack.c.l.b16 %v65
  %v210 = vunpack.c.l.b16 %v66
  %v211 = vunpack.c.l.b16 %v67
  %v212 = vunpack.c.l.b16 %v68
  %v213 = vunpack.c.l.b16 %v69
  %v214 = vunpack.c.l.b16 %v70
  %v215 = vunpack.c.l.b16 %v71
  %v216 = vunpack.c.l.b16 %v72
  %v217 = vunpack.c.l.b16 %v73
  %v218 = vunpack.c.l.b16 %v74
  %v219 = vunpack.c.l.b16 %v75
  %v220 = vunpack.c.l.b16 %v76
  %v221 = vunpack.c.l.b16 %v77
  %v222 = vunpack.c.l.b16 %v78
  %v223 = vunpack.c.l.b16 %v79
  %v224 = vunpack.c.l.b16 %v80
  %v225 = vunpack.c.l.b16 %v81
  %v226 = vpack.c.b16 %v163, %v162
  %v227 = vpack.c.b16 %v165, %v164
  %v228 = vpack.c.b16 %v167, %v166
  %v229 = vpack.c.b16 %v169, %v168
  %v230 = vpack.c.b16 %v171, %v170
  %v231 = vpack.c.b16 %v173, %v172
  %v232 = vpack.c.b16 %v175, %v174
  %v233 = vpack.c.b16 %v177, %v176
  %v234 = vpack.c.b16 %v179, %v178
  %v235 = vpack.c.b16 %v181, %v180
  %v236 = vpack.c.b16 %v183, %v182
  %v237 = vpack.c.b16 %v185, %v184
  %v238 = vpack.c.b16 %v187, %v186
  %v239 = vpack.c.b16 %v189, %v188
  %v240 = vpack.c.b16 %v191, %v190
  %v241 = vpack.c.b16 %v193, %v192
  %v242 = vpack.c.b16 %v195, %v194
  %v243 = vpack.c.b16 %v197, %v196
  %v244 = vpack.c.b16 %v199, %v198
  %v245 = vpack.c.b16 %v201, %v200
  %v246 = vpack.c.b16 %v203, %v202
  %v247 = vpack.c.b16 %v205, %v204
  %v248 = vpack.c.b16 %v207, %v206
  %v249 = vpack.c.b16 %v209, %v208
  %v250 = vpack.c.b16 %v211, %v210
  %v251 = vpack.c.b16 %v213, %v212
  %v252 = vpack.c.b16 %v215, %v214
  %v253 = vpack.c.b16 %v217, %v216
  %v254 = vpack.c.b16 %v219, %v218
  %v255 = vpack.c.b16 %v221, %v220
  %v256 = vpack.c.b16 %v223, %v222
  %v257 = vpack.c.b16 %v225, %v224
  %v306 = vunpack.c.l.b16 %v82
  %v307 = vunpack.c.l.b16 %v83
  %v308 = vunpack.c.l.b16 %v84
  %v309 = vunpack.c.l.b16 %v85
  %v310 = vunpack.c.l.b16 %v86
  %v311 = vunpack.c.l.b16 %v87
  %v312 = vunpack.c.l.b16 %v88
  %v313 = vunpack.c.l.b16 %v89
  %v314 = vunpack.c.l.b16 %v90
  %v315 = vunpack.c.l.b16 %v91
  %v316 = vunpack.c.l.b16 %v92
  %v317 = vunpack.c.l.b16 %v93
  %v318 = vunpack.c.l.b16 %v94
  %v319 = vunpack.c.l.b16 %v95
  %v320 = vunpack.c.l.b16 %v96
  %v321 = vunpack.c.l.b16 %v97
  %v322 = vpack.c.b16 %v307, %v306
  %v323 = vpack.c.b16 %v309, %v308
  %v324 = vpack.c.b16 %v311, %v310
  %v325 = vpack.c.b16 %v313, %v312
  %v326 = vpack.c.b16 %v315, %v314
  %v327 = vpack.c.b16 %v317, %v316
  %v328 = vpack.c.b16 %v319, %v318
  %v329 = vpack.c.b16 %v321, %v320
  %338 = vmatprep.subr.bf16.mxu0 0
  %339 = vmatpush1.bf16.msra.mxu0 %v322
  %340 = vmatprep.subr.bf16.mxu0 0
  %341 = vmatpush1.bf16.msra.mxu0 %v323
  %342 = vmatprep.subr.bf16.mxu0 0
  %343 = vmatpush1.bf16.msra.mxu0 %v324
  %344 = vmatprep.subr.bf16.mxu0 0
  %345 = vmatpush1.bf16.msra.mxu0 %v325
  %346 = vmatprep.subr.bf16.mxu0 0
  %347 = vmatpush1.bf16.msra.mxu0 %v326
  %348 = vmatprep.subr.bf16.mxu0 0
  %349 = vmatpush1.bf16.msra.mxu0 %v327
  %350 = vmatprep.subr.bf16.mxu0 0
  %351 = vmatpush1.bf16.msra.mxu0 %v328
  %352 = vmatprep.subr.bf16.mxu0 0
  %353 = vmatpush1.bf16.msra.mxu0 %v329
  %354 = vmatprep.subr.bf16.mxu0 0
  %355 = vmatpush1.bf16.msra.mxu0 0
  %356 = vmatprep.subr.bf16.mxu0 0
  %357 = vmatpush1.bf16.msra.mxu0 0
  %358 = vmatprep.subr.bf16.mxu0 0
  %359 = vmatpush1.bf16.msra.mxu0 0
  %360 = vmatprep.subr.bf16.mxu0 0
  %361 = vmatpush1.bf16.msra.mxu0 0
  %362 = vmatprep.subr.bf16.mxu0 0
  %363 = vmatpush1.bf16.msra.mxu0 0
  %364 = vmatprep.subr.bf16.mxu0 0
  %365 = vmatpush1.bf16.msra.mxu0 0
  %366 = vmatprep.subr.bf16.mxu0 0
  %367 = vmatpush1.bf16.msra.mxu0 0
  %368 = vmatprep.subr.bf16.mxu0 0
  %369 = vmatpush1.bf16.msra.mxu0 0
  %370 = vmatprep.mubr.bf16.mxu0 0
  %371 = vmatmul.mubr.bf16.gmra.mrb[0].mxu0 %v226
  %v372 = vpop.f32.mrb[0].mxu0
  %v373 = vadd.f32 0.0, %v372
  %v374 = vpop.f32.mrb[0].mxu0
  %v375 = vpop.f32.mrb[0].mxu0
  %v376 = vadd.f32 0.0, %v375
  %v377 = vpop.f32.mrb[0].mxu0
  %378 = vmatprep.mubr.bf16.mxu0 0
  %379 = vmatmul.mubr.bf16.gmra.mrb[0].mxu0 %v227
  %v380 = vpop.f32.mrb[0].mxu0
  %v381 = vadd.f32 0.0, %v380
  %v382 = vpop.f32.mrb[0].mxu0
  %v383 = vpop.f32.mrb[0].mxu0
  %v384 = vadd.f32 0.0, %v383
  %v385 = vpop.f32.mrb[0].mxu0
  %386 = vmatprep.mubr.bf16.mxu0 0
  %387 = vmatmul.mubr.bf16.gmra.mrb[0].mxu0 %v228
  %v388 = vpop.f32.mrb[0].mxu0
  %v389 = vadd.f32 0.0, %v388
  %v390 = vpop.f32.mrb[0].mxu0
  %v391 = vpop.f32.mrb[0].mxu0
  %v392 = vadd.f32 0.0, %v391
  %v393 = vpop.f32.mrb[0].mxu0
  %394 = vmatprep.mubr.bf16.mxu0 0
  %395 = vmatmul.mubr.bf16.gmra.mrb[0].mxu0 %v229
  %v396 = vpop.f32.mrb[0].mxu0
  %v397 = vadd.f32 0.0, %v396
  %v398 = vpop.f32.mrb[0].mxu0
  %v399 = vpop.f32.mrb[0].mxu0
  %v400 = vadd.f32 0.0, %v399
  %v401 = vpop.f32.mrb[0].mxu0
  %402 = vmatprep.mubr.bf16.mxu0 0
  %403 = vmatmul.mubr.bf16.gmra.mrb[0].mxu0 %v230
  %v404 = vpop.f32.mrb[0].mxu0
  %v405 = vadd.f32 0.0, %v404
  %v406 = vpop.f32.mrb[0].mxu0
  %v407 = vpop.f32.mrb[0].mxu0
  %v408 = vadd.f32 0.0, %v407
  %v409 = vpop.f32.mrb[0].mxu0
  %410 = vmatprep.mubr.bf16.mxu0 0
  %411 = vmatmul.mubr.bf16.gmra.mrb[0].mxu0 %v231
  %v412 = vpop.f32.mrb[0].mxu0
  %v413 = vadd.f32 0.0, %v412
  %v414 = vpop.f32.mrb[0].mxu0
  %v415 = vpop.f32.mrb[0].mxu0
  %v416 = vadd.f32 0.0, %v415
  %v417 = vpop.f32.mrb[0].mxu0
  %418 = vmatprep.mubr.bf16.mxu0 0
  %419 = vmatmul.mubr.bf16.gmra.mrb[0].mxu0 %v232
  %v420 = vpop.f32.mrb[0].mxu0
  %v421 = vadd.f32 0.0, %v420
  %v422 = vpop.f32.mrb[0].mxu0
  %v423 = vpop.f32.mrb[0].mxu0
  %v424 = vadd.f32 0.0, %v423
  %v425 = vpop.f32.mrb[0].mxu0
  %426 = vmatprep.mubr.bf16.mxu0 0
  %427 = vmatmul.mubr.bf16.gmra.mrb[0].mxu0 %v233
  %v428 = vpop.f32.mrb[0].mxu0
  %v429 = vadd.f32 0.0, %v428
  %v430 = vpop.f32.mrb[0].mxu0
  %v431 = vpop.f32.mrb[0].mxu0
  %v432 = vadd.f32 0.0, %v431
  %v433 = vpop.f32.mrb[0].mxu0
  %434 = vmatprep.mubr.bf16.mxu0 0
  %435 = vmatmul.mubr.bf16.gmra.mrb[0].mxu0 %v234
  %v436 = vpop.f32.mrb[0].mxu0
  %v437 = vadd.f32 0.0, %v436
  %v438 = vpop.f32.mrb[0].mxu0
  %v439 = vpop.f32.mrb[0].mxu0
  %v440 = vadd.f32 0.0, %v439
  %v441 = vpop.f32.mrb[0].mxu0
  %442 = vmatprep.mubr.bf16.mxu0 0
  %443 = vmatmul.mubr.bf16.gmra.mrb[0].mxu0 %v235
  %v444 = vpop.f32.mrb[0].mxu0
  %v445 = vadd.f32 0.0, %v444
  %v446 = vpop.f32.mrb[0].mxu0
  %v447 = vpop.f32.mrb[0].mxu0
  %v448 = vadd.f32 0.0, %v447
  %v449 = vpop.f32.mrb[0].mxu0
  %450 = vmatprep.mubr.bf16.mxu0 0
  %451 = vmatmul.mubr.bf16.gmra.mrb[0].mxu0 %v236
  %v452 = vpop.f32.mrb[0].mxu0
  %v453 = vadd.f32 0.0, %v452
  %v454 = vpop.f32.mrb[0].mxu0
  %v455 = vpop.f32.mrb[0].mxu0
  %v456 = vadd.f32 0.0, %v455
  %v457 = vpop.f32.mrb[0].mxu0
  %458 = vmatprep.mubr.bf16.mxu0 0
  %459 = vmatmul.mubr.bf16.gmra.mrb[0].mxu0 %v237
  %v460 = vpop.f32.mrb[0].mxu0
  %v461 = vadd.f32 0.0, %v460
  %v462 = vpop.f32.mrb[0].mxu0
  %v463 = vpop.f32.mrb[0].mxu0
  %v464 = vadd.f32 0.0, %v463
  %v465 = vpop.f32.mrb[0].mxu0
  %466 = vmatprep.mubr.bf16.mxu0 0
  %467 = vmatmul.mubr.bf16.gmra.mrb[0].mxu0 %v238
  %v468 = vpop.f32.mrb[0].mxu0
  %v469 = vadd.f32 0.0, %v468
  %v470 = vpop.f32.mrb[0].mxu0
  %v471 = vpop.f32.mrb[0].mxu0
  %v472 = vadd.f32 0.0, %v471
  %v473 = vpop.f32.mrb[0].mxu0
  %474 = vmatprep.mubr.bf16.mxu0 0
  %475 = vmatmul.mubr.bf16.gmra.mrb[0].mxu0 %v239
  %v476 = vpop.f32.mrb[0].mxu0
  %v477 = vadd.f32 0.0, %v476
  %v478 = vpop.f32.mrb[0].mxu0
  %v479 = vpop.f32.mrb[0].mxu0
  %v480 = vadd.f32 0.0, %v479
  %v481 = vpop.f32.mrb[0].mxu0
  %482 = vmatprep.mubr.bf16.mxu0 0
  %483 = vmatmul.mubr.bf16.gmra.mrb[0].mxu0 %v240
  %v484 = vpop.f32.mrb[0].mxu0
  %v485 = vadd.f32 0.0, %v484
  %v486 = vpop.f32.mrb[0].mxu0
  %v487 = vpop.f32.mrb[0].mxu0
  %v488 = vadd.f32 0.0, %v487
  %v489 = vpop.f32.mrb[0].mxu0
  %490 = vmatprep.mubr.bf16.mxu0 0
  %491 = vmatmul.mubr.bf16.gmra.mrb[0].mxu0 %v241
  %v492 = vpop.f32.mrb[0].mxu0
  %v493 = vadd.f32 0.0, %v492
  %v494 = vpop.f32.mrb[0].mxu0
  %v495 = vpop.f32.mrb[0].mxu0
  %v496 = vadd.f32 0.0, %v495
  %v497 = vpop.f32.mrb[0].mxu0
  %498 = vmatprep.mubr.bf16.mxu0 0
  %499 = vmatmul.mubr.bf16.gmra.mrb[0].mxu0 %v242
  %v500 = vpop.f32.mrb[0].mxu0
  %v501 = vadd.f32 0.0, %v500
  %v502 = vpop.f32.mrb[0].mxu0
  %v503 = vpop.f32.mrb[0].mxu0
  %v504 = vadd.f32 0.0, %v503
  %v505 = vpop.f32.mrb[0].mxu0
  %506 = vmatprep.mubr.bf16.mxu0 0
  %507 = vmatmul.mubr.bf16.gmra.mrb[0].mxu0 %v243
  %v508 = vpop.f32.mrb[0].mxu0
  %v509 = vadd.f32 0.0, %v508
  %v510 = vpop.f32.mrb[0].mxu0
  %v511 = vpop.f32.mrb[0].mxu0
  %v512 = vadd.f32 0.0, %v511
  %v513 = vpop.f32.mrb[0].mxu0
  %514 = vmatprep.mubr.bf16.mxu0 0
  %515 = vmatmul.mubr.bf16.gmra.mrb[0].mxu0 %v244
  %v516 = vpop.f32.mrb[0].mxu0
  %v517 = vadd.f32 0.0, %v516
  %v518 = vpop.f32.mrb[0].mxu0
  %v519 = vpop.f32.mrb[0].mxu0
  %v520 = vadd.f32 0.0, %v519
  %v521 = vpop.f32.mrb[0].mxu0
  %522 = vmatprep.mubr.bf16.mxu0 0
  %523 = vmatmul.mubr.bf16.gmra.mrb[0].mxu0 %v245
  %v524 = vpop.f32.mrb[0].mxu0
  %v525 = vadd.f32 0.0, %v524
  %v526 = vpop.f32.mrb[0].mxu0
  %v527 = vpop.f32.mrb[0].mxu0
  %v528 = vadd.f32 0.0, %v527
  %v529 = vpop.f32.mrb[0].mxu0
  %530 = vmatprep.mubr.bf16.mxu0 0
  %531 = vmatmul.mubr.bf16.gmra.mrb[0].mxu0 %v246
  %v532 = vpop.f32.mrb[0].mxu0
  %v533 = vadd.f32 0.0, %v532
  %v534 = vpop.f32.mrb[0].mxu0
  %v535 = vpop.f32.mrb[0].mxu0
  %v536 = vadd.f32 0.0, %v535
  %v537 = vpop.f32.mrb[0].mxu0
  %538 = vmatprep.mubr.bf16.mxu0 0
  %539 = vmatmul.mubr.bf16.gmra.mrb[0].mxu0 %v247
  %v540 = vpop.f32.mrb[0].mxu0
  %v541 = vadd.f32 0.0, %v540
  %v542 = vpop.f32.mrb[0].mxu0
  %v543 = vpop.f32.mrb[0].mxu0
  %v544 = vadd.f32 0.0, %v543
  %v545 = vpop.f32.mrb[0].mxu0
  %546 = vmatprep.mubr.bf16.mxu0 0
  %547 = vmatmul.mubr.bf16.gmra.mrb[0].mxu0 %v248
  %v548 = vpop.f32.mrb[0].mxu0
  %v549 = vadd.f32 0.0, %v548
  %v550 = vpop.f32.mrb[0].mxu0
  %v551 = vpop.f32.mrb[0].mxu0
  %v552 = vadd.f32 0.0, %v551
  %v553 = vpop.f32.mrb[0].mxu0
  %554 = vmatprep.mubr.bf16.mxu0 0
  %555 = vmatmul.mubr.bf16.gmra.mrb[0].mxu0 %v249
  %v556 = vpop.f32.mrb[0].mxu0
  %v557 = vadd.f32 0.0, %v556
  %v558 = vpop.f32.mrb[0].mxu0
  %v559 = vpop.f32.mrb[0].mxu0
  %v560 = vadd.f32 0.0, %v559
  %v561 = vpop.f32.mrb[0].mxu0
  %562 = vmatprep.mubr.bf16.mxu0 0
  %563 = vmatmul.mubr.bf16.gmra.mrb[0].mxu0 %v250
  %v564 = vpop.f32.mrb[0].mxu0
  %v565 = vadd.f32 0.0, %v564
  %v566 = vpop.f32.mrb[0].mxu0
  %v567 = vpop.f32.mrb[0].mxu0
  %v568 = vadd.f32 0.0, %v567
  %v569 = vpop.f32.mrb[0].mxu0
  %570 = vmatprep.mubr.bf16.mxu0 0
  %571 = vmatmul.mubr.bf16.gmra.mrb[0].mxu0 %v251
  %v572 = vpop.f32.mrb[0].mxu0
  %v573 = vadd.f32 0.0, %v572
  %v574 = vpop.f32.mrb[0].mxu0
  %v575 = vpop.f32.mrb[0].mxu0
  %v576 = vadd.f32 0.0, %v575
  %v577 = vpop.f32.mrb[0].mxu0
  %578 = vmatprep.mubr.bf16.mxu0 0
  %579 = vmatmul.mubr.bf16.gmra.mrb[0].mxu0 %v252
  %v580 = vpop.f32.mrb[0].mxu0
  %v581 = vadd.f32 0.0, %v580
  %v582 = vpop.f32.mrb[0].mxu0
  %v583 = vpop.f32.mrb[0].mxu0
  %v584 = vadd.f32 0.0, %v583
  %v585 = vpop.f32.mrb[0].mxu0
  %586 = vmatprep.mubr.bf16.mxu0 0
  %587 = vmatmul.mubr.bf16.gmra.mrb[0].mxu0 %v253
  %v588 = vpop.f32.mrb[0].mxu0
  %v589 = vadd.f32 0.0, %v588
  %v590 = vpop.f32.mrb[0].mxu0
  %v591 = vpop.f32.mrb[0].mxu0
  %v592 = vadd.f32 0.0, %v591
  %v593 = vpop.f32.mrb[0].mxu0
  %594 = vmatprep.mubr.bf16.mxu0 0
  %595 = vmatmul.mubr.bf16.gmra.mrb[0].mxu0 %v254
  %v596 = vpop.f32.mrb[0].mxu0
  %v597 = vadd.f32 0.0, %v596
  %v598 = vpop.f32.mrb[0].mxu0
  %v599 = vpop.f32.mrb[0].mxu0
  %v600 = vadd.f32 0.0, %v599
  %v601 = vpop.f32.mrb[0].mxu0
  %602 = vmatprep.mubr.bf16.mxu0 0
  %603 = vmatmul.mubr.bf16.gmra.mrb[0].mxu0 %v255
  %v604 = vpop.f32.mrb[0].mxu0
  %v605 = vadd.f32 0.0, %v604
  %v606 = vpop.f32.mrb[0].mxu0
  %v607 = vpop.f32.mrb[0].mxu0
  %v608 = vadd.f32 0.0, %v607
  %v609 = vpop.f32.mrb[0].mxu0
  %610 = vmatprep.mubr.bf16.mxu0 0
  %611 = vmatmul.mubr.bf16.gmra.mrb[0].mxu0 %v256
  %v612 = vpop.f32.mrb[0].mxu0
  %v613 = vadd.f32 0.0, %v612
  %v614 = vpop.f32.mrb[0].mxu0
  %v615 = vpop.f32.mrb[0].mxu0
  %v616 = vadd.f32 0.0, %v615
  %v617 = vpop.f32.mrb[0].mxu0
  %618 = vmatprep.mubr.bf16.mxu0 0
  %619 = vmatmul.mubr.bf16.gmra.mrb[0].mxu0 %v257
  %v620 = vpop.f32.mrb[0].mxu0
  %v621 = vadd.f32 0.0, %v620
  %v622 = vpop.f32.mrb[0].mxu0
  %v623 = vpop.f32.mrb[0].mxu0
  %v624 = vadd.f32 0.0, %v623
  %v625 = vpop.f32.mrb[0].mxu0
  %626 = vdwg.mxu0
  %v627 = vadd.f32 %v373, %v376
  %v628 = vadd.f32 %v627, %v381
  %v629 = vadd.f32 %v628, %v384
  %v630 = vadd.f32 %v629, %v389
  %v631 = vadd.f32 %v630, %v392
  %v632 = vadd.f32 %v631, %v397
  %v633 = vadd.f32 %v632, %v400
  %v634 = vadd.f32 %v633, %v405
  %v635 = vadd.f32 %v634, %v408
  %v636 = vadd.f32 %v635, %v413
  %v637 = vadd.f32 %v636, %v416
  %v638 = vadd.f32 %v637, %v421
  %v639 = vadd.f32 %v638, %v424
  %v640 = vadd.f32 %v639, %v429
  %v641 = vadd.f32 %v640, %v432
  %v642 = vadd.f32 %v641, %v437
  %v643 = vadd.f32 %v642, %v440
  %v644 = vadd.f32 %v643, %v445
  %v645 = vadd.f32 %v644, %v448
  %v646 = vadd.f32 %v645, %v453
  %v647 = vadd.f32 %v646, %v456
  %v648 = vadd.f32 %v647, %v461
  %v649 = vadd.f32 %v648, %v464
  %v650 = vadd.f32 %v649, %v469
  %v651 = vadd.f32 %v650, %v472
  %v652 = vadd.f32 %v651, %v477
  %v653 = vadd.f32 %v652, %v480
  %v654 = vadd.f32 %v653, %v485
  %v655 = vadd.f32 %v654, %v488
  %v656 = vadd.f32 %v655, %v493
  %v657 = vadd.f32 %v656, %v496
  %v658 = vadd.f32 %v657, %v501
  %v659 = vadd.f32 %v658, %v504
  %v660 = vadd.f32 %v659, %v509
  %v661 = vadd.f32 %v660, %v512
  %v662 = vadd.f32 %v661, %v517
  %v663 = vadd.f32 %v662, %v520
  %v664 = vadd.f32 %v663, %v525
  %v665 = vadd.f32 %v664, %v528
  %v666 = vadd.f32 %v665, %v533
  %v667 = vadd.f32 %v666, %v536
  %v668 = vadd.f32 %v667, %v541
  %v669 = vadd.f32 %v668, %v544
  %v670 = vadd.f32 %v669, %v549
  %v671 = vadd.f32 %v670, %v552
  %v672 = vadd.f32 %v671, %v557
  %v673 = vadd.f32 %v672, %v560
  %v674 = vadd.f32 %v673, %v565
  %v675 = vadd.f32 %v674, %v568
  %v676 = vadd.f32 %v675, %v573
  %v677 = vadd.f32 %v676, %v576
  %v678 = vadd.f32 %v677, %v581
  %v679 = vadd.f32 %v678, %v584
  %v680 = vadd.f32 %v679, %v589
  %v681 = vadd.f32 %v680, %v592
  %v682 = vadd.f32 %v681, %v597
  %v683 = vadd.f32 %v682, %v600
  %v684 = vadd.f32 %v683, %v605
  %v685 = vadd.f32 %v684, %v608
  %v686 = vadd.f32 %v685, %v613
  %v687 = vadd.f32 %v686, %v616
  %v688 = vadd.f32 %v687, %v621
  %v689 = vadd.f32 %v688, %v624
  %v690 = vrot.slane %v689, 4
  %v691 = vadd.f32 %v689, %v690
  %v692 = vrot.slane %v691, 2
  %v693 = vadd.f32 %v691, %v692
  %v694 = vrot.slane %v693, 1
  %v695 = vadd.f32 %v693, %v694
  %v696 = vmul.f32 %v695, 0.001953125
  %v697 = vsub.f32 %v373, %v696
  %v698 = vsub.f32 %v376, %v696
  %v699 = vsub.f32 %v381, %v696
  %v700 = vsub.f32 %v384, %v696
  %v701 = vsub.f32 %v389, %v696
  %v702 = vsub.f32 %v392, %v696
  %v703 = vsub.f32 %v397, %v696
  %v704 = vsub.f32 %v400, %v696
  %v705 = vsub.f32 %v405, %v696
  %v706 = vsub.f32 %v408, %v696
  %v707 = vsub.f32 %v413, %v696
  %v708 = vsub.f32 %v416, %v696
  %v709 = vsub.f32 %v421, %v696
  %v710 = vsub.f32 %v424, %v696
  %v711 = vsub.f32 %v429, %v696
  %v712 = vsub.f32 %v432, %v696
  %v713 = vsub.f32 %v437, %v696
  %v714 = vsub.f32 %v440, %v696
  %v715 = vsub.f32 %v445, %v696
  %v716 = vsub.f32 %v448, %v696
  %v717 = vsub.f32 %v453, %v696
  %v718 = vsub.f32 %v456, %v696
  %v719 = vsub.f32 %v461, %v696
  %v720 = vsub.f32 %v464, %v696
  %v721 = vsub.f32 %v469, %v696
  %v722 = vsub.f32 %v472, %v696
  %v723 = vsub.f32 %v477, %v696
  %v724 = vsub.f32 %v480, %v696
  %v725 = vsub.f32 %v485, %v696
  %v726 = vsub.f32 %v488, %v696
  %v727 = vsub.f32 %v493, %v696
  %v728 = vsub.f32 %v496, %v696
  %v729 = vsub.f32 %v501, %v696
  %v730 = vsub.f32 %v504, %v696
  %v731 = vsub.f32 %v509, %v696
  %v732 = vsub.f32 %v512, %v696
  %v733 = vsub.f32 %v517, %v696
  %v734 = vsub.f32 %v520, %v696
  %v735 = vsub.f32 %v525, %v696
  %v736 = vsub.f32 %v528, %v696
  %v737 = vsub.f32 %v533, %v696
  %v738 = vsub.f32 %v536, %v696
  %v739 = vsub.f32 %v541, %v696
  %v740 = vsub.f32 %v544, %v696
  %v741 = vsub.f32 %v549, %v696
  %v742 = vsub.f32 %v552, %v696
  %v743 = vsub.f32 %v557, %v696
  %v744 = vsub.f32 %v560, %v696
  %v745 = vsub.f32 %v565, %v696
  %v746 = vsub.f32 %v568, %v696
  %v747 = vsub.f32 %v573, %v696
  %v748 = vsub.f32 %v576, %v696
  %v749 = vsub.f32 %v581, %v696
  %v750 = vsub.f32 %v584, %v696
  %v751 = vsub.f32 %v589, %v696
  %v752 = vsub.f32 %v592, %v696
  %v753 = vsub.f32 %v597, %v696
  %v754 = vsub.f32 %v600, %v696
  %v755 = vsub.f32 %v605, %v696
  %v756 = vsub.f32 %v608, %v696
  %v757 = vsub.f32 %v613, %v696
  %v758 = vsub.f32 %v616, %v696
  %v759 = vsub.f32 %v621, %v696
  %v760 = vsub.f32 %v624, %v696
  %v761 = vmul.f32 %v697, %v697
  %v762 = vmul.f32 %v698, %v698
  %v763 = vmul.f32 %v699, %v699
  %v764 = vmul.f32 %v700, %v700
  %v765 = vmul.f32 %v701, %v701
  %v766 = vmul.f32 %v702, %v702
  %v767 = vmul.f32 %v703, %v703
  %v768 = vmul.f32 %v704, %v704
  %v769 = vmul.f32 %v705, %v705
  %v770 = vmul.f32 %v706, %v706
  %v771 = vmul.f32 %v707, %v707
  %v772 = vmul.f32 %v708, %v708
  %v773 = vmul.f32 %v709, %v709
  %v774 = vmul.f32 %v710, %v710
  %v775 = vmul.f32 %v711, %v711
  %v776 = vmul.f32 %v712, %v712
  %v777 = vmul.f32 %v713, %v713
  %v778 = vmul.f32 %v714, %v714
  %v779 = vmul.f32 %v715, %v715
  %v780 = vmul.f32 %v716, %v716
  %v781 = vmul.f32 %v717, %v717
  %v782 = vmul.f32 %v718, %v718
  %v783 = vmul.f32 %v719, %v719
  %v784 = vmul.f32 %v720, %v720
  %v785 = vmul.f32 %v721, %v721
  %v786 = vmul.f32 %v722, %v722
  %v787 = vmul.f32 %v723, %v723
  %v788 = vmul.f32 %v724, %v724
  %v789 = vmul.f32 %v725, %v725
  %v790 = vmul.f32 %v726, %v726
  %v791 = vmul.f32 %v727, %v727
  %v792 = vmul.f32 %v728, %v728
  %v793 = vmul.f32 %v729, %v729
  %v794 = vmul.f32 %v730, %v730
  %v795 = vmul.f32 %v731, %v731
  %v796 = vmul.f32 %v732, %v732
  %v797 = vmul.f32 %v733, %v733
  %v798 = vmul.f32 %v734, %v734
  %v799 = vmul.f32 %v735, %v735
  %v800 = vmul.f32 %v736, %v736
  %v801 = vmul.f32 %v737, %v737
  %v802 = vmul.f32 %v738, %v738
  %v803 = vmul.f32 %v739, %v739
  %v804 = vmul.f32 %v740, %v740
  %v805 = vmul.f32 %v741, %v741
  %v806 = vmul.f32 %v742, %v742
  %v807 = vmul.f32 %v743, %v743
  %v808 = vmul.f32 %v744, %v744
  %v809 = vmul.f32 %v745, %v745
  %v810 = vmul.f32 %v746, %v746
  %v811 = vmul.f32 %v747, %v747
  %v812 = vmul.f32 %v748, %v748
  %v813 = vmul.f32 %v749, %v749
  %v814 = vmul.f32 %v750, %v750
  %v815 = vmul.f32 %v751, %v751
  %v816 = vmul.f32 %v752, %v752
  %v817 = vmul.f32 %v753, %v753
  %v818 = vmul.f32 %v754, %v754
  %v819 = vmul.f32 %v755, %v755
  %v820 = vmul.f32 %v756, %v756
  %v821 = vmul.f32 %v757, %v757
  %v822 = vmul.f32 %v758, %v758
  %v823 = vmul.f32 %v759, %v759
  %v824 = vmul.f32 %v760, %v760
  %v825 = vadd.f32 %v761, %v762
  %v826 = vadd.f32 %v825, %v763
  %v827 = vadd.f32 %v826, %v764
  %v828 = vadd.f32 %v827, %v765
  %v829 = vadd.f32 %v828, %v766
  %v830 = vadd.f32 %v829, %v767
  %v831 = vadd.f32 %v830, %v768
  %v832 = vadd.f32 %v831, %v769
  %v833 = vadd.f32 %v832, %v770
  %v834 = vadd.f32 %v833, %v771
  %v835 = vadd.f32 %v834, %v772
  %v836 = vadd.f32 %v835, %v773
  %v837 = vadd.f32 %v836, %v774
  %v838 = vadd.f32 %v837, %v775
  %v839 = vadd.f32 %v838, %v776
  %v840 = vadd.f32 %v839, %v777
  %v841 = vadd.f32 %v840, %v778
  %v842 = vadd.f32 %v841, %v779
  %v843 = vadd.f32 %v842, %v780
  %v844 = vadd.f32 %v843, %v781
  %v845 = vadd.f32 %v844, %v782
  %v846 = vadd.f32 %v845, %v783
  %v847 = vadd.f32 %v846, %v784
  %v848 = vadd.f32 %v847, %v785
  %v849 = vadd.f32 %v848, %v786
  %v850 = vadd.f32 %v849, %v787
  %v851 = vadd.f32 %v850, %v788
  %v852 = vadd.f32 %v851, %v789
  %v853 = vadd.f32 %v852, %v790
  %v854 = vadd.f32 %v853, %v791
  %v855 = vadd.f32 %v854, %v792
  %v856 = vadd.f32 %v855, %v793
  %v857 = vadd.f32 %v856, %v794
  %v858 = vadd.f32 %v857, %v795
  %v859 = vadd.f32 %v858, %v796
  %v860 = vadd.f32 %v859, %v797
  %v861 = vadd.f32 %v860, %v798
  %v862 = vadd.f32 %v861, %v799
  %v863 = vadd.f32 %v862, %v800
  %v864 = vadd.f32 %v863, %v801
  %v865 = vadd.f32 %v864, %v802
  %v866 = vadd.f32 %v865, %v803
  %v867 = vadd.f32 %v866, %v804
  %v868 = vadd.f32 %v867, %v805
  %v869 = vadd.f32 %v868, %v806
  %v870 = vadd.f32 %v869, %v807
  %v871 = vadd.f32 %v870, %v808
  %v872 = vadd.f32 %v871, %v809
  %v873 = vadd.f32 %v872, %v810
  %v874 = vadd.f32 %v873, %v811
  %v875 = vadd.f32 %v874, %v812
  %v876 = vadd.f32 %v875, %v813
  %v877 = vadd.f32 %v876, %v814
  %v878 = vadd.f32 %v877, %v815
  %v879 = vadd.f32 %v878, %v816
  %v880 = vadd.f32 %v879, %v817
  %v881 = vadd.f32 %v880, %v818
  %v882 = vadd.f32 %v881, %v819
  %v883 = vadd.f32 %v882, %v820
  %v884 = vadd.f32 %v883, %v821
  %v885 = vadd.f32 %v884, %v822
  %v886 = vadd.f32 %v885, %v823
  %v887 = vadd.f32 %v886, %v824
  %v888 = vrot.slane %v887, 4
  %v889 = vadd.f32 %v887, %v888
  %v890 = vrot.slane %v889, 2
  %v891 = vadd.f32 %v889, %v890
  %v892 = vrot.slane %v891, 1
  %v893 = vadd.f32 %v891, %v892
  %v894 = vmul.f32 %v893, 0.001953125
  %v895 = vld [vmem:[%s2] sm:$0x1]
  %v896 = vadd.f32 %v894, 1e-05
  %v897 = vrsqrt.pop %v896
  %v898 = vmul.f32 %v895, %v897
  %v900 = vlaneseq
  %v901 = vshrl.u32 %v900, 7
  %v902 = vsub.s32 0, %v901
  %v903 = vrot.slane %v898, %v902
  %v905 = vmul.f32 %v697, %v903
  %v906 = vmul.f32 %v698, %v903
  %v907 = vmul.f32 %v699, %v903
  %v908 = vmul.f32 %v700, %v903
  %v909 = vmul.f32 %v701, %v903
  %v910 = vmul.f32 %v702, %v903
  %v911 = vmul.f32 %v703, %v903
  %v912 = vmul.f32 %v704, %v903
  %v913 = vmul.f32 %v705, %v903
  %v914 = vmul.f32 %v706, %v903
  %v915 = vmul.f32 %v707, %v903
  %v916 = vmul.f32 %v708, %v903
  %v917 = vmul.f32 %v709, %v903
  %v918 = vmul.f32 %v710, %v903
  %v919 = vmul.f32 %v711, %v903
  %v920 = vmul.f32 %v712, %v903
  %v921 = vmul.f32 %v713, %v903
  %v922 = vmul.f32 %v714, %v903
  %v923 = vmul.f32 %v715, %v903
  %v924 = vmul.f32 %v716, %v903
  %v925 = vmul.f32 %v717, %v903
  %v926 = vmul.f32 %v718, %v903
  %v927 = vmul.f32 %v719, %v903
  %v928 = vmul.f32 %v720, %v903
  %v929 = vmul.f32 %v721, %v903
  %v930 = vmul.f32 %v722, %v903
  %v931 = vmul.f32 %v723, %v903
  %v932 = vmul.f32 %v724, %v903
  %v933 = vmul.f32 %v725, %v903
  %v934 = vmul.f32 %v726, %v903
  %v935 = vmul.f32 %v727, %v903
  %v936 = vmul.f32 %v728, %v903
  %v937 = vmul.f32 %v729, %v903
  %v938 = vmul.f32 %v730, %v903
  %v939 = vmul.f32 %v731, %v903
  %v940 = vmul.f32 %v732, %v903
  %v941 = vmul.f32 %v733, %v903
  %v942 = vmul.f32 %v734, %v903
  %v943 = vmul.f32 %v735, %v903
  %v944 = vmul.f32 %v736, %v903
  %v945 = vmul.f32 %v737, %v903
  %v946 = vmul.f32 %v738, %v903
  %v947 = vmul.f32 %v739, %v903
  %v948 = vmul.f32 %v740, %v903
  %v949 = vmul.f32 %v741, %v903
  %v950 = vmul.f32 %v742, %v903
  %v951 = vmul.f32 %v743, %v903
  %v952 = vmul.f32 %v744, %v903
  %v953 = vmul.f32 %v745, %v903
  %v954 = vmul.f32 %v746, %v903
  %v955 = vmul.f32 %v747, %v903
  %v956 = vmul.f32 %v748, %v903
  %v957 = vmul.f32 %v749, %v903
  %v958 = vmul.f32 %v750, %v903
  %v959 = vmul.f32 %v751, %v903
  %v960 = vmul.f32 %v752, %v903
  %v961 = vmul.f32 %v753, %v903
  %v962 = vmul.f32 %v754, %v903
  %v963 = vmul.f32 %v755, %v903
  %v964 = vmul.f32 %v756, %v903
  %v965 = vmul.f32 %v757, %v903
  %v966 = vmul.f32 %v758, %v903
  %v967 = vmul.f32 %v759, %v903
  %v968 = vmul.f32 %v760, %v903
  %v969 = vld [vmem:[%s3] sm:$0x1]
  %v971 = vlaneseq
  %v972 = vshrl.u32 %v971, 7
  %v973 = vsub.s32 0, %v972
  %v974 = vrot.slane %v969, %v973
  %v976 = vadd.f32 %v905, %v974
  %v977 = vadd.f32 %v906, %v974
  %v978 = vadd.f32 %v907, %v974
  %v979 = vadd.f32 %v908, %v974
  %v980 = vadd.f32 %v909, %v974
  %v981 = vadd.f32 %v910, %v974
  %v982 = vadd.f32 %v911, %v974
  %v983 = vadd.f32 %v912, %v974
  %v984 = vadd.f32 %v913, %v974
  %v985 = vadd.f32 %v914, %v974
  %v986 = vadd.f32 %v915, %v974
  %v987 = vadd.f32 %v916, %v974
  %v988 = vadd.f32 %v917, %v974
  %v989 = vadd.f32 %v918, %v974
  %v990 = vadd.f32 %v919, %v974
  %v991 = vadd.f32 %v920, %v974
  %v992 = vadd.f32 %v921, %v974
  %v993 = vadd.f32 %v922, %v974
  %v994 = vadd.f32 %v923, %v974
  %v995 = vadd.f32 %v924, %v974
  %v996 = vadd.f32 %v925, %v974
  %v997 = vadd.f32 %v926, %v974
  %v998 = vadd.f32 %v927, %v974
  %v999 = vadd.f32 %v928, %v974
  %v1000 = vadd.f32 %v929, %v974
  %v1001 = vadd.f32 %v930, %v974
  %v1002 = vadd.f32 %v931, %v974
  %v1003 = vadd.f32 %v932, %v974
  %v1004 = vadd.f32 %v933, %v974
  %v1005 = vadd.f32 %v934, %v974
  %v1006 = vadd.f32 %v935, %v974
  %v1007 = vadd.f32 %v936, %v974
  %v1008 = vadd.f32 %v937, %v974
  %v1009 = vadd.f32 %v938, %v974
  %v1010 = vadd.f32 %v939, %v974
  %v1011 = vadd.f32 %v940, %v974
  %v1012 = vadd.f32 %v941, %v974
  %v1013 = vadd.f32 %v942, %v974
  %v1014 = vadd.f32 %v943, %v974
  %v1015 = vadd.f32 %v944, %v974
  %v1016 = vadd.f32 %v945, %v974
  %v1017 = vadd.f32 %v946, %v974
  %v1018 = vadd.f32 %v947, %v974
  %v1019 = vadd.f32 %v948, %v974
  %v1020 = vadd.f32 %v949, %v974
  %v1021 = vadd.f32 %v950, %v974
  %v1022 = vadd.f32 %v951, %v974
  %v1023 = vadd.f32 %v952, %v974
  %v1024 = vadd.f32 %v953, %v974
  %v1025 = vadd.f32 %v954, %v974
  %v1026 = vadd.f32 %v955, %v974
  %v1027 = vadd.f32 %v956, %v974
  %v1028 = vadd.f32 %v957, %v974
  %v1029 = vadd.f32 %v958, %v974
  %v1030 = vadd.f32 %v959, %v974
  %v1031 = vadd.f32 %v960, %v974
  %v1032 = vadd.f32 %v961, %v974
  %v1033 = vadd.f32 %v962, %v974
  %v1034 = vadd.f32 %v963, %v974
  %v1035 = vadd.f32 %v964, %v974
  %v1036 = vadd.f32 %v965, %v974
  %v1037 = vadd.f32 %v966, %v974
  %v1038 = vadd.f32 %v967, %v974
  %v1039 = vadd.f32 %v968, %v974
  %vm1040 = vcmp.ge.f32.partialorder %v976, 0.0
  %vm1041 = vcmp.ge.f32.partialorder %v977, 0.0
  %vm1042 = vcmp.ge.f32.partialorder %v978, 0.0
  %vm1043 = vcmp.ge.f32.partialorder %v979, 0.0
  %vm1044 = vcmp.ge.f32.partialorder %v980, 0.0
  %vm1045 = vcmp.ge.f32.partialorder %v981, 0.0
  %vm1046 = vcmp.ge.f32.partialorder %v982, 0.0
  %vm1047 = vcmp.ge.f32.partialorder %v983, 0.0
  %vm1048 = vcmp.ge.f32.partialorder %v984, 0.0
  %vm1049 = vcmp.ge.f32.partialorder %v985, 0.0
  %vm1050 = vcmp.ge.f32.partialorder %v986, 0.0
  %vm1051 = vcmp.ge.f32.partialorder %v987, 0.0
  %vm1052 = vcmp.ge.f32.partialorder %v988, 0.0
  %vm1053 = vcmp.ge.f32.partialorder %v989, 0.0
  %vm1054 = vcmp.ge.f32.partialorder %v990, 0.0
  %vm1055 = vcmp.ge.f32.partialorder %v991, 0.0
  %vm1056 = vcmp.ge.f32.partialorder %v992, 0.0
  %vm1057 = vcmp.ge.f32.partialorder %v993, 0.0
  %vm1058 = vcmp.ge.f32.partialorder %v994, 0.0
  %vm1059 = vcmp.ge.f32.partialorder %v995, 0.0
  %vm1060 = vcmp.ge.f32.partialorder %v996, 0.0
  %vm1061 = vcmp.ge.f32.partialorder %v997, 0.0
  %vm1062 = vcmp.ge.f32.partialorder %v998, 0.0
  %vm1063 = vcmp.ge.f32.partialorder %v999, 0.0
  %vm1064 = vcmp.ge.f32.partialorder %v1000, 0.0
  %vm1065 = vcmp.ge.f32.partialorder %v1001, 0.0
  %vm1066 = vcmp.ge.f32.partialorder %v1002, 0.0
  %vm1067 = vcmp.ge.f32.partialorder %v1003, 0.0
  %vm1068 = vcmp.ge.f32.partialorder %v1004, 0.0
  %vm1069 = vcmp.ge.f32.partialorder %v1005, 0.0
  %vm1070 = vcmp.ge.f32.partialorder %v1006, 0.0
  %vm1071 = vcmp.ge.f32.partialorder %v1007, 0.0
  %vm1072 = vcmp.ge.f32.partialorder %v1008, 0.0
  %vm1073 = vcmp.ge.f32.partialorder %v1009, 0.0
  %vm1074 = vcmp.ge.f32.partialorder %v1010, 0.0
  %vm1075 = vcmp.ge.f32.partialorder %v1011, 0.0
  %vm1076 = vcmp.ge.f32.partialorder %v1012, 0.0
  %vm1077 = vcmp.ge.f32.partialorder %v1013, 0.0
  %vm1078 = vcmp.ge.f32.partialorder %v1014, 0.0
  %vm1079 = vcmp.ge.f32.partialorder %v1015, 0.0
  %vm1080 = vcmp.ge.f32.partialorder %v1016, 0.0
  %vm1081 = vcmp.ge.f32.partialorder %v1017, 0.0
  %vm1082 = vcmp.ge.f32.partialorder %v1018, 0.0
  %vm1083 = vcmp.ge.f32.partialorder %v1019, 0.0
  %vm1084 = vcmp.ge.f32.partialorder %v1020, 0.0
  %vm1085 = vcmp.ge.f32.partialorder %v1021, 0.0
  %vm1086 = vcmp.ge.f32.partialorder %v1022, 0.0
  %vm1087 = vcmp.ge.f32.partialorder %v1023, 0.0
  %vm1088 = vcmp.ge.f32.partialorder %v1024, 0.0
  %vm1089 = vcmp.ge.f32.partialorder %v1025, 0.0
  %vm1090 = vcmp.ge.f32.partialorder %v1026, 0.0
  %vm1091 = vcmp.ge.f32.partialorder %v1027, 0.0
  %vm1092 = vcmp.ge.f32.partialorder %v1028, 0.0
  %vm1093 = vcmp.ge.f32.partialorder %v1029, 0.0
  %vm1094 = vcmp.ge.f32.partialorder %v1030, 0.0
  %vm1095 = vcmp.ge.f32.partialorder %v1031, 0.0
  %vm1096 = vcmp.ge.f32.partialorder %v1032, 0.0
  %vm1097 = vcmp.ge.f32.partialorder %v1033, 0.0
  %vm1098 = vcmp.ge.f32.partialorder %v1034, 0.0
  %vm1099 = vcmp.ge.f32.partialorder %v1035, 0.0
  %vm1100 = vcmp.ge.f32.partialorder %v1036, 0.0
  %vm1101 = vcmp.ge.f32.partialorder %v1037, 0.0
  %vm1102 = vcmp.ge.f32.partialorder %v1038, 0.0
  %vm1103 = vcmp.ge.f32.partialorder %v1039, 0.0
  %v1104 = vmul.f32 %v976, 0.2
  %v1105 = vmul.f32 %v977, 0.2
  %v1106 = vmul.f32 %v978, 0.2
  %v1107 = vmul.f32 %v979, 0.2
  %v1108 = vmul.f32 %v980, 0.2
  %v1109 = vmul.f32 %v981, 0.2
  %v1110 = vmul.f32 %v982, 0.2
  %v1111 = vmul.f32 %v983, 0.2
  %v1112 = vmul.f32 %v984, 0.2
  %v1113 = vmul.f32 %v985, 0.2
  %v1114 = vmul.f32 %v986, 0.2
  %v1115 = vmul.f32 %v987, 0.2
  %v1116 = vmul.f32 %v988, 0.2
  %v1117 = vmul.f32 %v989, 0.2
  %v1118 = vmul.f32 %v990, 0.2
  %v1119 = vmul.f32 %v991, 0.2
  %v1120 = vmul.f32 %v992, 0.2
  %v1121 = vmul.f32 %v993, 0.2
  %v1122 = vmul.f32 %v994, 0.2
  %v1123 = vmul.f32 %v995, 0.2
  %v1124 = vmul.f32 %v996, 0.2
  %v1125 = vmul.f32 %v997, 0.2
  %v1126 = vmul.f32 %v998, 0.2
  %v1127 = vmul.f32 %v999, 0.2
  %v1128 = vmul.f32 %v1000, 0.2
  %v1129 = vmul.f32 %v1001, 0.2
  %v1130 = vmul.f32 %v1002, 0.2
  %v1131 = vmul.f32 %v1003, 0.2
  %v1132 = vmul.f32 %v1004, 0.2
  %v1133 = vmul.f32 %v1005, 0.2
  %v1134 = vmul.f32 %v1006, 0.2
  %v1135 = vmul.f32 %v1007, 0.2
  %v1136 = vmul.f32 %v1008, 0.2
  %v1137 = vmul.f32 %v1009, 0.2
  %v1138 = vmul.f32 %v1010, 0.2
  %v1139 = vmul.f32 %v1011, 0.2
  %v1140 = vmul.f32 %v1012, 0.2
  %v1141 = vmul.f32 %v1013, 0.2
  %v1142 = vmul.f32 %v1014, 0.2
  %v1143 = vmul.f32 %v1015, 0.2
  %v1144 = vmul.f32 %v1016, 0.2
  %v1145 = vmul.f32 %v1017, 0.2
  %v1146 = vmul.f32 %v1018, 0.2
  %v1147 = vmul.f32 %v1019, 0.2
  %v1148 = vmul.f32 %v1020, 0.2
  %v1149 = vmul.f32 %v1021, 0.2
  %v1150 = vmul.f32 %v1022, 0.2
  %v1151 = vmul.f32 %v1023, 0.2
  %v1152 = vmul.f32 %v1024, 0.2
  %v1153 = vmul.f32 %v1025, 0.2
  %v1154 = vmul.f32 %v1026, 0.2
  %v1155 = vmul.f32 %v1027, 0.2
  %v1156 = vmul.f32 %v1028, 0.2
  %v1157 = vmul.f32 %v1029, 0.2
  %v1158 = vmul.f32 %v1030, 0.2
  %v1159 = vmul.f32 %v1031, 0.2
  %v1160 = vmul.f32 %v1032, 0.2
  %v1161 = vmul.f32 %v1033, 0.2
  %v1162 = vmul.f32 %v1034, 0.2
  %v1163 = vmul.f32 %v1035, 0.2
  %v1164 = vmul.f32 %v1036, 0.2
  %v1165 = vmul.f32 %v1037, 0.2
  %v1166 = vmul.f32 %v1038, 0.2
  %v1167 = vmul.f32 %v1039, 0.2
  %v1168 = vsel %vm1040, %v976, %v1104
  %v1169 = vsel %vm1041, %v977, %v1105
  %v1170 = vsel %vm1042, %v978, %v1106
  %v1171 = vsel %vm1043, %v979, %v1107
  %v1172 = vsel %vm1044, %v980, %v1108
  %v1173 = vsel %vm1045, %v981, %v1109
  %v1174 = vsel %vm1046, %v982, %v1110
  %v1175 = vsel %vm1047, %v983, %v1111
  %v1176 = vsel %vm1048, %v984, %v1112
  %v1177 = vsel %vm1049, %v985, %v1113
  %v1178 = vsel %vm1050, %v986, %v1114
  %v1179 = vsel %vm1051, %v987, %v1115
  %v1180 = vsel %vm1052, %v988, %v1116
  %v1181 = vsel %vm1053, %v989, %v1117
  %v1182 = vsel %vm1054, %v990, %v1118
  %v1183 = vsel %vm1055, %v991, %v1119
  %v1184 = vsel %vm1056, %v992, %v1120
  %v1185 = vsel %vm1057, %v993, %v1121
  %v1186 = vsel %vm1058, %v994, %v1122
  %v1187 = vsel %vm1059, %v995, %v1123
  %v1188 = vsel %vm1060, %v996, %v1124
  %v1189 = vsel %vm1061, %v997, %v1125
  %v1190 = vsel %vm1062, %v998, %v1126
  %v1191 = vsel %vm1063, %v999, %v1127
  %v1192 = vsel %vm1064, %v1000, %v1128
  %v1193 = vsel %vm1065, %v1001, %v1129
  %v1194 = vsel %vm1066, %v1002, %v1130
  %v1195 = vsel %vm1067, %v1003, %v1131
  %v1196 = vsel %vm1068, %v1004, %v1132
  %v1197 = vsel %vm1069, %v1005, %v1133
  %v1198 = vsel %vm1070, %v1006, %v1134
  %v1199 = vsel %vm1071, %v1007, %v1135
  %v1200 = vsel %vm1072, %v1008, %v1136
  %v1201 = vsel %vm1073, %v1009, %v1137
  %v1202 = vsel %vm1074, %v1010, %v1138
  %v1203 = vsel %vm1075, %v1011, %v1139
  %v1204 = vsel %vm1076, %v1012, %v1140
  %v1205 = vsel %vm1077, %v1013, %v1141
  %v1206 = vsel %vm1078, %v1014, %v1142
  %v1207 = vsel %vm1079, %v1015, %v1143
  %v1208 = vsel %vm1080, %v1016, %v1144
  %v1209 = vsel %vm1081, %v1017, %v1145
  %v1210 = vsel %vm1082, %v1018, %v1146
  %v1211 = vsel %vm1083, %v1019, %v1147
  %v1212 = vsel %vm1084, %v1020, %v1148
  %v1213 = vsel %vm1085, %v1021, %v1149
  %v1214 = vsel %vm1086, %v1022, %v1150
  %v1215 = vsel %vm1087, %v1023, %v1151
  %v1216 = vsel %vm1088, %v1024, %v1152
  %v1217 = vsel %vm1089, %v1025, %v1153
  %v1218 = vsel %vm1090, %v1026, %v1154
  %v1219 = vsel %vm1091, %v1027, %v1155
  %v1220 = vsel %vm1092, %v1028, %v1156
  %v1221 = vsel %vm1093, %v1029, %v1157
  %v1222 = vsel %vm1094, %v1030, %v1158
  %v1223 = vsel %vm1095, %v1031, %v1159
  %v1224 = vsel %vm1096, %v1032, %v1160
  %v1225 = vsel %vm1097, %v1033, %v1161
  %v1226 = vsel %vm1098, %v1034, %v1162
  %v1227 = vsel %vm1099, %v1035, %v1163
  %v1228 = vsel %vm1100, %v1036, %v1164
  %v1229 = vsel %vm1101, %v1037, %v1165
  %v1230 = vsel %vm1102, %v1038, %v1166
  %v1231 = vsel %vm1103, %v1039, %v1167
  %v1232 = vpack.c.bf16 %v1169, %v1168
  %v1233 = vpack.c.bf16 %v1171, %v1170
  %v1234 = vpack.c.bf16 %v1173, %v1172
  %v1235 = vpack.c.bf16 %v1175, %v1174
  %v1236 = vpack.c.bf16 %v1177, %v1176
  %v1237 = vpack.c.bf16 %v1179, %v1178
  %v1238 = vpack.c.bf16 %v1181, %v1180
  %v1239 = vpack.c.bf16 %v1183, %v1182
  %v1240 = vpack.c.bf16 %v1185, %v1184
  %v1241 = vpack.c.bf16 %v1187, %v1186
  %v1242 = vpack.c.bf16 %v1189, %v1188
  %v1243 = vpack.c.bf16 %v1191, %v1190
  %v1244 = vpack.c.bf16 %v1193, %v1192
  %v1245 = vpack.c.bf16 %v1195, %v1194
  %v1246 = vpack.c.bf16 %v1197, %v1196
  %v1247 = vpack.c.bf16 %v1199, %v1198
  %v1248 = vpack.c.bf16 %v1201, %v1200
  %v1249 = vpack.c.bf16 %v1203, %v1202
  %v1250 = vpack.c.bf16 %v1205, %v1204
  %v1251 = vpack.c.bf16 %v1207, %v1206
  %v1252 = vpack.c.bf16 %v1209, %v1208
  %v1253 = vpack.c.bf16 %v1211, %v1210
  %v1254 = vpack.c.bf16 %v1213, %v1212
  %v1255 = vpack.c.bf16 %v1215, %v1214
  %v1256 = vpack.c.bf16 %v1217, %v1216
  %v1257 = vpack.c.bf16 %v1219, %v1218
  %v1258 = vpack.c.bf16 %v1221, %v1220
  %v1259 = vpack.c.bf16 %v1223, %v1222
  %v1260 = vpack.c.bf16 %v1225, %v1224
  %v1261 = vpack.c.bf16 %v1227, %v1226
  %v1262 = vpack.c.bf16 %v1229, %v1228
  %v1263 = vpack.c.bf16 %v1231, %v1230
  %v1296 = vunpack.c.l.b16 %v1232
  %v1297 = vunpack.c.h.b16 %v1232
  %v1298 = vunpack.c.l.b16 %v1233
  %v1299 = vunpack.c.h.b16 %v1233
  %v1300 = vunpack.c.l.b16 %v1234
  %v1301 = vunpack.c.h.b16 %v1234
  %v1302 = vunpack.c.l.b16 %v1235
  %v1303 = vunpack.c.h.b16 %v1235
  %v1304 = vunpack.c.l.b16 %v1236
  %v1305 = vunpack.c.h.b16 %v1236
  %v1306 = vunpack.c.l.b16 %v1237
  %v1307 = vunpack.c.h.b16 %v1237
  %v1308 = vunpack.c.l.b16 %v1238
  %v1309 = vunpack.c.h.b16 %v1238
  %v1310 = vunpack.c.l.b16 %v1239
  %v1311 = vunpack.c.h.b16 %v1239
  %v1312 = vunpack.c.l.b16 %v1240
  %v1313 = vunpack.c.h.b16 %v1240
  %v1314 = vunpack.c.l.b16 %v1241
  %v1315 = vunpack.c.h.b16 %v1241
  %v1316 = vunpack.c.l.b16 %v1242
  %v1317 = vunpack.c.h.b16 %v1242
  %v1318 = vunpack.c.l.b16 %v1243
  %v1319 = vunpack.c.h.b16 %v1243
  %v1320 = vunpack.c.l.b16 %v1244
  %v1321 = vunpack.c.h.b16 %v1244
  %v1322 = vunpack.c.l.b16 %v1245
  %v1323 = vunpack.c.h.b16 %v1245
  %v1324 = vunpack.c.l.b16 %v1246
  %v1325 = vunpack.c.h.b16 %v1246
  %v1326 = vunpack.c.l.b16 %v1247
  %v1327 = vunpack.c.h.b16 %v1247
  %v1328 = vunpack.c.l.b16 %v1248
  %v1329 = vunpack.c.h.b16 %v1248
  %v1330 = vunpack.c.l.b16 %v1249
  %v1331 = vunpack.c.h.b16 %v1249
  %v1332 = vunpack.c.l.b16 %v1250
  %v1333 = vunpack.c.h.b16 %v1250
  %v1334 = vunpack.c.l.b16 %v1251
  %v1335 = vunpack.c.h.b16 %v1251
  %v1336 = vunpack.c.l.b16 %v1252
  %v1337 = vunpack.c.h.b16 %v1252
  %v1338 = vunpack.c.l.b16 %v1253
  %v1339 = vunpack.c.h.b16 %v1253
  %v1340 = vunpack.c.l.b16 %v1254
  %v1341 = vunpack.c.h.b16 %v1254
  %v1342 = vunpack.c.l.b16 %v1255
  %v1343 = vunpack.c.h.b16 %v1255
  %v1344 = vunpack.c.l.b16 %v1256
  %v1345 = vunpack.c.h.b16 %v1256
  %v1346 = vunpack.c.l.b16 %v1257
  %v1347 = vunpack.c.h.b16 %v1257
  %v1348 = vunpack.c.l.b16 %v1258
  %v1349 = vunpack.c.h.b16 %v1258
  %v1350 = vunpack.c.l.b16 %v1259
  %v1351 = vunpack.c.h.b16 %v1259
  %v1352 = vunpack.c.l.b16 %v1260
  %v1353 = vunpack.c.h.b16 %v1260
  %v1354 = vunpack.c.l.b16 %v1261
  %v1355 = vunpack.c.h.b16 %v1261
  %v1356 = vunpack.c.l.b16 %v1262
  %v1357 = vunpack.c.h.b16 %v1262
  %v1358 = vunpack.c.l.b16 %v1263
  %v1359 = vunpack.c.h.b16 %v1263
  %v1360 = vpack.c.b16 %v1296, %v1296
  %v1361 = vpack.c.b16 %v1297, %v1297
  %v1362 = vpack.c.b16 %v1298, %v1298
  %v1363 = vpack.c.b16 %v1299, %v1299
  %v1364 = vpack.c.b16 %v1300, %v1300
  %v1365 = vpack.c.b16 %v1301, %v1301
  %v1366 = vpack.c.b16 %v1302, %v1302
  %v1367 = vpack.c.b16 %v1303, %v1303
  %v1368 = vpack.c.b16 %v1304, %v1304
  %v1369 = vpack.c.b16 %v1305, %v1305
  %v1370 = vpack.c.b16 %v1306, %v1306
  %v1371 = vpack.c.b16 %v1307, %v1307
  %v1372 = vpack.c.b16 %v1308, %v1308
  %v1373 = vpack.c.b16 %v1309, %v1309
  %v1374 = vpack.c.b16 %v1310, %v1310
  %v1375 = vpack.c.b16 %v1311, %v1311
  %v1376 = vpack.c.b16 %v1312, %v1312
  %v1377 = vpack.c.b16 %v1313, %v1313
  %v1378 = vpack.c.b16 %v1314, %v1314
  %v1379 = vpack.c.b16 %v1315, %v1315
  %v1380 = vpack.c.b16 %v1316, %v1316
  %v1381 = vpack.c.b16 %v1317, %v1317
  %v1382 = vpack.c.b16 %v1318, %v1318
  %v1383 = vpack.c.b16 %v1319, %v1319
  %v1384 = vpack.c.b16 %v1320, %v1320
  %v1385 = vpack.c.b16 %v1321, %v1321
  %v1386 = vpack.c.b16 %v1322, %v1322
  %v1387 = vpack.c.b16 %v1323, %v1323
  %v1388 = vpack.c.b16 %v1324, %v1324
  %v1389 = vpack.c.b16 %v1325, %v1325
  %v1390 = vpack.c.b16 %v1326, %v1326
  %v1391 = vpack.c.b16 %v1327, %v1327
  %v1392 = vpack.c.b16 %v1328, %v1328
  %v1393 = vpack.c.b16 %v1329, %v1329
  %v1394 = vpack.c.b16 %v1330, %v1330
  %v1395 = vpack.c.b16 %v1331, %v1331
  %v1396 = vpack.c.b16 %v1332, %v1332
  %v1397 = vpack.c.b16 %v1333, %v1333
  %v1398 = vpack.c.b16 %v1334, %v1334
  %v1399 = vpack.c.b16 %v1335, %v1335
  %v1400 = vpack.c.b16 %v1336, %v1336
  %v1401 = vpack.c.b16 %v1337, %v1337
  %v1402 = vpack.c.b16 %v1338, %v1338
  %v1403 = vpack.c.b16 %v1339, %v1339
  %v1404 = vpack.c.b16 %v1340, %v1340
  %v1405 = vpack.c.b16 %v1341, %v1341
  %v1406 = vpack.c.b16 %v1342, %v1342
  %v1407 = vpack.c.b16 %v1343, %v1343
  %v1408 = vpack.c.b16 %v1344, %v1344
  %v1409 = vpack.c.b16 %v1345, %v1345
  %v1410 = vpack.c.b16 %v1346, %v1346
  %v1411 = vpack.c.b16 %v1347, %v1347
  %v1412 = vpack.c.b16 %v1348, %v1348
  %v1413 = vpack.c.b16 %v1349, %v1349
  %v1414 = vpack.c.b16 %v1350, %v1350
  %v1415 = vpack.c.b16 %v1351, %v1351
  %v1416 = vpack.c.b16 %v1352, %v1352
  %v1417 = vpack.c.b16 %v1353, %v1353
  %v1418 = vpack.c.b16 %v1354, %v1354
  %v1419 = vpack.c.b16 %v1355, %v1355
  %v1420 = vpack.c.b16 %v1356, %v1356
  %v1421 = vpack.c.b16 %v1357, %v1357
  %v1422 = vpack.c.b16 %v1358, %v1358
  %v1423 = vpack.c.b16 %v1359, %v1359
  %1488 = vst [vmem:[%s4] sm:$0xf] %v1360
  %1489 = vst [vmem:[%s4 + $0x4] sm:$0xf] %v1361
  %1490 = vst [vmem:[%s4 + $0x8] sm:$0xf] %v1362
  %1491 = vst [vmem:[%s4 + $0xc] sm:$0xf] %v1363
  %1492 = vst [vmem:[%s4 + $0x10] sm:$0xf] %v1364
  %1493 = vst [vmem:[%s4 + $0x14] sm:$0xf] %v1365
  %1494 = vst [vmem:[%s4 + $0x18] sm:$0xf] %v1366
  %1495 = vst [vmem:[%s4 + $0x1c] sm:$0xf] %v1367
  %1496 = vst [vmem:[%s4 + $0x20] sm:$0xf] %v1368
  %1497 = vst [vmem:[%s4 + $0x24] sm:$0xf] %v1369
  %1498 = vst [vmem:[%s4 + $0x28] sm:$0xf] %v1370
  %1499 = vst [vmem:[%s4 + $0x2c] sm:$0xf] %v1371
  %1500 = vst [vmem:[%s4 + $0x30] sm:$0xf] %v1372
  %1501 = vst [vmem:[%s4 + $0x34] sm:$0xf] %v1373
  %1502 = vst [vmem:[%s4 + $0x38] sm:$0xf] %v1374
  %1503 = vst [vmem:[%s4 + $0x3c] sm:$0xf] %v1375
  %1504 = vst [vmem:[%s4 + $0x40] sm:$0xf] %v1376
  %1505 = vst [vmem:[%s4 + $0x44] sm:$0xf] %v1377
  %1506 = vst [vmem:[%s4 + $0x48] sm:$0xf] %v1378
  %1507 = vst [vmem:[%s4 + $0x4c] sm:$0xf] %v1379
  %1508 = vst [vmem:[%s4 + $0x50] sm:$0xf] %v1380
  %1509 = vst [vmem:[%s4 + $0x54] sm:$0xf] %v1381
  %1510 = vst [vmem:[%s4 + $0x58] sm:$0xf] %v1382
  %1511 = vst [vmem:[%s4 + $0x5c] sm:$0xf] %v1383
  %1512 = vst [vmem:[%s4 + $0x60] sm:$0xf] %v1384
  %1513 = vst [vmem:[%s4 + $0x64] sm:$0xf] %v1385
  %1514 = vst [vmem:[%s4 + $0x68] sm:$0xf] %v1386
  %1515 = vst [vmem:[%s4 + $0x6c] sm:$0xf] %v1387
  %1516 = vst [vmem:[%s4 + $0x70] sm:$0xf] %v1388
  %1517 = vst [vmem:[%s4 + $0x74] sm:$0xf] %v1389
  %1518 = vst [vmem:[%s4 + $0x78] sm:$0xf] %v1390
  %1519 = vst [vmem:[%s4 + $0x7c] sm:$0xf] %v1391
  %1520 = vst [vmem:[%s4 + $0x80] sm:$0xf] %v1392
  %1521 = vst [vmem:[%s4 + $0x84] sm:$0xf] %v1393
  %1522 = vst [vmem:[%s4 + $0x88] sm:$0xf] %v1394
  %1523 = vst [vmem:[%s4 + $0x8c] sm:$0xf] %v1395
  %1524 = vst [vmem:[%s4 + $0x90] sm:$0xf] %v1396
  %1525 = vst [vmem:[%s4 + $0x94] sm:$0xf] %v1397
  %1526 = vst [vmem:[%s4 + $0x98] sm:$0xf] %v1398
  %1527 = vst [vmem:[%s4 + $0x9c] sm:$0xf] %v1399
  %1528 = vst [vmem:[%s4 + $0xa0] sm:$0xf] %v1400
  %1529 = vst [vmem:[%s4 + $0xa4] sm:$0xf] %v1401
  %1530 = vst [vmem:[%s4 + $0xa8] sm:$0xf] %v1402
  %1531 = vst [vmem:[%s4 + $0xac] sm:$0xf] %v1403
  %1532 = vst [vmem:[%s4 + $0xb0] sm:$0xf] %v1404
  %1533 = vst [vmem:[%s4 + $0xb4] sm:$0xf] %v1405
  %1534 = vst [vmem:[%s4 + $0xb8] sm:$0xf] %v1406
  %1535 = vst [vmem:[%s4 + $0xbc] sm:$0xf] %v1407
  %1536 = vst [vmem:[%s4 + $0xc0] sm:$0xf] %v1408
  %1537 = vst [vmem:[%s4 + $0xc4] sm:$0xf] %v1409
  %1538 = vst [vmem:[%s4 + $0xc8] sm:$0xf] %v1410
  %1539 = vst [vmem:[%s4 + $0xcc] sm:$0xf] %v1411
  %1540 = vst [vmem:[%s4 + $0xd0] sm:$0xf] %v1412
  %1541 = vst [vmem:[%s4 + $0xd4] sm:$0xf] %v1413
  %1542 = vst [vmem:[%s4 + $0xd8] sm:$0xf] %v1414
  %1543 = vst [vmem:[%s4 + $0xdc] sm:$0xf] %v1415
  %1544 = vst [vmem:[%s4 + $0xe0] sm:$0xf] %v1416
  %1545 = vst [vmem:[%s4 + $0xe4] sm:$0xf] %v1417
  %1546 = vst [vmem:[%s4 + $0xe8] sm:$0xf] %v1418
  %1547 = vst [vmem:[%s4 + $0xec] sm:$0xf] %v1419
  %1548 = vst [vmem:[%s4 + $0xf0] sm:$0xf] %v1420
  %1549 = vst [vmem:[%s4 + $0xf4] sm:$0xf] %v1421
  %1550 = vst [vmem:[%s4 + $0xf8] sm:$0xf] %v1422
  %1551 = vst [vmem:[%s4 + $0xfc] sm:$0xf] %v1423
  // Predicated region
  $region18: #{_lambda_.5} parent=0 // pred_check
    _
  $region19: #{_lambda_.5} parent=0 // pred_check_branch
    %1553 = sbr.rel (0) target = $region21
  $region20: #{_lambda_.5} parent=0 // pred_region
    _
  $region21: #{_lambda_.5} parent=0 // pred_fallthru
    _
  // Predicated region
  $region22: #{_lambda_.5} parent=0 // pred_check
    _
  $region23: #{_lambda_.5} parent=0 // pred_check_branch
    %1555 = sbr.rel (0) target = $region25
  $region24: #{_lambda_.5} parent=0 // pred_region
    _
  $region25: #{_lambda_.5} parent=0 // pred_fallthru
    _

// kernel: _lambda_.6
$region0: #{_lambda_.6}
  #allocation0 [shape = 'u32[]', space=smem, size = 0x4, offset = 0x4, fixed_abs, tag = 'smem constant byte address 0x4 - core index']
  #allocation1 [shape = 'u32[144,128]{1,0:T(1,128)}', space=vmem, size = 0x12000, scoped, tag = 'internal scratch']
  %s0 = inlined_call_operand.vmem [shape: bf16[128,256], index: 0, kind: input, shape index: {}]
  %s1 = inlined_call_operand.vmem [shape: bf16[256,128], index: 1, kind: input, shape index: {}]
  %s2 = inlined_call_operand.vmem [shape: f32[1,128], index: 2, kind: input, shape index: {}]
  %s3 = inlined_call_operand.vmem [shape: f32[1,128], index: 3, kind: input, shape index: {}]
  %s4 = inlined_call_operand.vmem [shape: bf16[128,128], index: 4, kind: output, shape index: {}]
  %s5 = sld [smem:[#allocation0]]
  $region26: #{_lambda_.6} parent=0
    _
  %s7 = ssub.s32 1, %s5
  %s8 = scalar_select 0, %s7, %s5
  // Predicated region
  $region2: #{_lambda_.6} parent=0 // pred_check
    _
  $region3: #{_lambda_.6} parent=0 // pred_check_branch
    %10 = sbr.rel (0) target = $region5
  $region4: #{_lambda_.6} parent=0 // pred_region
    _
  $region5: #{_lambda_.6} parent=0 // pred_fallthru
    _
  // Predicated region
  $region6: #{_lambda_.6} parent=0 // pred_check
    _
  $region7: #{_lambda_.6} parent=0 // pred_check_branch
    %12 = sbr.rel (0) target = $region9
  $region8: #{_lambda_.6} parent=0 // pred_region
    _
  $region9: #{_lambda_.6} parent=0 // pred_fallthru
    _
  // Predicated region
  $region10: #{_lambda_.6} parent=0 // pred_check
    _
  $region11: #{_lambda_.6} parent=0 // pred_check_branch
    %14 = sbr.rel (0) target = $region13
  $region12: #{_lambda_.6} parent=0 // pred_region
    _
  $region13: #{_lambda_.6} parent=0 // pred_fallthru
    _
  // Predicated region
  $region14: #{_lambda_.6} parent=0 // pred_check
    _
  $region15: #{_lambda_.6} parent=0 // pred_check_branch
    %16 = sbr.rel (0) target = $region17
  $region16: #{_lambda_.6} parent=0 // pred_region
    _
  $region17: #{_lambda_.6} parent=0 // pred_fallthru
    _
  %v18 = vld [vmem:[%s0] sm:$0xff]
  %v19 = vld [vmem:[%s0 + $0x8] sm:$0xff]
  %v20 = vld [vmem:[%s0 + $0x10] sm:$0xff]
  %v21 = vld [vmem:[%s0 + $0x18] sm:$0xff]
  %v22 = vld [vmem:[%s0 + $0x20] sm:$0xff]
  %v23 = vld [vmem:[%s0 + $0x28] sm:$0xff]
  %v24 = vld [vmem:[%s0 + $0x30] sm:$0xff]
  %v25 = vld [vmem:[%s0 + $0x38] sm:$0xff]
  %v26 = vld [vmem:[%s0 + $0x40] sm:$0xff]
  %v27 = vld [vmem:[%s0 + $0x48] sm:$0xff]
  %v28 = vld [vmem:[%s0 + $0x50] sm:$0xff]
  %v29 = vld [vmem:[%s0 + $0x58] sm:$0xff]
  %v30 = vld [vmem:[%s0 + $0x60] sm:$0xff]
  %v31 = vld [vmem:[%s0 + $0x68] sm:$0xff]
  %v32 = vld [vmem:[%s0 + $0x70] sm:$0xff]
  %v33 = vld [vmem:[%s0 + $0x78] sm:$0xff]
  %v34 = vld [vmem:[%s1] sm:$0xf]
  %v35 = vld [vmem:[%s1 + $0x4] sm:$0xf]
  %v36 = vld [vmem:[%s1 + $0x8] sm:$0xf]
  %v37 = vld [vmem:[%s1 + $0xc] sm:$0xf]
  %v38 = vld [vmem:[%s1 + $0x10] sm:$0xf]
  %v39 = vld [vmem:[%s1 + $0x14] sm:$0xf]
  %v40 = vld [vmem:[%s1 + $0x18] sm:$0xf]
  %v41 = vld [vmem:[%s1 + $0x1c] sm:$0xf]
  %v42 = vld [vmem:[%s1 + $0x20] sm:$0xf]
  %v43 = vld [vmem:[%s1 + $0x24] sm:$0xf]
  %v44 = vld [vmem:[%s1 + $0x28] sm:$0xf]
  %v45 = vld [vmem:[%s1 + $0x2c] sm:$0xf]
  %v46 = vld [vmem:[%s1 + $0x30] sm:$0xf]
  %v47 = vld [vmem:[%s1 + $0x34] sm:$0xf]
  %v48 = vld [vmem:[%s1 + $0x38] sm:$0xf]
  %v49 = vld [vmem:[%s1 + $0x3c] sm:$0xf]
  %v50 = vld [vmem:[%s1 + $0x40] sm:$0xf]
  %v51 = vld [vmem:[%s1 + $0x44] sm:$0xf]
  %v52 = vld [vmem:[%s1 + $0x48] sm:$0xf]
  %v53 = vld [vmem:[%s1 + $0x4c] sm:$0xf]
  %v54 = vld [vmem:[%s1 + $0x50] sm:$0xf]
  %v55 = vld [vmem:[%s1 + $0x54] sm:$0xf]
  %v56 = vld [vmem:[%s1 + $0x58] sm:$0xf]
  %v57 = vld [vmem:[%s1 + $0x5c] sm:$0xf]
  %v58 = vld [vmem:[%s1 + $0x60] sm:$0xf]
  %v59 = vld [vmem:[%s1 + $0x64] sm:$0xf]
  %v60 = vld [vmem:[%s1 + $0x68] sm:$0xf]
  %v61 = vld [vmem:[%s1 + $0x6c] sm:$0xf]
  %v62 = vld [vmem:[%s1 + $0x70] sm:$0xf]
  %v63 = vld [vmem:[%s1 + $0x74] sm:$0xf]
  %v64 = vld [vmem:[%s1 + $0x78] sm:$0xf]
  %v65 = vld [vmem:[%s1 + $0x7c] sm:$0xf]
  %v82 = vunpack.c.l.b16 %v18
  %v83 = vunpack.c.h.b16 %v18
  %v84 = vunpack.c.l.b16 %v19
  %v85 = vunpack.c.h.b16 %v19
  %v86 = vunpack.c.l.b16 %v20
  %v87 = vunpack.c.h.b16 %v20
  %v88 = vunpack.c.l.b16 %v21
  %v89 = vunpack.c.h.b16 %v21
  %v90 = vunpack.c.l.b16 %v22
  %v91 = vunpack.c.h.b16 %v22
  %v92 = vunpack.c.l.b16 %v23
  %v93 = vunpack.c.h.b16 %v23
  %v94 = vunpack.c.l.b16 %v24
  %v95 = vunpack.c.h.b16 %v24
  %v96 = vunpack.c.l.b16 %v25
  %v97 = vunpack.c.h.b16 %v25
  %v98 = vunpack.c.l.b16 %v26
  %v99 = vunpack.c.h.b16 %v26
  %v100 = vunpack.c.l.b16 %v27
  %v101 = vunpack.c.h.b16 %v27
  %v102 = vunpack.c.l.b16 %v28
  %v103 = vunpack.c.h.b16 %v28
  %v104 = vunpack.c.l.b16 %v29
  %v105 = vunpack.c.h.b16 %v29
  %v106 = vunpack.c.l.b16 %v30
  %v107 = vunpack.c.h.b16 %v30
  %v108 = vunpack.c.l.b16 %v31
  %v109 = vunpack.c.h.b16 %v31
  %v110 = vunpack.c.l.b16 %v32
  %v111 = vunpack.c.h.b16 %v32
  %v112 = vunpack.c.l.b16 %v33
  %v113 = vunpack.c.h.b16 %v33
  %v114 = vpack.c.b16 %v84, %v82
  %v115 = vpack.c.b16 %v85, %v83
  %v116 = vpack.c.b16 %v88, %v86
  %v117 = vpack.c.b16 %v89, %v87
  %v118 = vpack.c.b16 %v92, %v90
  %v119 = vpack.c.b16 %v93, %v91
  %v120 = vpack.c.b16 %v96, %v94
  %v121 = vpack.c.b16 %v97, %v95
  %v122 = vpack.c.b16 %v100, %v98
  %v123 = vpack.c.b16 %v101, %v99
  %v124 = vpack.c.b16 %v104, %v102
  %v125 = vpack.c.b16 %v105, %v103
  %v126 = vpack.c.b16 %v108, %v106
  %v127 = vpack.c.b16 %v109, %v107
  %v128 = vpack.c.b16 %v112, %v110
  %v129 = vpack.c.b16 %v113, %v111
  %v178 = vunpack.c.l.b16 %v34
  %v179 = vunpack.c.l.b16 %v35
  %v180 = vunpack.c.l.b16 %v36
  %v181 = vunpack.c.l.b16 %v37
  %v182 = vunpack.c.l.b16 %v38
  %v183 = vunpack.c.l.b16 %v39
  %v184 = vunpack.c.l.b16 %v40
  %v185 = vunpack.c.l.b16 %v41
  %v186 = vunpack.c.l.b16 %v42
  %v187 = vunpack.c.l.b16 %v43
  %v188 = vunpack.c.l.b16 %v44
  %v189 = vunpack.c.l.b16 %v45
  %v190 = vunpack.c.l.b16 %v46
  %v191 = vunpack.c.l.b16 %v47
  %v192 = vunpack.c.l.b16 %v48
  %v193 = vunpack.c.l.b16 %v49
  %v194 = vunpack.c.l.b16 %v50
  %v195 = vunpack.c.l.b16 %v51
  %v196 = vunpack.c.l.b16 %v52
  %v197 = vunpack.c.l.b16 %v53
  %v198 = vunpack.c.l.b16 %v54
  %v199 = vunpack.c.l.b16 %v55
  %v200 = vunpack.c.l.b16 %v56
  %v201 = vunpack.c.l.b16 %v57
  %v202 = vunpack.c.l.b16 %v58
  %v203 = vunpack.c.l.b16 %v59
  %v204 = vunpack.c.l.b16 %v60
  %v205 = vunpack.c.l.b16 %v61
  %v206 = vunpack.c.l.b16 %v62
  %v207 = vunpack.c.l.b16 %v63
  %v208 = vunpack.c.l.b16 %v64
  %v209 = vunpack.c.l.b16 %v65
  %v210 = vpack.c.b16 %v179, %v178
  %v211 = vpack.c.b16 %v181, %v180
  %v212 = vpack.c.b16 %v183, %v182
  %v213 = vpack.c.b16 %v185, %v184
  %v214 = vpack.c.b16 %v187, %v186
  %v215 = vpack.c.b16 %v189, %v188
  %v216 = vpack.c.b16 %v191, %v190
  %v217 = vpack.c.b16 %v193, %v192
  %v218 = vpack.c.b16 %v195, %v194
  %v219 = vpack.c.b16 %v197, %v196
  %v220 = vpack.c.b16 %v199, %v198
  %v221 = vpack.c.b16 %v201, %v200
  %v222 = vpack.c.b16 %v203, %v202
  %v223 = vpack.c.b16 %v205, %v204
  %v224 = vpack.c.b16 %v207, %v206
  %v225 = vpack.c.b16 %v209, %v208
  %242 = vmatprep.subr.bf16.mxu0 0
  %243 = vmatpush1.bf16.msra.mxu0 %v210
  %244 = vmatprep.subr.bf16.mxu0 0
  %245 = vmatpush1.bf16.msra.mxu0 %v211
  %246 = vmatprep.subr.bf16.mxu0 0
  %247 = vmatpush1.bf16.msra.mxu0 %v212
  %248 = vmatprep.subr.bf16.mxu0 0
  %249 = vmatpush1.bf16.msra.mxu0 %v213
  %250 = vmatprep.subr.bf16.mxu0 0
  %251 = vmatpush1.bf16.msra.mxu0 %v214
  %252 = vmatprep.subr.bf16.mxu0 0
  %253 = vmatpush1.bf16.msra.mxu0 %v215
  %254 = vmatprep.subr.bf16.mxu0 0
  %255 = vmatpush1.bf16.msra.mxu0 %v216
  %256 = vmatprep.subr.bf16.mxu0 0
  %257 = vmatpush1.bf16.msra.mxu0 %v217
  %258 = vmatprep.subr.bf16.mxu0 0
  %259 = vmatpush1.bf16.msra.mxu0 %v218
  %260 = vmatprep.subr.bf16.mxu0 0
  %261 = vmatpush1.bf16.msra.mxu0 %v219
  %262 = vmatprep.subr.bf16.mxu0 0
  %263 = vmatpush1.bf16.msra.mxu0 %v220
  %264 = vmatprep.subr.bf16.mxu0 0
  %265 = vmatpush1.bf16.msra.mxu0 %v221
  %266 = vmatprep.subr.bf16.mxu0 0
  %267 = vmatpush1.bf16.msra.mxu0 %v222
  %268 = vmatprep.subr.bf16.mxu0 0
  %269 = vmatpush1.bf16.msra.mxu0 %v223
  %270 = vmatprep.subr.bf16.mxu0 0
  %271 = vmatpush1.bf16.msra.mxu0 %v224
  %272 = vmatprep.subr.bf16.mxu0 0
  %273 = vmatpush1.bf16.msra.mxu0 %v225
  %274 = vmatprep.mubr.bf16.mxu0 %v115
  %275 = vmatmul.mubr.bf16.gmra.mrb[0].mxu0 %v114
  %v276 = vpop.f32.mrb[0].mxu0
  %v277 = vadd.f32 0.0, %v276
  %v278 = vpop.f32.mrb[0].mxu0
  %v279 = vpop.f32.mrb[0].mxu0
  %v280 = vadd.f32 0.0, %v279
  %v281 = vpop.f32.mrb[0].mxu0
  %282 = vmatprep.mubr.bf16.mxu0 %v117
  %283 = vmatmul.mubr.bf16.gmra.mrb[0].mxu0 %v116
  %v284 = vpop.f32.mrb[0].mxu0
  %v285 = vadd.f32 0.0, %v284
  %v286 = vpop.f32.mrb[0].mxu0
  %v287 = vpop.f32.mrb[0].mxu0
  %v288 = vadd.f32 0.0, %v287
  %v289 = vpop.f32.mrb[0].mxu0
  %290 = vmatprep.mubr.bf16.mxu0 %v119
  %291 = vmatmul.mubr.bf16.gmra.mrb[0].mxu0 %v118
  %v292 = vpop.f32.mrb[0].mxu0
  %v293 = vadd.f32 0.0, %v292
  %v294 = vpop.f32.mrb[0].mxu0
  %v295 = vpop.f32.mrb[0].mxu0
  %v296 = vadd.f32 0.0, %v295
  %v297 = vpop.f32.mrb[0].mxu0
  %298 = vmatprep.mubr.bf16.mxu0 %v121
  %299 = vmatmul.mubr.bf16.gmra.mrb[0].mxu0 %v120
  %v300 = vpop.f32.mrb[0].mxu0
  %v301 = vadd.f32 0.0, %v300
  %v302 = vpop.f32.mrb[0].mxu0
  %v303 = vpop.f32.mrb[0].mxu0
  %v304 = vadd.f32 0.0, %v303
  %v305 = vpop.f32.mrb[0].mxu0
  %306 = vmatprep.mubr.bf16.mxu0 %v123
  %307 = vmatmul.mubr.bf16.gmra.mrb[0].mxu0 %v122
  %v308 = vpop.f32.mrb[0].mxu0
  %v309 = vadd.f32 0.0, %v308
  %v310 = vpop.f32.mrb[0].mxu0
  %v311 = vpop.f32.mrb[0].mxu0
  %v312 = vadd.f32 0.0, %v311
  %v313 = vpop.f32.mrb[0].mxu0
  %314 = vmatprep.mubr.bf16.mxu0 %v125
  %315 = vmatmul.mubr.bf16.gmra.mrb[0].mxu0 %v124
  %v316 = vpop.f32.mrb[0].mxu0
  %v317 = vadd.f32 0.0, %v316
  %v318 = vpop.f32.mrb[0].mxu0
  %v319 = vpop.f32.mrb[0].mxu0
  %v320 = vadd.f32 0.0, %v319
  %v321 = vpop.f32.mrb[0].mxu0
  %322 = vmatprep.mubr.bf16.mxu0 %v127
  %323 = vmatmul.mubr.bf16.gmra.mrb[0].mxu0 %v126
  %v324 = vpop.f32.mrb[0].mxu0
  %v325 = vadd.f32 0.0, %v324
  %v326 = vpop.f32.mrb[0].mxu0
  %v327 = vpop.f32.mrb[0].mxu0
  %v328 = vadd.f32 0.0, %v327
  %v329 = vpop.f32.mrb[0].mxu0
  %330 = vmatprep.mubr.bf16.mxu0 %v129
  %331 = vmatmul.mubr.bf16.gmra.mrb[0].mxu0 %v128
  %v332 = vpop.f32.mrb[0].mxu0
  %v333 = vadd.f32 0.0, %v332
  %v334 = vpop.f32.mrb[0].mxu0
  %v335 = vpop.f32.mrb[0].mxu0
  %v336 = vadd.f32 0.0, %v335
  %v337 = vpop.f32.mrb[0].mxu0
  %338 = vdwg.mxu0
  %v339 = vadd.f32 %v277, %v280
  %v340 = vadd.f32 %v339, %v285
  %v341 = vadd.f32 %v340, %v288
  %v342 = vadd.f32 %v341, %v293
  %v343 = vadd.f32 %v342, %v296
  %v344 = vadd.f32 %v343, %v301
  %v345 = vadd.f32 %v344, %v304
  %v346 = vadd.f32 %v345, %v309
  %v347 = vadd.f32 %v346, %v312
  %v348 = vadd.f32 %v347, %v317
  %v349 = vadd.f32 %v348, %v320
  %v350 = vadd.f32 %v349, %v325
  %v351 = vadd.f32 %v350, %v328
  %v352 = vadd.f32 %v351, %v333
  %v353 = vadd.f32 %v352, %v336
  %v354 = vrot.slane %v353, 4
  %v355 = vadd.f32 %v353, %v354
  %v356 = vrot.slane %v355, 2
  %v357 = vadd.f32 %v355, %v356
  %v358 = vrot.slane %v357, 1
  %v359 = vadd.f32 %v357, %v358
  %v360 = vmul.f32 %v359, 0.0078125
  %v361 = vsub.f32 %v277, %v360
  %v362 = vsub.f32 %v280, %v360
  %v363 = vsub.f32 %v285, %v360
  %v364 = vsub.f32 %v288, %v360
  %v365 = vsub.f32 %v293, %v360
  %v366 = vsub.f32 %v296, %v360
  %v367 = vsub.f32 %v301, %v360
  %v368 = vsub.f32 %v304, %v360
  %v369 = vsub.f32 %v309, %v360
  %v370 = vsub.f32 %v312, %v360
  %v371 = vsub.f32 %v317, %v360
  %v372 = vsub.f32 %v320, %v360
  %v373 = vsub.f32 %v325, %v360
  %v374 = vsub.f32 %v328, %v360
  %v375 = vsub.f32 %v333, %v360
  %v376 = vsub.f32 %v336, %v360
  %v377 = vmul.f32 %v361, %v361
  %v378 = vmul.f32 %v362, %v362
  %v379 = vmul.f32 %v363, %v363
  %v380 = vmul.f32 %v364, %v364
  %v381 = vmul.f32 %v365, %v365
  %v382 = vmul.f32 %v366, %v366
  %v383 = vmul.f32 %v367, %v367
  %v384 = vmul.f32 %v368, %v368
  %v385 = vmul.f32 %v369, %v369
  %v386 = vmul.f32 %v370, %v370
  %v387 = vmul.f32 %v371, %v371
  %v388 = vmul.f32 %v372, %v372
  %v389 = vmul.f32 %v373, %v373
  %v390 = vmul.f32 %v374, %v374
  %v391 = vmul.f32 %v375, %v375
  %v392 = vmul.f32 %v376, %v376
  %v393 = vadd.f32 %v377, %v378
  %v394 = vadd.f32 %v393, %v379
  %v395 = vadd.f32 %v394, %v380
  %v396 = vadd.f32 %v395, %v381
  %v397 = vadd.f32 %v396, %v382
  %v398 = vadd.f32 %v397, %v383
  %v399 = vadd.f32 %v398, %v384
  %v400 = vadd.f32 %v399, %v385
  %v401 = vadd.f32 %v400, %v386
  %v402 = vadd.f32 %v401, %v387
  %v403 = vadd.f32 %v402, %v388
  %v404 = vadd.f32 %v403, %v389
  %v405 = vadd.f32 %v404, %v390
  %v406 = vadd.f32 %v405, %v391
  %v407 = vadd.f32 %v406, %v392
  %v408 = vrot.slane %v407, 4
  %v409 = vadd.f32 %v407, %v408
  %v410 = vrot.slane %v409, 2
  %v411 = vadd.f32 %v409, %v410
  %v412 = vrot.slane %v411, 1
  %v413 = vadd.f32 %v411, %v412
  %v414 = vmul.f32 %v413, 0.0078125
  %v415 = vld [vmem:[%s2] sm:$0x1]
  %v416 = vadd.f32 %v414, 1e-05
  %v417 = vrsqrt.pop %v416
  %v418 = vmul.f32 %v415, %v417
  %v420 = vlaneseq
  %v421 = vshrl.u32 %v420, 7
  %v422 = vsub.s32 0, %v421
  %v423 = vrot.slane %v418, %v422
  %v425 = vmul.f32 %v361, %v423
  %v426 = vmul.f32 %v362, %v423
  %v427 = vmul.f32 %v363, %v423
  %v428 = vmul.f32 %v364, %v423
  %v429 = vmul.f32 %v365, %v423
  %v430 = vmul.f32 %v366, %v423
  %v431 = vmul.f32 %v367, %v423
  %v432 = vmul.f32 %v368, %v423
  %v433 = vmul.f32 %v369, %v423
  %v434 = vmul.f32 %v370, %v423
  %v435 = vmul.f32 %v371, %v423
  %v436 = vmul.f32 %v372, %v423
  %v437 = vmul.f32 %v373, %v423
  %v438 = vmul.f32 %v374, %v423
  %v439 = vmul.f32 %v375, %v423
  %v440 = vmul.f32 %v376, %v423
  %v441 = vld [vmem:[%s3] sm:$0x1]
  %v443 = vlaneseq
  %v444 = vshrl.u32 %v443, 7
  %v445 = vsub.s32 0, %v444
  %v446 = vrot.slane %v441, %v445
  %v448 = vadd.f32 %v425, %v446
  %v449 = vadd.f32 %v426, %v446
  %v450 = vadd.f32 %v427, %v446
  %v451 = vadd.f32 %v428, %v446
  %v452 = vadd.f32 %v429, %v446
  %v453 = vadd.f32 %v430, %v446
  %v454 = vadd.f32 %v431, %v446
  %v455 = vadd.f32 %v432, %v446
  %v456 = vadd.f32 %v433, %v446
  %v457 = vadd.f32 %v434, %v446
  %v458 = vadd.f32 %v435, %v446
  %v459 = vadd.f32 %v436, %v446
  %v460 = vadd.f32 %v437, %v446
  %v461 = vadd.f32 %v438, %v446
  %v462 = vadd.f32 %v439, %v446
  %v463 = vadd.f32 %v440, %v446
  %vm464 = vcmp.ge.f32.partialorder %v448, 0.0
  %vm465 = vcmp.ge.f32.partialorder %v449, 0.0
  %vm466 = vcmp.ge.f32.partialorder %v450, 0.0
  %vm467 = vcmp.ge.f32.partialorder %v451, 0.0
  %vm468 = vcmp.ge.f32.partialorder %v452, 0.0
  %vm469 = vcmp.ge.f32.partialorder %v453, 0.0
  %vm470 = vcmp.ge.f32.partialorder %v454, 0.0
  %vm471 = vcmp.ge.f32.partialorder %v455, 0.0
  %vm472 = vcmp.ge.f32.partialorder %v456, 0.0
  %vm473 = vcmp.ge.f32.partialorder %v457, 0.0
  %vm474 = vcmp.ge.f32.partialorder %v458, 0.0
  %vm475 = vcmp.ge.f32.partialorder %v459, 0.0
  %vm476 = vcmp.ge.f32.partialorder %v460, 0.0
  %vm477 = vcmp.ge.f32.partialorder %v461, 0.0
  %vm478 = vcmp.ge.f32.partialorder %v462, 0.0
  %vm479 = vcmp.ge.f32.partialorder %v463, 0.0
  %v480 = vmul.f32 %v448, 0.2
  %v481 = vmul.f32 %v449, 0.2
  %v482 = vmul.f32 %v450, 0.2
  %v483 = vmul.f32 %v451, 0.2
  %v484 = vmul.f32 %v452, 0.2
  %v485 = vmul.f32 %v453, 0.2
  %v486 = vmul.f32 %v454, 0.2
  %v487 = vmul.f32 %v455, 0.2
  %v488 = vmul.f32 %v456, 0.2
  %v489 = vmul.f32 %v457, 0.2
  %v490 = vmul.f32 %v458, 0.2
  %v491 = vmul.f32 %v459, 0.2
  %v492 = vmul.f32 %v460, 0.2
  %v493 = vmul.f32 %v461, 0.2
  %v494 = vmul.f32 %v462, 0.2
  %v495 = vmul.f32 %v463, 0.2
  %v496 = vsel %vm464, %v448, %v480
  %v497 = vsel %vm465, %v449, %v481
  %v498 = vsel %vm466, %v450, %v482
  %v499 = vsel %vm467, %v451, %v483
  %v500 = vsel %vm468, %v452, %v484
  %v501 = vsel %vm469, %v453, %v485
  %v502 = vsel %vm470, %v454, %v486
  %v503 = vsel %vm471, %v455, %v487
  %v504 = vsel %vm472, %v456, %v488
  %v505 = vsel %vm473, %v457, %v489
  %v506 = vsel %vm474, %v458, %v490
  %v507 = vsel %vm475, %v459, %v491
  %v508 = vsel %vm476, %v460, %v492
  %v509 = vsel %vm477, %v461, %v493
  %v510 = vsel %vm478, %v462, %v494
  %v511 = vsel %vm479, %v463, %v495
  %v512 = vpack.c.bf16 %v497, %v496
  %v513 = vpack.c.bf16 %v499, %v498
  %v514 = vpack.c.bf16 %v501, %v500
  %v515 = vpack.c.bf16 %v503, %v502
  %v516 = vpack.c.bf16 %v505, %v504
  %v517 = vpack.c.bf16 %v507, %v506
  %v518 = vpack.c.bf16 %v509, %v508
  %v519 = vpack.c.bf16 %v511, %v510
  %v528 = vunpack.c.l.b16 %v512
  %v529 = vunpack.c.h.b16 %v512
  %v530 = vunpack.c.l.b16 %v513
  %v531 = vunpack.c.h.b16 %v513
  %v532 = vunpack.c.l.b16 %v514
  %v533 = vunpack.c.h.b16 %v514
  %v534 = vunpack.c.l.b16 %v515
  %v535 = vunpack.c.h.b16 %v515
  %v536 = vunpack.c.l.b16 %v516
  %v537 = vunpack.c.h.b16 %v516
  %v538 = vunpack.c.l.b16 %v517
  %v539 = vunpack.c.h.b16 %v517
  %v540 = vunpack.c.l.b16 %v518
  %v541 = vunpack.c.h.b16 %v518
  %v542 = vunpack.c.l.b16 %v519
  %v543 = vunpack.c.h.b16 %v519
  %v544 = vpack.c.b16 %v528, %v528
  %v545 = vpack.c.b16 %v529, %v529
  %v546 = vpack.c.b16 %v530, %v530
  %v547 = vpack.c.b16 %v531, %v531
  %v548 = vpack.c.b16 %v532, %v532
  %v549 = vpack.c.b16 %v533, %v533
  %v550 = vpack.c.b16 %v534, %v534
  %v551 = vpack.c.b16 %v535, %v535
  %v552 = vpack.c.b16 %v536, %v536
  %v553 = vpack.c.b16 %v537, %v537
  %v554 = vpack.c.b16 %v538, %v538
  %v555 = vpack.c.b16 %v539, %v539
  %v556 = vpack.c.b16 %v540, %v540
  %v557 = vpack.c.b16 %v541, %v541
  %v558 = vpack.c.b16 %v542, %v542
  %v559 = vpack.c.b16 %v543, %v543
  %576 = vst [vmem:[%s4] sm:$0xf] %v544
  %577 = vst [vmem:[%s4 + $0x4] sm:$0xf] %v545
  %578 = vst [vmem:[%s4 + $0x8] sm:$0xf] %v546
  %579 = vst [vmem:[%s4 + $0xc] sm:$0xf] %v547
  %580 = vst [vmem:[%s4 + $0x10] sm:$0xf] %v548
  %581 = vst [vmem:[%s4 + $0x14] sm:$0xf] %v549
  %582 = vst [vmem:[%s4 + $0x18] sm:$0xf] %v550
  %583 = vst [vmem:[%s4 + $0x1c] sm:$0xf] %v551
  %584 = vst [vmem:[%s4 + $0x20] sm:$0xf] %v552
  %585 = vst [vmem:[%s4 + $0x24] sm:$0xf] %v553
  %586 = vst [vmem:[%s4 + $0x28] sm:$0xf] %v554
  %587 = vst [vmem:[%s4 + $0x2c] sm:$0xf] %v555
  %588 = vst [vmem:[%s4 + $0x30] sm:$0xf] %v556
  %589 = vst [vmem:[%s4 + $0x34] sm:$0xf] %v557
  %590 = vst [vmem:[%s4 + $0x38] sm:$0xf] %v558
  %591 = vst [vmem:[%s4 + $0x3c] sm:$0xf] %v559
  // Predicated region
  $region18: #{_lambda_.6} parent=0 // pred_check
    _
  $region19: #{_lambda_.6} parent=0 // pred_check_branch
    %593 = sbr.rel (0) target = $region21
  $region20: #{_lambda_.6} parent=0 // pred_region
    _
  $region21: #{_lambda_.6} parent=0 // pred_fallthru
    _
  // Predicated region
  $region22: #{_lambda_.6} parent=0 // pred_check
    _
  $region23: #{_lambda_.6} parent=0 // pred_check_branch
    %595 = sbr.rel (0) target = $region25
  $region24: #{_lambda_.6} parent=0 // pred_region
    _
  $region25: #{_lambda_.6} parent=0 // pred_fallthru
    _

// kernel: _lambda_.7
$region0: #{_lambda_.7}
  #allocation0 [shape = 'u32[]', space=smem, size = 0x4, offset = 0x4, fixed_abs, tag = 'smem constant byte address 0x4 - core index']
  #allocation1 [shape = 'u32[144,128]{1,0:T(1,128)}', space=vmem, size = 0x12000, scoped, tag = 'internal scratch']
  %s0 = inlined_call_operand.vmem [shape: bf16[32,512], index: 0, kind: input, shape index: {}]
  %s1 = inlined_call_operand.vmem [shape: bf16[512,128], index: 1, kind: input, shape index: {}]
  %s2 = inlined_call_operand.vmem [shape: f32[1,128], index: 2, kind: input, shape index: {}]
  %s3 = inlined_call_operand.vmem [shape: f32[1,128], index: 3, kind: input, shape index: {}]
  %s4 = inlined_call_operand.vmem [shape: bf16[32,128], index: 4, kind: output, shape index: {}]
  %s5 = sld [smem:[#allocation0]]
  $region26: #{_lambda_.7} parent=0
    _
  %s7 = ssub.s32 1, %s5
  %s8 = scalar_select 0, %s7, %s5
  // Predicated region
  $region2: #{_lambda_.7} parent=0 // pred_check
    _
  $region3: #{_lambda_.7} parent=0 // pred_check_branch
    %10 = sbr.rel (0) target = $region5
  $region4: #{_lambda_.7} parent=0 // pred_region
    _
  $region5: #{_lambda_.7} parent=0 // pred_fallthru
    _
  // Predicated region
  $region6: #{_lambda_.7} parent=0 // pred_check
    _
  $region7: #{_lambda_.7} parent=0 // pred_check_branch
    %12 = sbr.rel (0) target = $region9
  $region8: #{_lambda_.7} parent=0 // pred_region
    _
  $region9: #{_lambda_.7} parent=0 // pred_fallthru
    _
  // Predicated region
  $region10: #{_lambda_.7} parent=0 // pred_check
    _
  $region11: #{_lambda_.7} parent=0 // pred_check_branch
    %14 = sbr.rel (0) target = $region13
  $region12: #{_lambda_.7} parent=0 // pred_region
    _
  $region13: #{_lambda_.7} parent=0 // pred_fallthru
    _
  // Predicated region
  $region14: #{_lambda_.7} parent=0 // pred_check
    _
  $region15: #{_lambda_.7} parent=0 // pred_check_branch
    %16 = sbr.rel (0) target = $region17
  $region16: #{_lambda_.7} parent=0 // pred_region
    _
  $region17: #{_lambda_.7} parent=0 // pred_fallthru
    _
  %v18 = vld [vmem:[%s0] sm:$0xff]
  %v19 = vld [vmem:[%s0 + $0x8] sm:$0xff]
  %v20 = vld [vmem:[%s0 + $0x10] sm:$0xff]
  %v21 = vld [vmem:[%s0 + $0x18] sm:$0xff]
  %v22 = vld [vmem:[%s0 + $0x20] sm:$0xff]
  %v23 = vld [vmem:[%s0 + $0x28] sm:$0xff]
  %v24 = vld [vmem:[%s0 + $0x30] sm:$0xff]
  %v25 = vld [vmem:[%s0 + $0x38] sm:$0xff]
  %v26 = vld [vmem:[%s1] sm:$0xf]
  %v27 = vld [vmem:[%s1 + $0x4] sm:$0xf]
  %v28 = vld [vmem:[%s1 + $0x8] sm:$0xf]
  %v29 = vld [vmem:[%s1 + $0xc] sm:$0xf]
  %v30 = vld [vmem:[%s1 + $0x10] sm:$0xf]
  %v31 = vld [vmem:[%s1 + $0x14] sm:$0xf]
  %v32 = vld [vmem:[%s1 + $0x18] sm:$0xf]
  %v33 = vld [vmem:[%s1 + $0x1c] sm:$0xf]
  %v34 = vld [vmem:[%s1 + $0x20] sm:$0xf]
  %v35 = vld [vmem:[%s1 + $0x24] sm:$0xf]
  %v36 = vld [vmem:[%s1 + $0x28] sm:$0xf]
  %v37 = vld [vmem:[%s1 + $0x2c] sm:$0xf]
  %v38 = vld [vmem:[%s1 + $0x30] sm:$0xf]
  %v39 = vld [vmem:[%s1 + $0x34] sm:$0xf]
  %v40 = vld [vmem:[%s1 + $0x38] sm:$0xf]
  %v41 = vld [vmem:[%s1 + $0x3c] sm:$0xf]
  %v42 = vld [vmem:[%s1 + $0x40] sm:$0xf]
  %v43 = vld [vmem:[%s1 + $0x44] sm:$0xf]
  %v44 = vld [vmem:[%s1 + $0x48] sm:$0xf]
  %v45 = vld [vmem:[%s1 + $0x4c] sm:$0xf]
  %v46 = vld [vmem:[%s1 + $0x50] sm:$0xf]
  %v47 = vld [vmem:[%s1 + $0x54] sm:$0xf]
  %v48 = vld [vmem:[%s1 + $0x58] sm:$0xf]
  %v49 = vld [vmem:[%s1 + $0x5c] sm:$0xf]
  %v50 = vld [vmem:[%s1 + $0x60] sm:$0xf]
  %v51 = vld [vmem:[%s1 + $0x64] sm:$0xf]
  %v52 = vld [vmem:[%s1 + $0x68] sm:$0xf]
  %v53 = vld [vmem:[%s1 + $0x6c] sm:$0xf]
  %v54 = vld [vmem:[%s1 + $0x70] sm:$0xf]
  %v55 = vld [vmem:[%s1 + $0x74] sm:$0xf]
  %v56 = vld [vmem:[%s1 + $0x78] sm:$0xf]
  %v57 = vld [vmem:[%s1 + $0x7c] sm:$0xf]
  %v58 = vld [vmem:[%s1 + $0x80] sm:$0xf]
  %v59 = vld [vmem:[%s1 + $0x84] sm:$0xf]
  %v60 = vld [vmem:[%s1 + $0x88] sm:$0xf]
  %v61 = vld [vmem:[%s1 + $0x8c] sm:$0xf]
  %v62 = vld [vmem:[%s1 + $0x90] sm:$0xf]
  %v63 = vld [vmem:[%s1 + $0x94] sm:$0xf]
  %v64 = vld [vmem:[%s1 + $0x98] sm:$0xf]
  %v65 = vld [vmem:[%s1 + $0x9c] sm:$0xf]
  %v66 = vld [vmem:[%s1 + $0xa0] sm:$0xf]
  %v67 = vld [vmem:[%s1 + $0xa4] sm:$0xf]
  %v68 = vld [vmem:[%s1 + $0xa8] sm:$0xf]
  %v69 = vld [vmem:[%s1 + $0xac] sm:$0xf]
  %v70 = vld [vmem:[%s1 + $0xb0] sm:$0xf]
  %v71 = vld [vmem:[%s1 + $0xb4] sm:$0xf]
  %v72 = vld [vmem:[%s1 + $0xb8] sm:$0xf]
  %v73 = vld [vmem:[%s1 + $0xbc] sm:$0xf]
  %v74 = vld [vmem:[%s1 + $0xc0] sm:$0xf]
  %v75 = vld [vmem:[%s1 + $0xc4] sm:$0xf]
  %v76 = vld [vmem:[%s1 + $0xc8] sm:$0xf]
  %v77 = vld [vmem:[%s1 + $0xcc] sm:$0xf]
  %v78 = vld [vmem:[%s1 + $0xd0] sm:$0xf]
  %v79 = vld [vmem:[%s1 + $0xd4] sm:$0xf]
  %v80 = vld [vmem:[%s1 + $0xd8] sm:$0xf]
  %v81 = vld [vmem:[%s1 + $0xdc] sm:$0xf]
  %v82 = vld [vmem:[%s1 + $0xe0] sm:$0xf]
  %v83 = vld [vmem:[%s1 + $0xe4] sm:$0xf]
  %v84 = vld [vmem:[%s1 + $0xe8] sm:$0xf]
  %v85 = vld [vmem:[%s1 + $0xec] sm:$0xf]
  %v86 = vld [vmem:[%s1 + $0xf0] sm:$0xf]
  %v87 = vld [vmem:[%s1 + $0xf4] sm:$0xf]
  %v88 = vld [vmem:[%s1 + $0xf8] sm:$0xf]
  %v89 = vld [vmem:[%s1 + $0xfc] sm:$0xf]
  %v98 = vunpack.c.l.b16 %v18
  %v99 = vunpack.c.h.b16 %v18
  %v100 = vunpack.c.l.b16 %v19
  %v101 = vunpack.c.h.b16 %v19
  %v102 = vunpack.c.l.b16 %v20
  %v103 = vunpack.c.h.b16 %v20
  %v104 = vunpack.c.l.b16 %v21
  %v105 = vunpack.c.h.b16 %v21
  %v106 = vunpack.c.l.b16 %v22
  %v107 = vunpack.c.h.b16 %v22
  %v108 = vunpack.c.l.b16 %v23
  %v109 = vunpack.c.h.b16 %v23
  %v110 = vunpack.c.l.b16 %v24
  %v111 = vunpack.c.h.b16 %v24
  %v112 = vunpack.c.l.b16 %v25
  %v113 = vunpack.c.h.b16 %v25
  %v114 = vpack.c.b16 %v102, %v98
  %v115 = vpack.c.b16 %v103, %v99
  %v116 = vpack.c.b16 %v104, %v100
  %v117 = vpack.c.b16 %v105, %v101
  %v118 = vpack.c.b16 %v110, %v106
  %v119 = vpack.c.b16 %v111, %v107
  %v120 = vpack.c.b16 %v112, %v108
  %v121 = vpack.c.b16 %v113, %v109
  %v194 = vunpack.c.l.b16 %v26
  %v195 = vunpack.c.l.b16 %v27
  %v196 = vunpack.c.l.b16 %v28
  %v197 = vunpack.c.l.b16 %v29
  %v198 = vunpack.c.l.b16 %v30
  %v199 = vunpack.c.l.b16 %v31
  %v200 = vunpack.c.l.b16 %v32
  %v201 = vunpack.c.l.b16 %v33
  %v202 = vunpack.c.l.b16 %v34
  %v203 = vunpack.c.l.b16 %v35
  %v204 = vunpack.c.l.b16 %v36
  %v205 = vunpack.c.l.b16 %v37
  %v206 = vunpack.c.l.b16 %v38
  %v207 = vunpack.c.l.b16 %v39
  %v208 = vunpack.c.l.b16 %v40
  %v209 = vunpack.c.l.b16 %v41
  %v210 = vunpack.c.l.b16 %v42
  %v211 = vunpack.c.l.b16 %v43
  %v212 = vunpack.c.l.b16 %v44
  %v213 = vunpack.c.l.b16 %v45
  %v214 = vunpack.c.l.b16 %v46
  %v215 = vunpack.c.l.b16 %v47
  %v216 = vunpack.c.l.b16 %v48
  %v217 = vunpack.c.l.b16 %v49
  %v218 = vunpack.c.l.b16 %v50
  %v219 = vunpack.c.l.b16 %v51
  %v220 = vunpack.c.l.b16 %v52
  %v221 = vunpack.c.l.b16 %v53
  %v222 = vunpack.c.l.b16 %v54
  %v223 = vunpack.c.l.b16 %v55
  %v224 = vunpack.c.l.b16 %v56
  %v225 = vunpack.c.l.b16 %v57
  %v226 = vunpack.c.l.b16 %v58
  %v227 = vunpack.c.l.b16 %v59
  %v228 = vunpack.c.l.b16 %v60
  %v229 = vunpack.c.l.b16 %v61
  %v230 = vunpack.c.l.b16 %v62
  %v231 = vunpack.c.l.b16 %v63
  %v232 = vunpack.c.l.b16 %v64
  %v233 = vunpack.c.l.b16 %v65
  %v234 = vunpack.c.l.b16 %v66
  %v235 = vunpack.c.l.b16 %v67
  %v236 = vunpack.c.l.b16 %v68
  %v237 = vunpack.c.l.b16 %v69
  %v238 = vunpack.c.l.b16 %v70
  %v239 = vunpack.c.l.b16 %v71
  %v240 = vunpack.c.l.b16 %v72
  %v241 = vunpack.c.l.b16 %v73
  %v242 = vunpack.c.l.b16 %v74
  %v243 = vunpack.c.l.b16 %v75
  %v244 = vunpack.c.l.b16 %v76
  %v245 = vunpack.c.l.b16 %v77
  %v246 = vunpack.c.l.b16 %v78
  %v247 = vunpack.c.l.b16 %v79
  %v248 = vunpack.c.l.b16 %v80
  %v249 = vunpack.c.l.b16 %v81
  %v250 = vunpack.c.l.b16 %v82
  %v251 = vunpack.c.l.b16 %v83
  %v252 = vunpack.c.l.b16 %v84
  %v253 = vunpack.c.l.b16 %v85
  %v254 = vunpack.c.l.b16 %v86
  %v255 = vunpack.c.l.b16 %v87
  %v256 = vunpack.c.l.b16 %v88
  %v257 = vunpack.c.l.b16 %v89
  %v258 = vpack.c.b16 %v195, %v194
  %v259 = vpack.c.b16 %v197, %v196
  %v260 = vpack.c.b16 %v199, %v198
  %v261 = vpack.c.b16 %v201, %v200
  %v262 = vpack.c.b16 %v203, %v202
  %v263 = vpack.c.b16 %v205, %v204
  %v264 = vpack.c.b16 %v207, %v206
  %v265 = vpack.c.b16 %v209, %v208
  %v266 = vpack.c.b16 %v211, %v210
  %v267 = vpack.c.b16 %v213, %v212
  %v268 = vpack.c.b16 %v215, %v214
  %v269 = vpack.c.b16 %v217, %v216
  %v270 = vpack.c.b16 %v219, %v218
  %v271 = vpack.c.b16 %v221, %v220
  %v272 = vpack.c.b16 %v223, %v222
  %v273 = vpack.c.b16 %v225, %v224
  %v274 = vpack.c.b16 %v227, %v226
  %v275 = vpack.c.b16 %v229, %v228
  %v276 = vpack.c.b16 %v231, %v230
  %v277 = vpack.c.b16 %v233, %v232
  %v278 = vpack.c.b16 %v235, %v234
  %v279 = vpack.c.b16 %v237, %v236
  %v280 = vpack.c.b16 %v239, %v238
  %v281 = vpack.c.b16 %v241, %v240
  %v282 = vpack.c.b16 %v243, %v242
  %v283 = vpack.c.b16 %v245, %v244
  %v284 = vpack.c.b16 %v247, %v246
  %v285 = vpack.c.b16 %v249, %v248
  %v286 = vpack.c.b16 %v251, %v250
  %v287 = vpack.c.b16 %v253, %v252
  %v288 = vpack.c.b16 %v255, %v254
  %v289 = vpack.c.b16 %v257, %v256
  %322 = vmatprep.subr.bf16.mxu0 0
  %323 = vmatpush1.bf16.msra.mxu0 %v258
  %324 = vmatprep.subr.bf16.mxu0 0
  %325 = vmatpush1.bf16.msra.mxu0 %v259
  %326 = vmatprep.subr.bf16.mxu0 0
  %327 = vmatpush1.bf16.msra.mxu0 %v260
  %328 = vmatprep.subr.bf16.mxu0 0
  %329 = vmatpush1.bf16.msra.mxu0 %v261
  %330 = vmatprep.subr.bf16.mxu0 0
  %331 = vmatpush1.bf16.msra.mxu0 %v262
  %332 = vmatprep.subr.bf16.mxu0 0
  %333 = vmatpush1.bf16.msra.mxu0 %v263
  %334 = vmatprep.subr.bf16.mxu0 0
  %335 = vmatpush1.bf16.msra.mxu0 %v264
  %336 = vmatprep.subr.bf16.mxu0 0
  %337 = vmatpush1.bf16.msra.mxu0 %v265
  %338 = vmatprep.subr.bf16.mxu0 0
  %339 = vmatpush1.bf16.msra.mxu0 %v266
  %340 = vmatprep.subr.bf16.mxu0 0
  %341 = vmatpush1.bf16.msra.mxu0 %v267
  %342 = vmatprep.subr.bf16.mxu0 0
  %343 = vmatpush1.bf16.msra.mxu0 %v268
  %344 = vmatprep.subr.bf16.mxu0 0
  %345 = vmatpush1.bf16.msra.mxu0 %v269
  %346 = vmatprep.subr.bf16.mxu0 0
  %347 = vmatpush1.bf16.msra.mxu0 %v270
  %348 = vmatprep.subr.bf16.mxu0 0
  %349 = vmatpush1.bf16.msra.mxu0 %v271
  %350 = vmatprep.subr.bf16.mxu0 0
  %351 = vmatpush1.bf16.msra.mxu0 %v272
  %352 = vmatprep.subr.bf16.mxu0 0
  %353 = vmatpush1.bf16.msra.mxu0 %v273
  %354 = vmatprep.mubr.bf16.mxu0 %v115
  %355 = vmatmul.mubr.bf16.gmra.mrb[0].mxu0 %v114
  %v356 = vpop.f32.mrb[0].mxu0
  %v357 = vadd.f32 0.0, %v356
  %v358 = vpop.f32.mrb[0].mxu0
  %v359 = vpop.f32.mrb[0].mxu0
  %v360 = vadd.f32 0.0, %v359
  %v361 = vpop.f32.mrb[0].mxu0
  %362 = vmatprep.mubr.bf16.mxu0 %v119
  %363 = vmatmul.mubr.bf16.gmra.mrb[0].mxu0 %v118
  %v364 = vpop.f32.mrb[0].mxu0
  %v365 = vadd.f32 0.0, %v364
  %v366 = vpop.f32.mrb[0].mxu0
  %v367 = vpop.f32.mrb[0].mxu0
  %v368 = vadd.f32 0.0, %v367
  %v369 = vpop.f32.mrb[0].mxu0
  %370 = vdwg.mxu0
  %371 = vmatprep.subr.bf16.mxu0 0
  %372 = vmatpush1.bf16.msra.mxu0 %v274
  %373 = vmatprep.subr.bf16.mxu0 0
  %374 = vmatpush1.bf16.msra.mxu0 %v275
  %375 = vmatprep.subr.bf16.mxu0 0
  %376 = vmatpush1.bf16.msra.mxu0 %v276
  %377 = vmatprep.subr.bf16.mxu0 0
  %378 = vmatpush1.bf16.msra.mxu0 %v277
  %379 = vmatprep.subr.bf16.mxu0 0
  %380 = vmatpush1.bf16.msra.mxu0 %v278
  %381 = vmatprep.subr.bf16.mxu0 0
  %382 = vmatpush1.bf16.msra.mxu0 %v279
  %383 = vmatprep.subr.bf16.mxu0 0
  %384 = vmatpush1.bf16.msra.mxu0 %v280
  %385 = vmatprep.subr.bf16.mxu0 0
  %386 = vmatpush1.bf16.msra.mxu0 %v281
  %387 = vmatprep.subr.bf16.mxu0 0
  %388 = vmatpush1.bf16.msra.mxu0 %v282
  %389 = vmatprep.subr.bf16.mxu0 0
  %390 = vmatpush1.bf16.msra.mxu0 %v283
  %391 = vmatprep.subr.bf16.mxu0 0
  %392 = vmatpush1.bf16.msra.mxu0 %v284
  %393 = vmatprep.subr.bf16.mxu0 0
  %394 = vmatpush1.bf16.msra.mxu0 %v285
  %395 = vmatprep.subr.bf16.mxu0 0
  %396 = vmatpush1.bf16.msra.mxu0 %v286
  %397 = vmatprep.subr.bf16.mxu0 0
  %398 = vmatpush1.bf16.msra.mxu0 %v287
  %399 = vmatprep.subr.bf16.mxu0 0
  %400 = vmatpush1.bf16.msra.mxu0 %v288
  %401 = vmatprep.subr.bf16.mxu0 0
  %402 = vmatpush1.bf16.msra.mxu0 %v289
  %403 = vmatprep.mubr.bf16.mxu0 %v117
  %404 = vmatmul.mubr.bf16.gmra.mrb[0].mxu0 %v116
  %v405 = vpop.f32.mrb[0].mxu0
  %v406 = vadd.f32 %v357, %v405
  %v407 = vpop.f32.mrb[0].mxu0
  %v408 = vpop.f32.mrb[0].mxu0
  %v409 = vadd.f32 %v360, %v408
  %v410 = vpop.f32.mrb[0].mxu0
  %411 = vmatprep.mubr.bf16.mxu0 %v121
  %412 = vmatmul.mubr.bf16.gmra.mrb[0].mxu0 %v120
  %v413 = vpop.f32.mrb[0].mxu0
  %v414 = vadd.f32 %v365, %v413
  %v415 = vpop.f32.mrb[0].mxu0
  %v416 = vpop.f32.mrb[0].mxu0
  %v417 = vadd.f32 %v368, %v416
  %v418 = vpop.f32.mrb[0].mxu0
  %419 = vdwg.mxu0
  %v420 = vadd.f32 %v406, %v409
  %v421 = vadd.f32 %v420, %v414
  %v422 = vadd.f32 %v421, %v417
  %v423 = vrot.slane %v422, 4
  %v424 = vadd.f32 %v422, %v423
  %v425 = vrot.slane %v424, 2
  %v426 = vadd.f32 %v424, %v425
  %v427 = vrot.slane %v426, 1
  %v428 = vadd.f32 %v426, %v427
  %v429 = vmul.f32 %v428, 0.03125
  %v430 = vsub.f32 %v406, %v429
  %v431 = vsub.f32 %v409, %v429
  %v432 = vsub.f32 %v414, %v429
  %v433 = vsub.f32 %v417, %v429
  %v434 = vmul.f32 %v430, %v430
  %v435 = vmul.f32 %v431, %v431
  %v436 = vmul.f32 %v432, %v432
  %v437 = vmul.f32 %v433, %v433
  %v438 = vadd.f32 %v434, %v435
  %v439 = vadd.f32 %v438, %v436
  %v440 = vadd.f32 %v439, %v437
  %v441 = vrot.slane %v440, 4
  %v442 = vadd.f32 %v440, %v441
  %v443 = vrot.slane %v442, 2
  %v444 = vadd.f32 %v442, %v443
  %v445 = vrot.slane %v444, 1
  %v446 = vadd.f32 %v444, %v445
  %v447 = vmul.f32 %v446, 0.03125
  %v448 = vld [vmem:[%s2] sm:$0x1]
  %v449 = vadd.f32 %v447, 1e-05
  %v450 = vrsqrt.pop %v449
  %v451 = vmul.f32 %v448, %v450
  %v453 = vlaneseq
  %v454 = vshrl.u32 %v453, 7
  %v455 = vsub.s32 0, %v454
  %v456 = vrot.slane %v451, %v455
  %v458 = vmul.f32 %v430, %v456
  %v459 = vmul.f32 %v431, %v456
  %v460 = vmul.f32 %v432, %v456
  %v461 = vmul.f32 %v433, %v456
  %v462 = vld [vmem:[%s3] sm:$0x1]
  %v464 = vlaneseq
  %v465 = vshrl.u32 %v464, 7
  %v466 = vsub.s32 0, %v465
  %v467 = vrot.slane %v462, %v466
  %v469 = vadd.f32 %v458, %v467
  %v470 = vadd.f32 %v459, %v467
  %v471 = vadd.f32 %v460, %v467
  %v472 = vadd.f32 %v461, %v467
  %vm473 = vcmp.ge.f32.partialorder %v469, 0.0
  %vm474 = vcmp.ge.f32.partialorder %v470, 0.0
  %vm475 = vcmp.ge.f32.partialorder %v471, 0.0
  %vm476 = vcmp.ge.f32.partialorder %v472, 0.0
  %v477 = vmul.f32 %v469, 0.2
  %v478 = vmul.f32 %v470, 0.2
  %v479 = vmul.f32 %v471, 0.2
  %v480 = vmul.f32 %v472, 0.2
  %v481 = vsel %vm473, %v469, %v477
  %v482 = vsel %vm474, %v470, %v478
  %v483 = vsel %vm475, %v471, %v479
  %v484 = vsel %vm476, %v472, %v480
  %v485 = vpack.c.bf16 %v482, %v481
  %v486 = vpack.c.bf16 %v484, %v483
  %v489 = vunpack.c.l.b16 %v485
  %v490 = vunpack.c.h.b16 %v485
  %v491 = vunpack.c.l.b16 %v486
  %v492 = vunpack.c.h.b16 %v486
  %v493 = vpack.c.b16 %v489, %v489
  %v494 = vpack.c.b16 %v490, %v490
  %v495 = vpack.c.b16 %v491, %v491
  %v496 = vpack.c.b16 %v492, %v492
  %501 = vst [vmem:[%s4] sm:$0xf] %v493
  %502 = vst [vmem:[%s4 + $0x4] sm:$0xf] %v494
  %503 = vst [vmem:[%s4 + $0x8] sm:$0xf] %v495
  %504 = vst [vmem:[%s4 + $0xc] sm:$0xf] %v496
  // Predicated region
  $region18: #{_lambda_.7} parent=0 // pred_check
    _
  $region19: #{_lambda_.7} parent=0 // pred_check_branch
    %506 = sbr.rel (0) target = $region21
  $region20: #{_lambda_.7} parent=0 // pred_region
    _
  $region21: #{_lambda_.7} parent=0 // pred_fallthru
    _
  // Predicated region
  $region22: #{_lambda_.7} parent=0 // pred_check
    _
  $region23: #{_lambda_.7} parent=0 // pred_check_branch
    %508 = sbr.rel (0) target = $region25
  $region24: #{_lambda_.7} parent=0 // pred_region
    _
  $region25: #{_lambda_.7} parent=0 // pred_fallthru
    _

</llo_original>
